<compile_context>
chip_gen: v7x
topology: tpu7x:2x2x1
jax: 0.10.0
libtpu: 0.0.40
codegen_flags: <defaults>
</compile_context>

<pallas_src>
import functools

import jax
import jax.numpy as jnp
from jax.experimental import pallas as pl
from jax.experimental.pallas import tpu as pltpu


# ----------------------------------------------------------------------------
# Generation-aware knobs
# ----------------------------------------------------------------------------
@functools.lru_cache(maxsize=None)
def _device_kind():
    try:
        return jax.devices()[0].device_kind.lower()
    except Exception:
        return ""


def _is_v7():
    return "v7" in _device_kind()


@functools.lru_cache(maxsize=None)
def _vmem_limit_bytes():
    cap = 128 * 1024 * 1024
    try:
        cap_q = int(pltpu.get_tpu_info().vmem_capacity_bytes)
        if cap_q > 0:
            cap = cap_q
    except Exception:
        pass
    # leave headroom for double-buffered activation blocks; ~48 MiB on v7x.
    return min(100 * 1024 * 1024, (cap * 3) // 4)


@functools.lru_cache(maxsize=None)
def _m_target():
    # MXU rows: 256 on v6e/v7x, 128 on v3/v4/v5.
    k = _device_kind()
    return 128 if any(v in k for v in ("v3", "v4", "v5")) else 256


def _pick_bt(B, H, W):
    """Batch tile: reach the MXU M target; on v7x keep >=2 grid steps for 2 TCs."""
    want = max(1, -(-_m_target() // (H * W)))   # cdiv
    bt = min(B, want)
    if _is_v7() and B >= 2:
        bt = max(1, min(bt, B // 2))
    while B % bt:
        bt -= 1
    return bt


def _pad8(c):
    return ((c + 7) // 8) * 8


# ----------------------------------------------------------------------------
# Feature probes (cached; a failed probe just disables the optimization)
# ----------------------------------------------------------------------------
@functools.lru_cache(maxsize=None)
def _const_weight_mode():
    """pl.Buffered(1) for never-changing weight blocks (halves their VMEM), if supported."""
    try:
        try:
            mode = pl.Buffered(1)
        except Exception:
            mode = pl.Buffered(buffer_count=1)

        def k(x_ref, w_ref, o_ref):
            o_ref[...] = x_ref[...] + w_ref[...]

        fn = pl.pallas_call(
            k,
            out_shape=jax.ShapeDtypeStruct((16, 128), jnp.float32),
            grid=(2,),
            in_specs=[pl.BlockSpec((8, 128), lambda i: (i, 0)),
                      pl.BlockSpec((8, 128), lambda i: (0, 0), pipeline_mode=mode)],
            out_specs=pl.BlockSpec((8, 128), lambda i: (i, 0)))
        got = jax.block_until_ready(
            fn(jnp.ones((16, 128), jnp.float32), jnp.full((8, 128), 2.0, jnp.float32)))
        return mode if bool(jnp.all(got == 3.0)) else None
    except Exception:
        return None


@functools.lru_cache(maxsize=None)
def _supports_fold(bt, H, W, C):
    """Can Mosaic reshape a (bt*H*W, C) value into (bt, H, W*C) (lane-dense store)?"""
    try:
        def k(x_ref, o_ref):
            o_ref[...] = x_ref[...].reshape(o_ref.shape)

        fn = pl.pallas_call(
            k, out_shape=jax.ShapeDtypeStruct((bt, H, W * C), jnp.float32))
        x = jnp.arange(bt * H * W * C, dtype=jnp.float32).reshape(bt * H * W, C)
        got = jax.block_until_ready(fn(x))
        return bool(jnp.array_equal(got.reshape(-1), x.reshape(-1)))
    except Exception:
        return False


def _const_spec(shape):
    """BlockSpec for a weight/bias whose block never changes across the grid."""
    mode = _const_weight_mode()
    if mode is None:
        return pl.BlockSpec(shape, lambda b: (0,) * len(shape))
    return pl.BlockSpec(shape, lambda b: (0,) * len(shape), pipeline_mode=mode)


# ----------------------------------------------------------------------------
# Fused ResidualConv2d kernel:
#   out = relu( conv3x3(relu(conv3x3(x, w1)+b1), w2)+b2 + x @ ws + bs )
# One grid step = `bt` batch elements; everything stays in VMEM.
# ----------------------------------------------------------------------------
def _res_block_kernel(x_ref, w1_ref, b1_ref, w2_ref, b2_ref, ws_ref, bs_ref,
                      o_ref, *scratch, H, W, im2col1, im2col2, fold_out):
    xpad_ref = scratch[0]
    hpad_ref = scratch[1]
    idx = 2
    patch1_ref = patch2_ref = None
    if im2col1:
        patch1_ref = scratch[idx]
        idx += 1
    if im2col2:
        patch2_ref = scratch[idx]
        idx += 1

    bt = x_ref.shape[0]
    cin = x_ref.shape[3]
    cmid = b1_ref.shape[1]
    cout = b2_ref.shape[1]
    m = bt * H * W

    x = x_ref[...]                                          # (bt,H,W,cin) bf16

    def conv3x3(pad_ref, patch_ref, val_bf16, c, w_ref, b_ref):
        # Zero only the 4 halo strips (megacore-safe; interior is overwritten below).
        pad_ref[:, 0:1, :, :] = jnp.zeros((bt, 1, W + 2, c), jnp.bfloat16)
        pad_ref[:, H + 1:H + 2, :, :] = jnp.zeros((bt, 1, W + 2, c), jnp.bfloat16)
        pad_ref[:, :, 0:1, :] = jnp.zeros((bt, H + 2, 1, c), jnp.bfloat16)
        pad_ref[:, :, W + 1:W + 2, :] = jnp.zeros((bt, H + 2, 1, c), jnp.bfloat16)
        pad_ref[:, 1:H + 1, 1:W + 1, :] = val_bf16
        xp = pad_ref[...]                                   # (bt,H+2,W+2,c) bf16
        nout = w_ref.shape[1]
        if patch_ref is not None:
            # v5e/v6e, c % 128 == 0: one long-K im2col GEMM from a preallocated scratch.
            t = 0
            for dy in range(3):
                for dx in range(3):
                    patch_ref[:, t * c:(t + 1) * c] = (
                        xp[:, dy:dy + H, dx:dx + W, :].reshape(m, c))
                    t += 1
            acc = jnp.dot(patch_ref[...], w_ref[...],
                          preferred_element_type=jnp.float32)
        else:
            # v7x (MRB accumulates in place) or small channel counts: 9-dot accumulation.
            acc = jnp.zeros((m, nout), jnp.float32)
            t = 0
            for dy in range(3):
                for dx in range(3):
                    tap = xp[:, dy:dy + H, dx:dx + W, :].reshape(m, c)
                    acc = acc + jnp.dot(tap, w_ref[t * c:(t + 1) * c, :],
                                        preferred_element_type=jnp.float32)
                    t += 1
        return acc + b_ref[...]

    # conv1 (3x3) + ReLU
    h = jnp.maximum(conv3x3(xpad_ref, patch1_ref, x, cin, w1_ref, b1_ref), 0.0)
    # conv2 (3x3)
    y = conv3x3(hpad_ref, patch2_ref,
                h.reshape(bt, H, W, cmid).astype(jnp.bfloat16), cmid, w2_ref, b2_ref)
    # fused 1x1 shortcut + final ReLU
    sc = jnp.dot(x.reshape(m, cin), ws_ref[...],
                 preferred_element_type=jnp.float32) + bs_ref[...]
    y = jnp.maximum(y + sc, 0.0)
    if fold_out:
        o_ref[...] = y.reshape(o_ref.shape).astype(o_ref.dtype)   # lane-dense slab
    else:
        o_ref[...] = y.reshape(bt, H, W, cout).astype(o_ref.dtype)


@functools.lru_cache(maxsize=None)
def _build_res_block(B, H, W, Cin, Cmid, Cout, bt):
    m = bt * H * W
    im2col1 = (Cin % 128 == 0) and not _is_v7()
    im2col2 = (Cmid % 128 == 0) and not _is_v7()
    fold_out = (Cout < 128) and _supports_fold(bt, H, W, Cout)

    kernel = functools.partial(_res_block_kernel, H=H, W=W,
                               im2col1=im2col1, im2col2=im2col2, fold_out=fold_out)

    scratch = [pltpu.VMEM((bt, H + 2, W + 2, Cin), jnp.bfloat16),
               pltpu.VMEM((bt, H + 2, W + 2, Cmid), jnp.bfloat16)]
    if im2col1:
        scratch.append(pltpu.VMEM((m, 9 * Cin), jnp.bfloat16))
    if im2col2:
        scratch.append(pltpu.VMEM((m, 9 * Cmid), jnp.bfloat16))

    if fold_out:
        out_shape = jax.ShapeDtypeStruct((B, H, W * Cout), jnp.bfloat16)
        out_spec = pl.BlockSpec((bt, H, W * Cout), lambda b: (b, 0, 0))
    else:
        out_shape = jax.ShapeDtypeStruct((B, H, W, Cout), jnp.bfloat16)
        out_spec = pl.BlockSpec((bt, H, W, Cout), lambda b: (b, 0, 0, 0))

    fn = pl.pallas_call(
        kernel,
        out_shape=out_shape,
        grid_spec=pltpu.PrefetchScalarGridSpec(
            num_scalar_prefetch=0,
            grid=(B // bt,),
            in_specs=[
                pl.BlockSpec((bt, H, W, Cin), lambda b: (b, 0, 0, 0)),
                _const_spec((9 * Cin, Cmid)),
                _const_spec((1, Cmid)),
                _const_spec((9 * Cmid, Cout)),
                _const_spec((1, Cout)),
                _const_spec((Cin, Cout)),
                _const_spec((1, Cout)),
            ],
            out_specs=out_spec,
            scratch_shapes=scratch,
        ),
        compiler_params=pltpu.CompilerParams(
            dimension_semantics=("parallel",),
            vmem_limit_bytes=_vmem_limit_bytes()),
    )
    return fn, fold_out


def residual_conv(p, x):
    B, H, W, _ = x.shape
    Cin = p["ws"].shape[0]
    Cmid = p["b1"].shape[-1]
    Cout = p["b2"].shape[-1]
    bt = _pick_bt(B, H, W)
    fn, fold_out = _build_res_block(B, H, W, Cin, Cmid, Cout, bt)
    out = fn(x, p["w1"], p["b1"], p["w2"], p["b2"], p["ws"], p["bs"])
    if fold_out:
        out = out.reshape(B, H, W, Cout)   # free metadata reshape of the dense slab
    return out


# ----------------------------------------------------------------------------
# SAGAN-style self attention, grid=(B,).  gamma lives in SMEM.
# All MXU matmuls use bf16 operands with f32 accumulation.
# ----------------------------------------------------------------------------
def _self_attn_kernel(x_ref, wq_ref, bq_ref, wk_ref, bk_ref, wv_ref, bv_ref,
                      g_ref, o_ref):
    x = x_ref[0]                                                    # (N, C) bf16
    q = jnp.dot(x, wq_ref[...], preferred_element_type=jnp.float32) + bq_ref[...]
    k = jnp.dot(x, wk_ref[...], preferred_element_type=jnp.float32) + bk_ref[...]
    v = jnp.dot(x, wv_ref[...], preferred_element_type=jnp.float32) + bv_ref[...]
    e = jax.lax.dot_general(q.astype(jnp.bfloat16), k.astype(jnp.bfloat16),
                            (((1,), (1,)), ((), ())),
                            preferred_element_type=jnp.float32)     # (N, N)
    e = e - jnp.max(e, axis=-1, keepdims=True)
    pr = jnp.exp(e)
    # approx reciprocal runs on the EUP slot; ~1e-3 rel. error in attention weights.
    pr = pr * pl.reciprocal(jnp.sum(pr, axis=-1, keepdims=True), approx=True)
    out = jnp.dot(pr.astype(jnp.bfloat16), v.astype(jnp.bfloat16),
                  preferred_element_type=jnp.float32)               # (N, C)
    o_ref[0] = (g_ref[0, 0] * out + x.astype(jnp.float32)).astype(o_ref.dtype)


@functools.lru_cache(maxsize=None)
def _build_self_attn(B, N, C):
    C8 = C // 8
    in_specs = [
        pl.BlockSpec((1, N, C), lambda b: (b, 0, 0)),
        _const_spec((C, C8)),
        _const_spec((1, C8)),
        _const_spec((C, C8)),
        _const_spec((1, C8)),
        _const_spec((C, C)),
        _const_spec((1, C)),
        pl.BlockSpec(memory_space=pltpu.MemorySpace.SMEM),          # gamma (1,1) f32
    ]
    return pl.pallas_call(
        _self_attn_kernel,
        out_shape=jax.ShapeDtypeStruct((B, N, C), jnp.bfloat16),
        grid_spec=pltpu.PrefetchScalarGridSpec(
            num_scalar_prefetch=0, grid=(B,),
            in_specs=in_specs,
            out_specs=pl.BlockSpec((1, N, C), lambda b: (b, 0, 0))),
        compiler_params=pltpu.CompilerParams(
            dimension_semantics=("parallel",),
            vmem_limit_bytes=_vmem_limit_bytes()),
    )


def self_attention(p, x):
    B, H, W, C = x.shape
    out = _build_self_attn(B, H * W, C)(
        x.reshape(B, H * W, C), p["wq"], p["bq"], p["wk"], p["bk"],
        p["wv"], p["bv"], p["gamma"])
    return out.reshape(B, H, W, C)


# ----------------------------------------------------------------------------
# Attention-UNet gate (g == x), grid=(B,).  Eval-mode BN folded into the 1x1 convs.
# psi bias lives in SMEM.
# ----------------------------------------------------------------------------
def _attn_gate_kernel(u_ref, wg_ref, bg_ref, wx_ref, bx_ref, wp_ref, bp_ref,
                      o_ref):
    u = u_ref[0]                                                    # (N, C) bf16
    g1 = jnp.dot(u, wg_ref[...], preferred_element_type=jnp.float32) + bg_ref[...]
    x1 = jnp.dot(u, wx_ref[...], preferred_element_type=jnp.float32) + bx_ref[...]
    a = jnp.maximum(g1 + x1, 0.0)                                   # (N, Fi)
    s = jnp.sum(a * wp_ref[...], axis=-1, keepdims=True) + bp_ref[0, 0]
    s = jax.nn.sigmoid(s)                                           # (N, 1)
    o_ref[0] = (u.astype(jnp.float32) * s).astype(o_ref.dtype)


@functools.lru_cache(maxsize=None)
def _build_attn_gate(B, N, C, Fi):
    in_specs = [
        pl.BlockSpec((1, N, C), lambda b: (b, 0, 0)),
        _const_spec((C, Fi)),
        _const_spec((1, Fi)),
        _const_spec((C, Fi)),
        _const_spec((1, Fi)),
        _const_spec((1, Fi)),
        pl.BlockSpec(memory_space=pltpu.MemorySpace.SMEM),          # bp (1,1) f32
    ]
    return pl.pallas_call(
        _attn_gate_kernel,
        out_shape=jax.ShapeDtypeStruct((B, N, C), jnp.bfloat16),
        grid_spec=pltpu.PrefetchScalarGridSpec(
            num_scalar_prefetch=0, grid=(B,),
            in_specs=in_specs,
            out_specs=pl.BlockSpec((1, N, C), lambda b: (b, 0, 0))),
        compiler_params=pltpu.CompilerParams(
            dimension_semantics=("parallel",),
            vmem_limit_bytes=_vmem_limit_bytes()),
    )


def attention_gate(p, x):
    B, H, W, C = x.shape
    Fi = p["wg"].shape[-1]
    out = _build_attn_gate(B, H * W, C, Fi)(
        x.reshape(B, H * W, C),
        p["wg"], p["bg"], p["wx"], p["bx"], p["wp"], p["bp"])
    return out.reshape(B, H, W, C)


# ----------------------------------------------------------------------------
# Parameter construction (conv kernels pre-laid out as (9*Cin, Cout) bf16,
# biases as (1, C) f32).  Channel padding rows/cols are zero, so the real
# output channels are numerically identical to the unpadded model.
# ----------------------------------------------------------------------------
class ParamGen:
    def __init__(self, key):
        self.key = key
        self.i = 0

    def normal(self, shape, std):
        self.i += 1
        return std * jax.random.normal(jax.random.fold_in(self.key, self.i),
                                       shape, jnp.float32)


def make_residual_conv_params(pg, cin, cout, cin_pad=None, cout_pad=None):
    cin_p = cin_pad or cin
    cout_p = cout_pad or cout
    w1 = pg.normal((3, 3, cin, cout), (2.0 / (9 * cin)) ** 0.5)
    w2 = pg.normal((3, 3, cout, cout), (2.0 / (9 * cout)) ** 0.5)
    ws = pg.normal((cin, cout), (2.0 / cin) ** 0.5)
    b1 = pg.normal((1, cout), 0.01)
    b2 = pg.normal((1, cout), 0.01)
    bs = pg.normal((1, cout), 0.01)
    w1 = jnp.pad(w1, ((0, 0), (0, 0), (0, cin_p - cin), (0, cout_p - cout)))
    w2 = jnp.pad(w2, ((0, 0), (0, 0), (0, cout_p - cout), (0, cout_p - cout)))
    ws = jnp.pad(ws, ((0, cin_p - cin), (0, cout_p - cout)))
    b1 = jnp.pad(b1, ((0, 0), (0, cout_p - cout)))
    b2 = jnp.pad(b2, ((0, 0), (0, cout_p - cout)))
    bs = jnp.pad(bs, ((0, 0), (0, cout_p - cout)))
    return dict(
        w1=w1.reshape(9 * cin_p, cout_p).astype(jnp.bfloat16), b1=b1,
        w2=w2.reshape(9 * cout_p, cout_p).astype(jnp.bfloat16), b2=b2,
        ws=ws.astype(jnp.bfloat16), bs=bs,
    )


def init_furenet_params(key, in_channels):
    pg = ParamGen(key)
    cin_p = _pad8(in_channels)
    p = {"cin": in_channels, "cin_pad": cin_p}
    chans = [in_channels, 64, 128, 192, 256, 384, 512]
    p["down"] = {}
    for name in ("z", "zdr", "kdp"):
        p["down"][name] = [
            make_residual_conv_params(pg, chans[i], chans[i + 1],
                                      cin_pad=(cin_p if i == 0 else None))
            for i in range(6)
        ]
    C7 = 512 * 3
    p["sa"] = dict(
        wq=pg.normal((C7, C7 // 8), (1.0 / C7) ** 0.5).astype(jnp.bfloat16),
        bq=pg.normal((1, C7 // 8), 0.01),
        wk=pg.normal((C7, C7 // 8), (1.0 / C7) ** 0.5).astype(jnp.bfloat16),
        bk=pg.normal((1, C7 // 8), 0.01),
        wv=pg.normal((C7, C7), (1.0 / C7) ** 0.5).astype(jnp.bfloat16),
        bv=pg.normal((1, C7), 0.01),
        gamma=jnp.zeros((1, 1), jnp.float32),   # matches nn.Parameter(torch.zeros(1))
    )
    up_io = [(C7, 384), (384 * 4, 256), (256 * 4, 192), (192 * 4, 128),
             (128 * 4, 64), (64 * 4, in_channels)]
    p["up"] = [
        make_residual_conv_params(
            pg, i, o, cout_pad=(cin_p if idx == len(up_io) - 1 else None))
        for idx, (i, o) in enumerate(up_io)
    ]

    # TODO(synk): eval-mode BN folded assuming fresh running stats (mean 0, var 1).
    bn_s = 1.0 / (1.0 + 1e-5) ** 0.5
    p["ab"] = []
    for C, Fi in [(384, 192), (256, 128), (192, 96), (128, 64), (64, 32)]:
        p["ab"].append(dict(
            wg=(pg.normal((C, Fi), (1.0 / C) ** 0.5) * bn_s).astype(jnp.bfloat16),
            bg=pg.normal((1, Fi), 0.01) * bn_s,
            wx=(pg.normal((C, Fi), (1.0 / C) ** 0.5) * bn_s).astype(jnp.bfloat16),
            bx=pg.normal((1, Fi), 0.01) * bn_s,
            wp=pg.normal((1, Fi), (1.0 / Fi) ** 0.5) * bn_s,
            bp=pg.normal((1, 1), 0.01) * bn_s,
        ))
    return p


# ----------------------------------------------------------------------------
# FURENet forward (plain-JAX glue between fused Pallas kernels)
# ----------------------------------------------------------------------------
def furenet_forward(p, z, zdr, kdp, out_len=10):
    # out_len is unused, exactly like the PyTorch reference forward.
    cin, cin_p = p["cin"], p["cin_pad"]

    def to_nhwc(t):
        t = jnp.transpose(t, (0, 2, 3, 1)).astype(jnp.bfloat16)
        if cin_p != cin:
            t = jnp.pad(t, ((0, 0), (0, 0), (0, 0), (0, cin_p - cin)))
        return t

    z, zdr, kdp = to_nhwc(z), to_nhwc(zdr), to_nhwc(kdp)

    def down(stream, x):
        feats = []
        for blk in p["down"][stream]:
            x = residual_conv(blk, x)
            feats.append(x)
        return feats  # levels 2..7

    zf, zdrf, kdpf = down("z", z), down("zdr", zdr), down("kdp", kdp)

    concat7 = jnp.concatenate([zdrf[5], kdpf[5], zf[5]], axis=-1)
    u = self_attention(p["sa"], concat7)

    u6 = attention_gate(p["ab"][0], residual_conv(p["up"][0], u))
    c6 = jnp.concatenate([zdrf[4], kdpf[4], zf[4], u6], axis=-1)
    u5 = attention_gate(p["ab"][1], residual_conv(p["up"][1], c6))
    c5 = jnp.concatenate([zdrf[3], kdpf[3], zf[3], u5], axis=-1)
    u4 = attention_gate(p["ab"][2], residual_conv(p["up"][2], c5))
    c4 = jnp.concatenate([zdrf[2], kdpf[2], zf[2], u4], axis=-1)
    u3 = attention_gate(p["ab"][3], residual_conv(p["up"][3], c4))
    c3 = jnp.concatenate([zdrf[1], kdpf[1], zf[1], u3], axis=-1)
    u2 = attention_gate(p["ab"][4], residual_conv(p["up"][4], c3))
    c2 = jnp.concatenate([zdrf[0], kdpf[0], zf[0], u2], axis=-1)
    out = residual_conv(p["up"][5], c2)          # (B, H, W, cin_pad)
    out = out[..., :cin]

    return jnp.transpose(out.astype(jnp.float32), (0, 3, 1, 2))  # back to NCHW


if __name__ == "__main__":
    key = jax.random.PRNGKey(0)
    B, Cin, H, W = 2, 4, 8, 8
    kz, kzdr, kkdp, kp = jax.random.split(key, 4)
    z = jax.random.normal(kz, (B, Cin, H, W), jnp.float32)
    zdr = jax.random.normal(kzdr, (B, Cin, H, W), jnp.float32)
    kdp = jax.random.normal(kkdp, (B, Cin, H, W), jnp.float32)

    params = init_furenet_params(kp, Cin)
    out = furenet_forward(params, z, zdr, kdp)
    out = jax.block_until_ready(out)

    assert out.shape == (B, Cin, H, W), out.shape
    assert jnp.all(jnp.isfinite(out))
    print("KERNEL_OK")
</pallas_src>

<mosaic_0001>
module attributes {stable_mosaic.version = 11 : i64} {
  func.func @k(%arg0: memref<128x64xf32, #tpu.memory_space<vmem>>, %arg1: memref<2x8x512xf32, #tpu.memory_space<vmem>>) attributes {dimension_semantics = [], scalar_prefetch = 0 : i64, scratch_operands = 0 : i64, tpu.core_type = #tpu.core_type<tc>} {
    %c0 = arith.constant 0 : index
    %c0_0 = arith.constant 0 : index
    %0 = vector.load %arg0[%c0, %c0_0] : memref<128x64xf32, #tpu.memory_space<vmem>>, vector<128x64xf32>
    %1 = vector.shape_cast %0 : vector<128x64xf32> to vector<2x8x512xf32>
    %c0_1 = arith.constant 0 : index
    %c0_2 = arith.constant 0 : index
    %c0_3 = arith.constant 0 : index
    %2 = vector.load %arg1[%c0_1, %c0_2, %c0_3] : memref<2x8x512xf32, #tpu.memory_space<vmem>>, vector<2x8x512xf32>
    tpu.vector_store %arg1[%c0_1, %c0_2, %c0_3], %1 {strides = array<i32>} : memref<2x8x512xf32, #tpu.memory_space<vmem>>, vector<2x8x512xf32>,
    return
  }
}

module attributes {stable_mosaic.version = 11 : i64} {
  func.func @k(%arg0: i32, %arg1: memref<8x128xf32, #tpu.memory_space<vmem>>, %arg2: memref<8x128xf32, #tpu.memory_space<vmem>>, %arg3: memref<8x128xf32, #tpu.memory_space<vmem>>) attributes {dimension_semantics = [#tpu.dimension_semantics<arbitrary>], iteration_bounds = array<i64: 2>, scalar_prefetch = 0 : i64, scratch_operands = 0 : i64, tpu.core_type = #tpu.core_type<tc>, window_params = [{transform_indices = @transform_0, window_bounds = array<i64: 8, 128>}, {pipeline_mode = #tpu.pipeline_mode<synchronous>, transform_indices = @transform_1, window_bounds = array<i64: 8, 128>}, {transform_indices = @transform_2, window_bounds = array<i64: 8, 128>}]} {
    %c0 = arith.constant 0 : index
    %c0_0 = arith.constant 0 : index
    %0 = vector.load %arg1[%c0, %c0_0] : memref<8x128xf32, #tpu.memory_space<vmem>>, vector<8x128xf32>
    %c0_1 = arith.constant 0 : index
    %c0_2 = arith.constant 0 : index
    %1 = vector.load %arg2[%c0_1, %c0_2] : memref<8x128xf32, #tpu.memory_space<vmem>>, vector<8x128xf32>
    %2 = arith.addf %0, %1 : vector<8x128xf32>
    %c0_3 = arith.constant 0 : index
    %c0_4 = arith.constant 0 : index
    %3 = vector.load %arg3[%c0_3, %c0_4] : memref<8x128xf32, #tpu.memory_space<vmem>>, vector<8x128xf32>
    tpu.vector_store %arg3[%c0_3, %c0_4], %2 {strides = array<i32>} : memref<8x128xf32, #tpu.memory_space<vmem>>, vector<8x128xf32>,
    return
  }
  func.func @transform_0(%arg0: i32) -> (i32, i32) {
    %c0_i32 = arith.constant 0 : i32
    %c0_i32_0 = arith.constant 0 : i32
    return %arg0, %c0_i32 : i32, i32
  }
  func.func @transform_1(%arg0: i32) -> (i32, i32) {
    %c0_i32 = arith.constant 0 : i32
    %c0_i32_0 = arith.constant 0 : i32
    %c0_i32_1 = arith.constant 0 : i32
    return %c0_i32, %c0_i32_0 : i32, i32
  }
  func.func @transform_2(%arg0: i32) -> (i32, i32) {
    %c0_i32 = arith.constant 0 : i32
    %c0_i32_0 = arith.constant 0 : i32
    return %arg0, %c0_i32 : i32, i32
  }
}

module attributes {stable_mosaic.version = 11 : i64} {
  func.func @_res_block_kernel(%arg0: i32, %arg1: memref<2x8x8x8xbf16, #tpu.memory_space<vmem>>, %arg2: memref<72x64xbf16, #tpu.memory_space<vmem>>, %arg3: memref<1x64xf32, #tpu.memory_space<vmem>>, %arg4: memref<576x64xbf16, #tpu.memory_space<vmem>>, %arg5: memref<1x64xf32, #tpu.memory_space<vmem>>, %arg6: memref<8x64xbf16, #tpu.memory_space<vmem>>, %arg7: memref<1x64xf32, #tpu.memory_space<vmem>>, %arg8: memref<2x8x8x64xbf16, #tpu.memory_space<vmem>>, %arg9: memref<2x10x10x8xbf16, #tpu.memory_space<vmem>>, %arg10: memref<2x10x10x64xbf16, #tpu.memory_space<vmem>>) attributes {dimension_semantics = [#tpu.dimension_semantics<parallel>], iteration_bounds = array<i64: 1>, scalar_prefetch = 0 : i64, scratch_operands = 2 : i64, tpu.core_type = #tpu.core_type<tc>, window_params = [{transform_indices = @transform_0, window_bounds = array<i64: 2, 8, 8, 8>}, {pipeline_mode = #tpu.pipeline_mode<synchronous>, transform_indices = @transform_1, window_bounds = array<i64: 72, 64>}, {pipeline_mode = #tpu.pipeline_mode<synchronous>, transform_indices = @transform_2, window_bounds = array<i64: 1, 64>}, {pipeline_mode = #tpu.pipeline_mode<synchronous>, transform_indices = @transform_3, window_bounds = array<i64: 576, 64>}, {pipeline_mode = #tpu.pipeline_mode<synchronous>, transform_indices = @transform_4, window_bounds = array<i64: 1, 64>}, {pipeline_mode = #tpu.pipeline_mode<synchronous>, transform_indices = @transform_5, window_bounds = array<i64: 8, 64>}, {pipeline_mode = #tpu.pipeline_mode<synchronous>, transform_indices = @transform_6, window_bounds = array<i64: 1, 64>}, {transform_indices = @transform_7, window_bounds = array<i64: 2, 8, 8, 64>}]} {
    %c0 = arith.constant 0 : index
    %c0_0 = arith.constant 0 : index
    %c0_1 = arith.constant 0 : index
    %c0_2 = arith.constant 0 : index
    %0 = vector.load %arg1[%c0, %c0_0, %c0_1, %c0_2] : memref<2x8x8x8xbf16, #tpu.memory_space<vmem>>, vector<2x8x8x8xbf16>
    %cst = arith.constant 0.000000e+00 : bf16
    %1 = vector.broadcast %cst : bf16 to vector<2x1x10x8xbf16>
    %c0_3 = arith.constant 0 : index
    %c0_4 = arith.constant 0 : index
    %c0_5 = arith.constant 0 : index
    %c0_6 = arith.constant 0 : index
    %2 = vector.load %arg9[%c0_3, %c0_4, %c0_5, %c0_6] : memref<2x10x10x8xbf16, #tpu.memory_space<vmem>>, vector<2x1x10x8xbf16>
    tpu.vector_store %arg9[%c0_3, %c0_4, %c0_5, %c0_6], %1 {strides = array<i32>} : memref<2x10x10x8xbf16, #tpu.memory_space<vmem>>, vector<2x1x10x8xbf16>,
    %cst_7 = arith.constant 0.000000e+00 : bf16
    %3 = vector.broadcast %cst_7 : bf16 to vector<2x1x10x8xbf16>
    %c0_8 = arith.constant 0 : index
    %c9 = arith.constant 9 : index
    %c0_9 = arith.constant 0 : index
    %c0_10 = arith.constant 0 : index
    %4 = vector.load %arg9[%c0_8, %c9, %c0_9, %c0_10] : memref<2x10x10x8xbf16, #tpu.memory_space<vmem>>, vector<2x1x10x8xbf16>
    tpu.vector_store %arg9[%c0_8, %c9, %c0_9, %c0_10], %3 {strides = array<i32>} : memref<2x10x10x8xbf16, #tpu.memory_space<vmem>>, vector<2x1x10x8xbf16>,
    %cst_11 = arith.constant 0.000000e+00 : bf16
    %5 = vector.broadcast %cst_11 : bf16 to vector<2x10x1x8xbf16>
    %c0_12 = arith.constant 0 : index
    %c0_13 = arith.constant 0 : index
    %c0_14 = arith.constant 0 : index
    %c0_15 = arith.constant 0 : index
    %6 = vector.load %arg9[%c0_12, %c0_13, %c0_14, %c0_15] : memref<2x10x10x8xbf16, #tpu.memory_space<vmem>>, vector<2x10x1x8xbf16>
    tpu.vector_store %arg9[%c0_12, %c0_13, %c0_14, %c0_15], %5 {strides = array<i32>} : memref<2x10x10x8xbf16, #tpu.memory_space<vmem>>, vector<2x10x1x8xbf16>,
    %cst_16 = arith.constant 0.000000e+00 : bf16
    %7 = vector.broadcast %cst_16 : bf16 to vector<2x10x1x8xbf16>
    %c0_17 = arith.constant 0 : index
    %c0_18 = arith.constant 0 : index
    %c9_19 = arith.constant 9 : index
    %c0_20 = arith.constant 0 : index
    %8 = vector.load %arg9[%c0_17, %c0_18, %c9_19, %c0_20] : memref<2x10x10x8xbf16, #tpu.memory_space<vmem>>, vector<2x10x1x8xbf16>
    tpu.vector_store %arg9[%c0_17, %c0_18, %c9_19, %c0_20], %7 {strides = array<i32>} : memref<2x10x10x8xbf16, #tpu.memory_space<vmem>>, vector<2x10x1x8xbf16>,
    %c0_21 = arith.constant 0 : index
    %c1 = arith.constant 1 : index
    %c1_22 = arith.constant 1 : index
    %c0_23 = arith.constant 0 : index
    %9 = vector.load %arg9[%c0_21, %c1, %c1_22, %c0_23] : memref<2x10x10x8xbf16, #tpu.memory_space<vmem>>, vector<2x8x8x8xbf16>
    tpu.vector_store %arg9[%c0_21, %c1, %c1_22, %c0_23], %0 {strides = array<i32>} : memref<2x10x10x8xbf16, #tpu.memory_space<vmem>>, vector<2x8x8x8xbf16>,
    %c0_24 = arith.constant 0 : index
    %c0_25 = arith.constant 0 : index
    %c0_26 = arith.constant 0 : index
    %c0_27 = arith.constant 0 : index
    %10 = vector.load %arg9[%c0_24, %c0_25, %c0_26, %c0_27] : memref<2x10x10x8xbf16, #tpu.memory_space<vmem>>, vector<2x10x10x8xbf16>
    %cst_28 = arith.constant 0.000000e+00 : f32
    %11 = vector.broadcast %cst_28 : f32 to vector<128x64xf32>
    %12 = vector.extract_strided_slice %10 {offsets = [0, 0, 0, 0], sizes = [2, 8, 8, 8], strides = [1, 1, 1, 1]} : vector<2x10x10x8xbf16> to vector<2x8x8x8xbf16>
    %13 = vector.shape_cast %12 : vector<2x8x8x8xbf16> to vector<128x8xbf16>
    %c0_29 = arith.constant 0 : index
    %c0_30 = arith.constant 0 : index
    %14 = vector.load %arg2[%c0_29, %c0_30] : memref<72x64xbf16, #tpu.memory_space<vmem>>, vector<8x64xbf16>
    %cst_31 = arith.constant dense<0.000000e+00> : vector<128x64xf32>
    %15 = tpu.matmul %13, %14, %cst_31 {dimension_numbers = #tpu.dot_dimension_numbers<[1], [0], [0], [1], [0, 0, 1, 1], [], []>} : vector<128x8xbf16>, vector<8x64xbf16>, vector<128x64xf32> -> vector<128x64xf32>
    %16 = arith.addf %11, %15 : vector<128x64xf32>
    %17 = vector.extract_strided_slice %10 {offsets = [0, 0, 1, 0], sizes = [2, 8, 8, 8], strides = [1, 1, 1, 1]} : vector<2x10x10x8xbf16> to vector<2x8x8x8xbf16>
    %18 = vector.shape_cast %17 : vector<2x8x8x8xbf16> to vector<128x8xbf16>
    %c8 = arith.constant 8 : index
    %c0_32 = arith.constant 0 : index
    %19 = vector.load %arg2[%c8, %c0_32] : memref<72x64xbf16, #tpu.memory_space<vmem>>, vector<8x64xbf16>
    %cst_33 = arith.constant dense<0.000000e+00> : vector<128x64xf32>
    %20 = tpu.matmul %18, %19, %cst_33 {dimension_numbers = #tpu.dot_dimension_numbers<[1], [0], [0], [1], [0, 0, 1, 1], [], []>} : vector<128x8xbf16>, vector<8x64xbf16>, vector<128x64xf32> -> vector<128x64xf32>
    %21 = arith.addf %16, %20 : vector<128x64xf32>
    %22 = vector.extract_strided_slice %10 {offsets = [0, 0, 2, 0], sizes = [2, 8, 8, 8], strides = [1, 1, 1, 1]} : vector<2x10x10x8xbf16> to vector<2x8x8x8xbf16>
    %23 = vector.shape_cast %22 : vector<2x8x8x8xbf16> to vector<128x8xbf16>
    %c16 = arith.constant 16 : index
    %c0_34 = arith.constant 0 : index
    %24 = vector.load %arg2[%c16, %c0_34] : memref<72x64xbf16, #tpu.memory_space<vmem>>, vector<8x64xbf16>
    %cst_35 = arith.constant dense<0.000000e+00> : vector<128x64xf32>
    %25 = tpu.matmul %23, %24, %cst_35 {dimension_numbers = #tpu.dot_dimension_numbers<[1], [0], [0], [1], [0, 0, 1, 1], [], []>} : vector<128x8xbf16>, vector<8x64xbf16>, vector<128x64xf32> -> vector<128x64xf32>
    %26 = arith.addf %21, %25 : vector<128x64xf32>
    %27 = vector.extract_strided_slice %10 {offsets = [0, 1, 0, 0], sizes = [2, 8, 8, 8], strides = [1, 1, 1, 1]} : vector<2x10x10x8xbf16> to vector<2x8x8x8xbf16>
    %28 = vector.shape_cast %27 : vector<2x8x8x8xbf16> to vector<128x8xbf16>
    %c24 = arith.constant 24 : index
    %c0_36 = arith.constant 0 : index
    %29 = vector.load %arg2[%c24, %c0_36] : memref<72x64xbf16, #tpu.memory_space<vmem>>, vector<8x64xbf16>
    %cst_37 = arith.constant dense<0.000000e+00> : vector<128x64xf32>
    %30 = tpu.matmul %28, %29, %cst_37 {dimension_numbers = #tpu.dot_dimension_numbers<[1], [0], [0], [1], [0, 0, 1, 1], [], []>} : vector<128x8xbf16>, vector<8x64xbf16>, vector<128x64xf32> -> vector<128x64xf32>
    %31 = arith.addf %26, %30 : vector<128x64xf32>
    %32 = vector.extract_strided_slice %10 {offsets = [0, 1, 1, 0], sizes = [2, 8, 8, 8], strides = [1, 1, 1, 1]} : vector<2x10x10x8xbf16> to vector<2x8x8x8xbf16>
    %33 = vector.shape_cast %32 : vector<2x8x8x8xbf16> to vector<128x8xbf16>
    %c32 = arith.constant 32 : index
    %c0_38 = arith.constant 0 : index
    %34 = vector.load %arg2[%c32, %c0_38] : memref<72x64xbf16, #tpu.memory_space<vmem>>, vector<8x64xbf16>
    %cst_39 = arith.constant dense<0.000000e+00> : vector<128x64xf32>
    %35 = tpu.matmul %33, %34, %cst_39 {dimension_numbers = #tpu.dot_dimension_numbers<[1], [0], [0], [1], [0, 0, 1, 1], [], []>} : vector<128x8xbf16>, vector<8x64xbf16>, vector<128x64xf32> -> vector<128x64xf32>
    %36 = arith.addf %31, %35 : vector<128x64xf32>
    %37 = vector.extract_strided_slice %10 {offsets = [0, 1, 2, 0], sizes = [2, 8, 8, 8], strides = [1, 1, 1, 1]} : vector<2x10x10x8xbf16> to vector<2x8x8x8xbf16>
    %38 = vector.shape_cast %37 : vector<2x8x8x8xbf16> to vector<128x8xbf16>
    %c40 = arith.constant 40 : index
    %c0_40 = arith.constant 0 : index
    %39 = vector.load %arg2[%c40, %c0_40] : memref<72x64xbf16, #tpu.memory_space<vmem>>, vector<8x64xbf16>
    %cst_41 = arith.constant dense<0.000000e+00> : vector<128x64xf32>
    %40 = tpu.matmul %38, %39, %cst_41 {dimension_numbers = #tpu.dot_dimension_numbers<[1], [0], [0], [1], [0, 0, 1, 1], [], []>} : vector<128x8xbf16>, vector<8x64xbf16>, vector<128x64xf32> -> vector<128x64xf32>
    %41 = arith.addf %36, %40 : vector<128x64xf32>
    %42 = vector.extract_strided_slice %10 {offsets = [0, 2, 0, 0], sizes = [2, 8, 8, 8], strides = [1, 1, 1, 1]} : vector<2x10x10x8xbf16> to vector<2x8x8x8xbf16>
    %43 = vector.shape_cast %42 : vector<2x8x8x8xbf16> to vector<128x8xbf16>
    %c48 = arith.constant 48 : index
    %c0_42 = arith.constant 0 : index
    %44 = vector.load %arg2[%c48, %c0_42] : memref<72x64xbf16, #tpu.memory_space<vmem>>, vector<8x64xbf16>
    %cst_43 = arith.constant dense<0.000000e+00> : vector<128x64xf32>
    %45 = tpu.matmul %43, %44, %cst_43 {dimension_numbers = #tpu.dot_dimension_numbers<[1], [0], [0], [1], [0, 0, 1, 1], [], []>} : vector<128x8xbf16>, vector<8x64xbf16>, vector<128x64xf32> -> vector<128x64xf32>
    %46 = arith.addf %41, %45 : vector<128x64xf32>
    %47 = vector.extract_strided_slice %10 {offsets = [0, 2, 1, 0], sizes = [2, 8, 8, 8], strides = [1, 1, 1, 1]} : vector<2x10x10x8xbf16> to vector<2x8x8x8xbf16>
    %48 = vector.shape_cast %47 : vector<2x8x8x8xbf16> to vector<128x8xbf16>
    %c56 = arith.constant 56 : index
    %c0_44 = arith.constant 0 : index
    %49 = vector.load %arg2[%c56, %c0_44] : memref<72x64xbf16, #tpu.memory_space<vmem>>, vector<8x64xbf16>
    %cst_45 = arith.constant dense<0.000000e+00> : vector<128x64xf32>
    %50 = tpu.matmul %48, %49, %cst_45 {dimension_numbers = #tpu.dot_dimension_numbers<[1], [0], [0], [1], [0, 0, 1, 1], [], []>} : vector<128x8xbf16>, vector<8x64xbf16>, vector<128x64xf32> -> vector<128x64xf32>
    %51 = arith.addf %46, %50 : vector<128x64xf32>
    %52 = vector.extract_strided_slice %10 {offsets = [0, 2, 2, 0], sizes = [2, 8, 8, 8], strides = [1, 1, 1, 1]} : vector<2x10x10x8xbf16> to vector<2x8x8x8xbf16>
    %53 = vector.shape_cast %52 : vector<2x8x8x8xbf16> to vector<128x8xbf16>
    %c64 = arith.constant 64 : index
    %c0_46 = arith.constant 0 : index
    %54 = vector.load %arg2[%c64, %c0_46] : memref<72x64xbf16, #tpu.memory_space<vmem>>, vector<8x64xbf16>
    %cst_47 = arith.constant dense<0.000000e+00> : vector<128x64xf32>
    %55 = tpu.matmul %53, %54, %cst_47 {dimension_numbers = #tpu.dot_dimension_numbers<[1], [0], [0], [1], [0, 0, 1, 1], [], []>} : vector<128x8xbf16>, vector<8x64xbf16>, vector<128x64xf32> -> vector<128x64xf32>
    %56 = arith.addf %51, %55 : vector<128x64xf32>
    %c0_48 = arith.constant 0 : index
    %c0_49 = arith.constant 0 : index
    %57 = vector.load %arg3[%c0_48, %c0_49] : memref<1x64xf32, #tpu.memory_space<vmem>>, vector<1x64xf32>
    %58 = vector.broadcast %57 : vector<1x64xf32> to vector<128x64xf32>
    %59 = arith.addf %56, %58 : vector<128x64xf32>
    %cst_50 = arith.constant 0.000000e+00 : f32
    %60 = vector.broadcast %cst_50 : f32 to vector<128x64xf32>
    %61 = arith.maximumf %59, %60 : vector<128x64xf32>
    %62 = vector.shape_cast %61 : vector<128x64xf32> to vector<2x8x8x64xf32>
    %63 = arith.truncf %62 : vector<2x8x8x64xf32> to vector<2x8x8x64xbf16>
    %cst_51 = arith.constant 0.000000e+00 : bf16
    %64 = vector.broadcast %cst_51 : bf16 to vector<2x1x10x64xbf16>
    %c0_52 = arith.constant 0 : index
    %c0_53 = arith.constant 0 : index
    %c0_54 = arith.constant 0 : index
    %c0_55 = arith.constant 0 : index
    %65 = vector.load %arg10[%c0_52, %c0_53, %c0_54, %c0_55] : memref<2x10x10x64xbf16, #tpu.memory_space<vmem>>, vector<2x1x10x64xbf16>
    tpu.vector_store %arg10[%c0_52, %c0_53, %c0_54, %c0_55], %64 {strides = array<i32>} : memref<2x10x10x64xbf16, #tpu.memory_space<vmem>>, vector<2x1x10x64xbf16>,
    %cst_56 = arith.constant 0.000000e+00 : bf16
    %66 = vector.broadcast %cst_56 : bf16 to vector<2x1x10x64xbf16>
    %c0_57 = arith.constant 0 : index
    %c9_58 = arith.constant 9 : index
    %c0_59 = arith.constant 0 : index
    %c0_60 = arith.constant 0 : index
    %67 = vector.load %arg10[%c0_57, %c9_58, %c0_59, %c0_60] : memref<2x10x10x64xbf16, #tpu.memory_space<vmem>>, vector<2x1x10x64xbf16>
    tpu.vector_store %arg10[%c0_57, %c9_58, %c0_59, %c0_60], %66 {strides = array<i32>} : memref<2x10x10x64xbf16, #tpu.memory_space<vmem>>, vector<2x1x10x64xbf16>,
    %cst_61 = arith.constant 0.000000e+00 : bf16
    %68 = vector.broadcast %cst_61 : bf16 to vector<2x10x1x64xbf16>
    %c0_62 = arith.constant 0 : index
    %c0_63 = arith.constant 0 : index
    %c0_64 = arith.constant 0 : index
    %c0_65 = arith.constant 0 : index
    %69 = vector.load %arg10[%c0_62, %c0_63, %c0_64, %c0_65] : memref<2x10x10x64xbf16, #tpu.memory_space<vmem>>, vector<2x10x1x64xbf16>
    tpu.vector_store %arg10[%c0_62, %c0_63, %c0_64, %c0_65], %68 {strides = array<i32>} : memref<2x10x10x64xbf16, #tpu.memory_space<vmem>>, vector<2x10x1x64xbf16>,
    %cst_66 = arith.constant 0.000000e+00 : bf16
    %70 = vector.broadcast %cst_66 : bf16 to vector<2x10x1x64xbf16>
    %c0_67 = arith.constant 0 : index
    %c0_68 = arith.constant 0 : index
    %c9_69 = arith.constant 9 : index
    %c0_70 = arith.constant 0 : index
    %71 = vector.load %arg10[%c0_67, %c0_68, %c9_69, %c0_70] : memref<2x10x10x64xbf16, #tpu.memory_space<vmem>>, vector<2x10x1x64xbf16>
    tpu.vector_store %arg10[%c0_67, %c0_68, %c9_69, %c0_70], %70 {strides = array<i32>} : memref<2x10x10x64xbf16, #tpu.memory_space<vmem>>, vector<2x10x1x64xbf16>,
    %c0_71 = arith.constant 0 : index
    %c1_72 = arith.constant 1 : index
    %c1_73 = arith.constant 1 : index
    %c0_74 = arith.constant 0 : index
    %72 = vector.load %arg10[%c0_71, %c1_72, %c1_73, %c0_74] : memref<2x10x10x64xbf16, #tpu.memory_space<vmem>>, vector<2x8x8x64xbf16>
    tpu.vector_store %arg10[%c0_71, %c1_72, %c1_73, %c0_74], %63 {strides = array<i32>} : memref<2x10x10x64xbf16, #tpu.memory_space<vmem>>, vector<2x8x8x64xbf16>,
    %c0_75 = arith.constant 0 : index
    %c0_76 = arith.constant 0 : index
    %c0_77 = arith.constant 0 : index
    %c0_78 = arith.constant 0 : index
    %73 = vector.load %arg10[%c0_75, %c0_76, %c0_77, %c0_78] : memref<2x10x10x64xbf16, #tpu.memory_space<vmem>>, vector<2x10x10x64xbf16>
    %cst_79 = arith.constant 0.000000e+00 : f32
    %74 = vector.broadcast %cst_79 : f32 to vector<128x64xf32>
    %75 = vector.extract_strided_slice %73 {offsets = [0, 0, 0, 0], sizes = [2, 8, 8, 64], strides = [1, 1, 1, 1]} : vector<2x10x10x64xbf16> to vector<2x8x8x64xbf16>
    %76 = vector.shape_cast %75 : vector<2x8x8x64xbf16> to vector<128x64xbf16>
    %c0_80 = arith.constant 0 : index
    %c0_81 = arith.constant 0 : index
    %77 = vector.load %arg4[%c0_80, %c0_81] : memref<576x64xbf16, #tpu.memory_space<vmem>>, vector<64x64xbf16>
    %cst_82 = arith.constant dense<0.000000e+00> : vector<128x64xf32>
    %78 = tpu.matmul %76, %77, %cst_82 {dimension_numbers = #tpu.dot_dimension_numbers<[1], [0], [0], [1], [0, 0, 1, 1], [], []>} : vector<128x64xbf16>, vector<64x64xbf16>, vector<128x64xf32> -> vector<128x64xf32>
    %79 = arith.addf %74, %78 : vector<128x64xf32>
    %80 = vector.extract_strided_slice %73 {offsets = [0, 0, 1, 0], sizes = [2, 8, 8, 64], strides = [1, 1, 1, 1]} : vector<2x10x10x64xbf16> to vector<2x8x8x64xbf16>
    %81 = vector.shape_cast %80 : vector<2x8x8x64xbf16> to vector<128x64xbf16>
    %c64_83 = arith.constant 64 : index
    %c0_84 = arith.constant 0 : index
    %82 = vector.load %arg4[%c64_83, %c0_84] : memref<576x64xbf16, #tpu.memory_space<vmem>>, vector<64x64xbf16>
    %cst_85 = arith.constant dense<0.000000e+00> : vector<128x64xf32>
    %83 = tpu.matmul %81, %82, %cst_85 {dimension_numbers = #tpu.dot_dimension_numbers<[1], [0], [0], [1], [0, 0, 1, 1], [], []>} : vector<128x64xbf16>, vector<64x64xbf16>, vector<128x64xf32> -> vector<128x64xf32>
    %84 = arith.addf %79, %83 : vector<128x64xf32>
    %85 = vector.extract_strided_slice %73 {offsets = [0, 0, 2, 0], sizes = [2, 8, 8, 64], strides = [1, 1, 1, 1]} : vector<2x10x10x64xbf16> to vector<2x8x8x64xbf16>
    %86 = vector.shape_cast %85 : vector<2x8x8x64xbf16> to vector<128x64xbf16>
    %c128 = arith.constant 128 : index
    %c0_86 = arith.constant 0 : index
    %87 = vector.load %arg4[%c128, %c0_86] : memref<576x64xbf16, #tpu.memory_space<vmem>>, vector<64x64xbf16>
    %cst_87 = arith.constant dense<0.000000e+00> : vector<128x64xf32>
    %88 = tpu.matmul %86, %87, %cst_87 {dimension_numbers = #tpu.dot_dimension_numbers<[1], [0], [0], [1], [0, 0, 1, 1], [], []>} : vector<128x64xbf16>, vector<64x64xbf16>, vector<128x64xf32> -> vector<128x64xf32>
    %89 = arith.addf %84, %88 : vector<128x64xf32>
    %90 = vector.extract_strided_slice %73 {offsets = [0, 1, 0, 0], sizes = [2, 8, 8, 64], strides = [1, 1, 1, 1]} : vector<2x10x10x64xbf16> to vector<2x8x8x64xbf16>
    %91 = vector.shape_cast %90 : vector<2x8x8x64xbf16> to vector<128x64xbf16>
    %c192 = arith.constant 192 : index
    %c0_88 = arith.constant 0 : index
    %92 = vector.load %arg4[%c192, %c0_88] : memref<576x64xbf16, #tpu.memory_space<vmem>>, vector<64x64xbf16>
    %cst_89 = arith.constant dense<0.000000e+00> : vector<128x64xf32>
    %93 = tpu.matmul %91, %92, %cst_89 {dimension_numbers = #tpu.dot_dimension_numbers<[1], [0], [0], [1], [0, 0, 1, 1], [], []>} : vector<128x64xbf16>, vector<64x64xbf16>, vector<128x64xf32> -> vector<128x64xf32>
    %94 = arith.addf %89, %93 : vector<128x64xf32>
    %95 = vector.extract_strided_slice %73 {offsets = [0, 1, 1, 0], sizes = [2, 8, 8, 64], strides = [1, 1, 1, 1]} : vector<2x10x10x64xbf16> to vector<2x8x8x64xbf16>
    %96 = vector.shape_cast %95 : vector<2x8x8x64xbf16> to vector<128x64xbf16>
    %c256 = arith.constant 256 : index
    %c0_90 = arith.constant 0 : index
    %97 = vector.load %arg4[%c256, %c0_90] : memref<576x64xbf16, #tpu.memory_space<vmem>>, vector<64x64xbf16>
    %cst_91 = arith.constant dense<0.000000e+00> : vector<128x64xf32>
    %98 = tpu.matmul %96, %97, %cst_91 {dimension_numbers = #tpu.dot_dimension_numbers<[1], [0], [0], [1], [0, 0, 1, 1], [], []>} : vector<128x64xbf16>, vector<64x64xbf16>, vector<128x64xf32> -> vector<128x64xf32>
    %99 = arith.addf %94, %98 : vector<128x64xf32>
    %100 = vector.extract_strided_slice %73 {offsets = [0, 1, 2, 0], sizes = [2, 8, 8, 64], strides = [1, 1, 1, 1]} : vector<2x10x10x64xbf16> to vector<2x8x8x64xbf16>
    %101 = vector.shape_cast %100 : vector<2x8x8x64xbf16> to vector<128x64xbf16>
    %c320 = arith.constant 320 : index
    %c0_92 = arith.constant 0 : index
    %102 = vector.load %arg4[%c320, %c0_92] : memref<576x64xbf16, #tpu.memory_space<vmem>>, vector<64x64xbf16>
    %cst_93 = arith.constant dense<0.000000e+00> : vector<128x64xf32>
    %103 = tpu.matmul %101, %102, %cst_93 {dimension_numbers = #tpu.dot_dimension_numbers<[1], [0], [0], [1], [0, 0, 1, 1], [], []>} : vector<128x64xbf16>, vector<64x64xbf16>, vector<128x64xf32> -> vector<128x64xf32>
    %104 = arith.addf %99, %103 : vector<128x64xf32>
    %105 = vector.extract_strided_slice %73 {offsets = [0, 2, 0, 0], sizes = [2, 8, 8, 64], strides = [1, 1, 1, 1]} : vector<2x10x10x64xbf16> to vector<2x8x8x64xbf16>
    %106 = vector.shape_cast %105 : vector<2x8x8x64xbf16> to vector<128x64xbf16>
    %c384 = arith.constant 384 : index
    %c0_94 = arith.constant 0 : index
    %107 = vector.load %arg4[%c384, %c0_94] : memref<576x64xbf16, #tpu.memory_space<vmem>>, vector<64x64xbf16>
    %cst_95 = arith.constant dense<0.000000e+00> : vector<128x64xf32>
    %108 = tpu.matmul %106, %107, %cst_95 {dimension_numbers = #tpu.dot_dimension_numbers<[1], [0], [0], [1], [0, 0, 1, 1], [], []>} : vector<128x64xbf16>, vector<64x64xbf16>, vector<128x64xf32> -> vector<128x64xf32>
    %109 = arith.addf %104, %108 : vector<128x64xf32>
    %110 = vector.extract_strided_slice %73 {offsets = [0, 2, 1, 0], sizes = [2, 8, 8, 64], strides = [1, 1, 1, 1]} : vector<2x10x10x64xbf16> to vector<2x8x8x64xbf16>
    %111 = vector.shape_cast %110 : vector<2x8x8x64xbf16> to vector<128x64xbf16>
    %c448 = arith.constant 448 : index
    %c0_96 = arith.constant 0 : index
    %112 = vector.load %arg4[%c448, %c0_96] : memref<576x64xbf16, #tpu.memory_space<vmem>>, vector<64x64xbf16>
    %cst_97 = arith.constant dense<0.000000e+00> : vector<128x64xf32>
    %113 = tpu.matmul %111, %112, %cst_97 {dimension_numbers = #tpu.dot_dimension_numbers<[1], [0], [0], [1], [0, 0, 1, 1], [], []>} : vector<128x64xbf16>, vector<64x64xbf16>, vector<128x64xf32> -> vector<128x64xf32>
    %114 = arith.addf %109, %113 : vector<128x64xf32>
    %115 = vector.extract_strided_slice %73 {offsets = [0, 2, 2, 0], sizes = [2, 8, 8, 64], strides = [1, 1, 1, 1]} : vector<2x10x10x64xbf16> to vector<2x8x8x64xbf16>
    %116 = vector.shape_cast %115 : vector<2x8x8x64xbf16> to vector<128x64xbf16>
    %c512 = arith.constant 512 : index
    %c0_98 = arith.constant 0 : index
    %117 = vector.load %arg4[%c512, %c0_98] : memref<576x64xbf16, #tpu.memory_space<vmem>>, vector<64x64xbf16>
    %cst_99 = arith.constant dense<0.000000e+00> : vector<128x64xf32>
    %118 = tpu.matmul %116, %117, %cst_99 {dimension_numbers = #tpu.dot_dimension_numbers<[1], [0], [0], [1], [0, 0, 1, 1], [], []>} : vector<128x64xbf16>, vector<64x64xbf16>, vector<128x64xf32> -> vector<128x64xf32>
    %119 = arith.addf %114, %118 : vector<128x64xf32>
    %c0_100 = arith.constant 0 : index
    %c0_101 = arith.constant 0 : index
    %120 = vector.load %arg5[%c0_100, %c0_101] : memref<1x64xf32, #tpu.memory_space<vmem>>, vector<1x64xf32>
    %121 = vector.broadcast %120 : vector<1x64xf32> to vector<128x64xf32>
    %122 = arith.addf %119, %121 : vector<128x64xf32>
    %123 = vector.shape_cast %0 : vector<2x8x8x8xbf16> to vector<128x8xbf16>
    %c0_102 = arith.constant 0 : index
    %c0_103 = arith.constant 0 : index
    %124 = vector.load %arg6[%c0_102, %c0_103] : memref<8x64xbf16, #tpu.memory_space<vmem>>, vector<8x64xbf16>
    %cst_104 = arith.constant dense<0.000000e+00> : vector<128x64xf32>
    %125 = tpu.matmul %123, %124, %cst_104 {dimension_numbers = #tpu.dot_dimension_numbers<[1], [0], [0], [1], [0, 0, 1, 1], [], []>} : vector<128x8xbf16>, vector<8x64xbf16>, vector<128x64xf32> -> vector<128x64xf32>
    %c0_105 = arith.constant 0 : index
    %c0_106 = arith.constant 0 : index
    %126 = vector.load %arg7[%c0_105, %c0_106] : memref<1x64xf32, #tpu.memory_space<vmem>>, vector<1x64xf32>
    %127 = vector.broadcast %126 : vector<1x64xf32> to vector<128x64xf32>
    %128 = arith.addf %125, %127 : vector<128x64xf32>
    %129 = arith.addf %122, %128 : vector<128x64xf32>
    %cst_107 = arith.constant 0.000000e+00 : f32
    %130 = vector.broadcast %cst_107 : f32 to vector<128x64xf32>
    %131 = arith.maximumf %129, %130 : vector<128x64xf32>
    %132 = vector.shape_cast %131 : vector<128x64xf32> to vector<2x8x8x64xf32>
    %133 = arith.truncf %132 : vector<2x8x8x64xf32> to vector<2x8x8x64xbf16>
    %c0_108 = arith.constant 0 : index
    %c0_109 = arith.constant 0 : index
    %c0_110 = arith.constant 0 : index
    %c0_111 = arith.constant 0 : index
    %134 = vector.load %arg8[%c0_108, %c0_109, %c0_110, %c0_111] : memref<2x8x8x64xbf16, #tpu.memory_space<vmem>>, vector<2x8x8x64xbf16>
    tpu.vector_store %arg8[%c0_108, %c0_109, %c0_110, %c0_111], %133 {strides = array<i32>} : memref<2x8x8x64xbf16, #tpu.memory_space<vmem>>, vector<2x8x8x64xbf16>,
    return
  }
  func.func @transform_0(%arg0: i32) -> (i32, i32, i32, i32) {
    %c0_i32 = arith.constant 0 : i32
    %c0_i32_0 = arith.constant 0 : i32
    %c0_i32_1 = arith.constant 0 : i32
    %c0_i32_2 = arith.constant 0 : i32
    return %arg0, %c0_i32, %c0_i32_0, %c0_i32_1 : i32, i32, i32, i32
  }
  func.func @transform_1(%arg0: i32) -> (i32, i32) {
    %c0_i32 = arith.constant 0 : i32
    %c0_i32_0 = arith.constant 0 : i32
    %c0_i32_1 = arith.constant 0 : i32
    return %c0_i32, %c0_i32_0 : i32, i32
  }
  func.func @transform_2(%arg0: i32) -> (i32, i32) {
    %c0_i32 = arith.constant 0 : i32
    %c0_i32_0 = arith.constant 0 : i32
    %c0_i32_1 = arith.constant 0 : i32
    return %c0_i32, %c0_i32_0 : i32, i32
  }
  func.func @transform_3(%arg0: i32) -> (i32, i32) {
    %c0_i32 = arith.constant 0 : i32
    %c0_i32_0 = arith.constant 0 : i32
    %c0_i32_1 = arith.constant 0 : i32
    return %c0_i32, %c0_i32_0 : i32, i32
  }
  func.func @transform_4(%arg0: i32) -> (i32, i32) {
    %c0_i32 = arith.constant 0 : i32
    %c0_i32_0 = arith.constant 0 : i32
    %c0_i32_1 = arith.constant 0 : i32
    return %c0_i32, %c0_i32_0 : i32, i32
  }
  func.func @transform_5(%arg0: i32) -> (i32, i32) {
    %c0_i32 = arith.constant 0 : i32
    %c0_i32_0 = arith.constant 0 : i32
    %c0_i32_1 = arith.constant 0 : i32
    return %c0_i32, %c0_i32_0 : i32, i32
  }
  func.func @transform_6(%arg0: i32) -> (i32, i32) {
    %c0_i32 = arith.constant 0 : i32
    %c0_i32_0 = arith.constant 0 : i32
    %c0_i32_1 = arith.constant 0 : i32
    return %c0_i32, %c0_i32_0 : i32, i32
  }
  func.func @transform_7(%arg0: i32) -> (i32, i32, i32, i32) {
    %c0_i32 = arith.constant 0 : i32
    %c0_i32_0 = arith.constant 0 : i32
    %c0_i32_1 = arith.constant 0 : i32
    %c0_i32_2 = arith.constant 0 : i32
    return %arg0, %c0_i32, %c0_i32_0, %c0_i32_1 : i32, i32, i32, i32
  }
}

</mosaic_0001>

<llo_original>
// kernel: tpu_custom_call.1
$region0: #{tpu_custom_call.1}
  #allocation0 [shape = 'u32[]', space=smem, size = 0x4, offset = 0x4, fixed_abs, tag = 'smem constant byte address 0x4 - core index']
  #allocation1 [shape = 'u32[144,128]{1,0:T(1,128)}', space=vmem, size = 0x12000, scoped, tag = 'internal scratch']
  %s0 = inlined_call_operand.hbm [shape: f32[16,128], index: 0, kind: input, shape index: {}]
  %s1 = inlined_call_operand.hbm [shape: f32[8,128], index: 1, kind: input, shape index: {}]
  %s2 = inlined_call_operand.hbm [shape: f32[16,128], index: 2, kind: output, shape index: {}]
  %s3 = sld [smem:[#allocation0]]
  $region49: #{tpu_custom_call.1} parent=0
    _
  %s5 = ssub.s32 1, %s3
  %s6 = scalar_select 0, %s5, %s3
  $region1: #{tpu_custom_call.1} parent=0
    #allocation2 [shape = 'u8[8192]{0}', space=vmem, size = 0x2000, scoped, tag = 'input window, operand 0']
    #allocation3 [shape = 's32[2]{0}', space=sflag, size = 0x8, scoped, tag = 'scoped memory for tpu_custom_call.1']
    #allocation4 [shape = 's32[2]{0}', space=sflag, size = 0x8, scoped, tag = 'scoped memory for tpu_custom_call.1']
    #allocation5 [shape = 'u8[4096]{0}', space=vmem, size = 0x1000, scoped, tag = 'input window, operand 1, single buffered']
    #allocation6 [shape = 's32[1]{0}', space=sflag, size = 0x4, scoped, tag = 'scoped memory for tpu_custom_call.1']
    #allocation7 [shape = 'u8[8192]{0}', space=vmem, size = 0x2000, scoped, tag = 'output window, operand 0']
    %7 = vsyncpa [#allocation3], 0
    %s8 = scalar_lea.sflag [#allocation3], 1
    %9 = vsyncpa %s8, 0
    %10 = vsyncpa [#allocation6], 0
    %11 = vsyncpa [#allocation4], 0
    %s12 = scalar_lea.sflag [#allocation4], 1
    %13 = vsyncpa %s12, 0
    loop: start=0, step=1, limit=4
    $region2: #{tpu_custom_call.1} parent=1 // loop_pre_header
      _
    $region3: #{tpu_custom_call.1} parent=1 // loop_header
      %s15 = sphi 0, %s19
      %p16 = scmp.ge.s32.totalorder %s15, 4
      %s25 = sphi 0, %s27
      %s28 = sphi 0, %s25
      %s29 = sphi 0, %s28
      %s45 = sphi 0, %s29
      %s49 = sphi 0, %s49
      %s51 = sphi 0, %s49
      %s52 = sphi 0, %s51
      %s66 = sphi 0, %s52
      %s72 = sphi 0, %s74
      %s75 = sphi 0, %s72
      %s76 = sphi 0, %s75
      %s92 = sphi 0, %s76
    $region4: #{tpu_custom_call.1} parent=1 // loop_header_branch
      %18 = sbr.rel (%p16) target = $region8
    $region5: #{tpu_custom_call.1} parent=1 // loop_body
      %s20 = ssub.s32 %s15, 1
      %s21 = ssub.s32 %s15, 2
      %s22 = sadd.s32 %s15, 1
      %s23 = ssub.s32 %s15, %s22
      %p24 = scmp.eq.s32.totalorder %s23, 0
      %s26 = sadd.s32 %s25, 1
      %s27 = scalar_select %p24, %s25, %s26
      %p30 = pneg %p24
      %p31 = scmp.eq.s32.totalorder %s15, 1
      %p32 = por %p30, %p31
      %p33 = scmp.ne.s32.totalorder %s25, %s28
      %p34 = scmp.eq.s32.totalorder %s15, 0
      %p35 = por %p33, %p34
      %p36 = scmp.ne.s32.totalorder %s25, %s28
      %p37 = scmp.eq.s32.totalorder %s20, 1
      %p38 = por %p36, %p37
      %p39 = scmp.ne.s32.totalorder %s28, %s29
      %p40 = scmp.eq.s32.totalorder %s20, 0
      %p41 = por %p39, %p40
      %p42 = scmp.ne.s32.totalorder %s28, %s29
      %p43 = scmp.eq.s32.totalorder %s21, 1
      %p44 = por %p42, %p43
      %p46 = scmp.ne.s32.totalorder %s29, %s45
      %p47 = scmp.eq.s32.totalorder %s21, 0
      %p48 = por %p46, %p47
      %s50 = sadd.s32 %s49, 1
      %p53 = scmp.eq.s32.totalorder %s15, 1
      %p54 = scmp.ne.s32.totalorder %s49, %s51
      %p55 = scmp.eq.s32.totalorder %s15, 0
      %p56 = por %p54, %p55
      %p57 = scmp.ne.s32.totalorder %s49, %s51
      %p58 = scmp.eq.s32.totalorder %s20, 1
      %p59 = por %p57, %p58
      %p60 = scmp.ne.s32.totalorder %s51, %s52
      %p61 = scmp.eq.s32.totalorder %s20, 0
      %p62 = por %p60, %p61
      %p63 = scmp.ne.s32.totalorder %s51, %s52
      %p64 = scmp.eq.s32.totalorder %s21, 1
      %p65 = por %p63, %p64
      %p67 = scmp.ne.s32.totalorder %s52, %s66
      %p68 = scmp.eq.s32.totalorder %s21, 0
      %p69 = por %p67, %p68
      %s70 = ssub.s32 %s15, %s22
      %p71 = scmp.eq.s32.totalorder %s70, 0
      %s73 = sadd.s32 %s72, 1
      %s74 = scalar_select %p71, %s72, %s73
      %p77 = pneg %p71
      %p78 = scmp.eq.s32.totalorder %s15, 1
      %p79 = por %p77, %p78
      %p80 = scmp.ne.s32.totalorder %s72, %s75
      %p81 = scmp.eq.s32.totalorder %s15, 0
      %p82 = por %p80, %p81
      %p83 = scmp.ne.s32.totalorder %s72, %s75
      %p84 = scmp.eq.s32.totalorder %s20, 1
      %p85 = por %p83, %p84
      %p86 = scmp.ne.s32.totalorder %s75, %s76
      %p87 = scmp.eq.s32.totalorder %s20, 0
      %p88 = por %p86, %p87
      %p89 = scmp.ne.s32.totalorder %s75, %s76
      %p90 = scmp.eq.s32.totalorder %s21, 1
      %p91 = por %p89, %p90
      %p93 = scmp.ne.s32.totalorder %s76, %s92
      %p94 = scmp.eq.s32.totalorder %s21, 0
      %p95 = por %p93, %p94
      %p96 = scmp.le.s32.totalorder 1, %s15
      %p97 = scmp.lt.s32.totalorder %s15, 3
      %p98 = pnand %p96, %p97
      %p99 = pneg %p98
      // Predicated region
      $region9: #{tpu_custom_call.1} parent=5 // pred_check
        _
      $region10: #{tpu_custom_call.1} parent=5 // pred_check_branch
        %101 = sbr.rel (%p98) target = $region12
      $region11: #{tpu_custom_call.1} parent=5 // pred_region
        %s102 = ssub.s32 %s15, 1
        // Predicated region
        $region13: #{tpu_custom_call.1} parent=11 // pred_check
          %p103 = pneg %p62
        $region14: #{tpu_custom_call.1} parent=11 // pred_check_branch
          %105 = sbr.rel (%p103) target = $region16
        $region15: #{tpu_custom_call.1} parent=11 // pred_region
          %s107 = ssub.s32 128, 128
          %108 = vsyncadd [#allocation6], %s107
          %s110 = sshll.u32 [#allocation5], 4
          %s111 = int_to_ptr.vmem [resolvable:$true] %s110
          %113 = dma.hbm_to_vmem [thread:$0]  %s1, 128, %s111, [#allocation6]
        $region16: #{tpu_custom_call.1} parent=11 // pred_fallthru
          _
      $region12: #{tpu_custom_call.1} parent=5 // pred_fallthru
        _
      %p114 = scmp.lt.s32.totalorder %s15, 2
      // Predicated region
      $region17: #{tpu_custom_call.1} parent=5 // pred_check
        %p115 = pneg %p114
      $region18: #{tpu_custom_call.1} parent=5 // pred_check_branch
        %117 = sbr.rel (%p115) target = $region20
      $region19: #{tpu_custom_call.1} parent=5 // pred_region
        // Predicated region
        $region21: #{tpu_custom_call.1} parent=19 // pred_check
          %p118 = pneg %p35
        $region22: #{tpu_custom_call.1} parent=19 // pred_check_branch
          %120 = sbr.rel (%p118) target = $region24
        $region23: #{tpu_custom_call.1} parent=19 // pred_region
          %s121 = sand.u32 %s25, 1
          %s122 = scalar_lea.sflag [#allocation3], %s121
          %s123 = sand.u32 %s25, 1
          %s124 = smul.addr %s123, 8
          %s125 = scalar_lea.vmem [#allocation2], %s124
          %s127 = ssub.s32 128, 128
          %128 = vsyncadd %s122, %s127
          %s129 = smul.addr %s15, 128
          %s130 = scalar_lea.hbm %s0, %s129
          %s132 = sshll.u32 %s125, 4
          %s133 = int_to_ptr.vmem [resolvable:$true] %s132
          %135 = dma.hbm_to_vmem [thread:$0]  %s130, 128, %s133, %s122
        $region24: #{tpu_custom_call.1} parent=19 // pred_fallthru
          _
      $region20: #{tpu_custom_call.1} parent=5 // pred_fallthru
        _
      %p136 = scmp.le.s32.totalorder 1, %s15
      %p137 = scmp.lt.s32.totalorder %s15, 3
      %p138 = pnand %p136, %p137
      %p139 = pneg %p138
      // Predicated region
      $region25: #{tpu_custom_call.1} parent=5 // pred_check
        _
      $region26: #{tpu_custom_call.1} parent=5 // pred_check_branch
        %141 = sbr.rel (%p138) target = $region28
      $region27: #{tpu_custom_call.1} parent=5 // pred_region
        %s142 = ssub.s32 %s15, 1
        %s143 = sand.u32 %s28, 1
        %s144 = scalar_lea.sflag [#allocation3], %s143
        %s145 = sand.u32 %s28, 1
        %s146 = smul.addr %s145, 8
        %s147 = scalar_lea.vmem [#allocation2], %s146
        // Predicated region
        $region29: #{tpu_custom_call.1} parent=27 // pred_check
          %p148 = pneg %p41
        $region30: #{tpu_custom_call.1} parent=27 // pred_check_branch
          %150 = sbr.rel (%p148) target = $region32
        $region31: #{tpu_custom_call.1} parent=27 // pred_region
          %151 = dma.done %s144, 128
        $region32: #{tpu_custom_call.1} parent=27 // pred_fallthru
          _
        // Predicated region
        $region33: #{tpu_custom_call.1} parent=27 // pred_check
          %p152 = pneg %p62
        $region34: #{tpu_custom_call.1} parent=27 // pred_check_branch
          %154 = sbr.rel (%p152) target = $region36
        $region35: #{tpu_custom_call.1} parent=27 // pred_region
          %155 = dma.done [#allocation6], 128
        $region36: #{tpu_custom_call.1} parent=27 // pred_fallthru
          _
        %s156 = sand.u32 %s28, 1
        %s157 = scalar_lea.sflag [#allocation3], %s156
        %s158 = sand.u32 %s28, 1
        %s159 = smul.addr %s158, 8
        %s160 = scalar_lea.vmem [#allocation2], %s159
        %p161 = pneg %p41
        %p162 = pneg %p38
        %p163 = pneg %p62
        %p164 = pneg %p59
        %p165 = pneg %p88
        %p166 = pneg %p85
        %s167 = sand.u32 %s75, 1
        %s168 = scalar_lea.sflag [#allocation4], %s167
        %s169 = sand.u32 %s75, 1
        %s170 = smul.addr %s169, 8
        %s171 = scalar_lea.vmem [#allocation7], %s170
        %v172 = vld [vmem:[%s147] sm:$0xff]
        %v173 = vld [vmem:[#allocation5] sm:$0xff]
        %v174 = vadd.f32 %v172, %v173
        %175 = vst [vmem:[%s171] sm:$0xff] %v174
        %s176 = sand.u32 %s75, 1
        %s177 = scalar_lea.sflag [#allocation4], %s176
        %s178 = sand.u32 %s75, 1
        %s179 = smul.addr %s178, 8
        %s180 = scalar_lea.vmem [#allocation7], %s179
        // Predicated region
        $region37: #{tpu_custom_call.1} parent=27 // pred_check
          %p181 = pneg %p85
        $region38: #{tpu_custom_call.1} parent=27 // pred_check_branch
          %183 = sbr.rel (%p181) target = $region40
        $region39: #{tpu_custom_call.1} parent=27 // pred_region
          %s185 = ssub.s32 128, 128
          %186 = vsyncadd %s177, %s185
          %s187 = smul.addr %s20, 128
          %s188 = scalar_lea.hbm %s2, %s187
          %s190 = sshll.u32 %s180, 4
          %s191 = int_to_ptr.vmem [resolvable:$true] %s190
          %193 = dma.vmem_to_hbm [thread:$0]  %s191, 128, %s188, %s177
        $region40: #{tpu_custom_call.1} parent=27 // pred_fallthru
          _
      $region28: #{tpu_custom_call.1} parent=5 // pred_fallthru
        _
      %p194 = scmp.le.s32.totalorder 2, %s15
      // Predicated region
      $region41: #{tpu_custom_call.1} parent=5 // pred_check
        %p195 = pneg %p194
      $region42: #{tpu_custom_call.1} parent=5 // pred_check_branch
        %197 = sbr.rel (%p195) target = $region44
      $region43: #{tpu_custom_call.1} parent=5 // pred_region
        %s198 = ssub.s32 %s15, 2
        // Predicated region
        $region45: #{tpu_custom_call.1} parent=43 // pred_check
          %p199 = pneg %p91
        $region46: #{tpu_custom_call.1} parent=43 // pred_check_branch
          %201 = sbr.rel (%p199) target = $region48
        $region47: #{tpu_custom_call.1} parent=43 // pred_region
          %s202 = sand.u32 %s76, 1
          %s203 = scalar_lea.sflag [#allocation4], %s202
          %s204 = sand.u32 %s76, 1
          %s205 = smul.addr %s204, 8
          %s206 = scalar_lea.vmem [#allocation7], %s205
          %207 = dma.done %s203, 128
        $region48: #{tpu_custom_call.1} parent=43 // pred_fallthru
          _
      $region44: #{tpu_custom_call.1} parent=5 // pred_fallthru
        _
    $region6: #{tpu_custom_call.1} parent=1 // loop_footer
      %s19 = sadd.s32 1, %s15
    $region7: #{tpu_custom_call.1} parent=1 // loop_footer_branch
      %14 = sbr.rel target = $region3
    $region8: #{tpu_custom_call.1} parent=1 // loop_exit
      _
    %208 = vsyncpa [#allocation3], 1
    %s209 = scalar_lea.sflag [#allocation3], 1
    %210 = vsyncpa %s209, 1
    %211 = vsyncpa [#allocation6], 1
    %212 = vsyncpa [#allocation4], 1
    %s213 = scalar_lea.sflag [#allocation4], 1
    %214 = vsyncpa %s213, 1

// kernel: tpu_custom_call.1
$region0: #{tpu_custom_call.1}
  #allocation0 [shape = 'u32[]', space=smem, size = 0x4, offset = 0x4, fixed_abs, tag = 'smem constant byte address 0x4 - core index']
  #allocation1 [shape = 'u32[144,128]{1,0:T(1,128)}', space=vmem, size = 0x12000, scoped, tag = 'internal scratch']
  #allocation2 [shape = 'bf16[2,10,10,8]{3,2,1,0:T(8,128)(2,1)}', space=vmem, size = 0x14000, scoped, tag = 'scratch operand']
  #allocation3 [shape = 'bf16[2,10,10,64]{3,2,1,0:T(8,128)(2,1)}', space=vmem, size = 0x14000, scoped, tag = 'scratch operand']
  %s0 = inlined_call_operand.hbm [shape: bf16[2,8,8,8], index: 0, kind: input, shape index: {}]
  %s1 = inlined_call_operand.hbm [shape: bf16[72,64], index: 1, kind: input, shape index: {}]
  %s2 = inlined_call_operand.hbm [shape: f32[1,64], index: 2, kind: input, shape index: {}]
  %s3 = inlined_call_operand.hbm [shape: bf16[576,64], index: 3, kind: input, shape index: {}]
  %s4 = inlined_call_operand.hbm [shape: f32[1,64], index: 4, kind: input, shape index: {}]
  %s5 = inlined_call_operand.hbm [shape: bf16[8,64], index: 5, kind: input, shape index: {}]
  %s6 = inlined_call_operand.hbm [shape: f32[1,64], index: 6, kind: input, shape index: {}]
  %s7 = inlined_call_operand.hbm [shape: bf16[2,8,8,64], index: 7, kind: output, shape index: {}]
  %s8 = sld [smem:[#allocation0]]
  $region66: #{tpu_custom_call.1} parent=0
    _
  %s10 = ssub.s32 1, %s8
  %s11 = scalar_select 0, %s10, %s8
  $region1: #{tpu_custom_call.1} parent=0
    #allocation4 [shape = 'u8[32768]{0}', space=vmem, size = 0x8000, scoped, tag = 'input window, operand 0, single buffered']
    #allocation5 [shape = 's32[1]{0}', space=sflag, size = 0x4, scoped, tag = 'scoped memory for tpu_custom_call.1']
    #allocation6 [shape = 's32[1]{0}', space=sflag, size = 0x4, scoped, tag = 'scoped memory for tpu_custom_call.1']
    #allocation7 [shape = 'u8[18432]{0}', space=vmem, size = 0x4800, scoped, tag = 'input window, operand 1, single buffered']
    #allocation8 [shape = 's32[1]{0}', space=sflag, size = 0x4, scoped, tag = 'scoped memory for tpu_custom_call.1']
    #allocation9 [shape = 'u8[512]{0}', space=vmem, size = 0x400, scoped, tag = 'input window, operand 2, single buffered']
    #allocation10 [shape = 'u8[147456]{0}', space=vmem, size = 0x24000, scoped, tag = 'input window, operand 3, single buffered']
    #allocation11 [shape = 's32[1]{0}', space=sflag, size = 0x4, scoped, tag = 'scoped memory for tpu_custom_call.1']
    #allocation12 [shape = 'u8[512]{0}', space=vmem, size = 0x400, scoped, tag = 'input window, operand 4, single buffered']
    #allocation13 [shape = 'u8[2048]{0}', space=vmem, size = 0x800, scoped, tag = 'input window, operand 5, single buffered']
    #allocation14 [shape = 's32[1]{0}', space=sflag, size = 0x4, scoped, tag = 'scoped memory for tpu_custom_call.1']
    #allocation15 [shape = 'u8[512]{0}', space=vmem, size = 0x400, scoped, tag = 'input window, operand 6, single buffered']
    #allocation16 [shape = 'u8[32768]{0}', space=vmem, size = 0x8000, scoped, tag = 'output window, operand 0, single buffered']
    %12 = vsyncpa [#allocation5], 0
    %13 = vsyncpa [#allocation8], 0
    %14 = vsyncpa [#allocation11], 0
    %15 = vsyncpa [#allocation14], 0
    %16 = vsyncpa [#allocation6], 0
    // Predicated region
    $region2: #{tpu_custom_call.1} parent=1 // pred_check
      _
    $region3: #{tpu_custom_call.1} parent=1 // pred_check_branch
      %18 = sbr.rel (0) target = $region5
    $region4: #{tpu_custom_call.1} parent=1 // pred_region
      %s20 = ssub.s32 1024, 1024
      %21 = vsyncadd [#allocation5], %s20
      %s22 = sshll.u32 [#allocation4], 4
      %s23 = int_to_ptr.vmem [resolvable:$true] %s22
      %28 = dma.hbm_to_vmem [thread:$0]  %s0, 1024, %s23, [#allocation5], 64, 64, 4
    $region5: #{tpu_custom_call.1} parent=1 // pred_fallthru
      _
    // Predicated region
    $region6: #{tpu_custom_call.1} parent=1 // pred_check
      _
    $region7: #{tpu_custom_call.1} parent=1 // pred_check_branch
      %30 = sbr.rel (0) target = $region9
    $region8: #{tpu_custom_call.1} parent=1 // pred_region
      %s32 = ssub.s32 576, 576
      %33 = vsyncadd [#allocation8], %s32
      %s34 = sshll.u32 [#allocation7], 4
      %s35 = int_to_ptr.vmem [resolvable:$true] %s34
      %40 = dma.hbm_to_vmem [thread:$0]  %s1, 576, %s35, [#allocation8], 64, 64, 4
    $region9: #{tpu_custom_call.1} parent=1 // pred_fallthru
      _
    // Predicated region
    $region10: #{tpu_custom_call.1} parent=1 // pred_check
      _
    $region11: #{tpu_custom_call.1} parent=1 // pred_check_branch
      %42 = sbr.rel (0) target = $region13
    $region12: #{tpu_custom_call.1} parent=1 // pred_region
      %s44 = ssub.s32 16, 16
      %45 = vsyncadd [#allocation8], %s44
      %s47 = sshll.u32 [#allocation9], 4
      %s48 = int_to_ptr.vmem [resolvable:$true] %s47
      %50 = dma.hbm_to_vmem [thread:$0]  %s2, 16, %s48, [#allocation8]
    $region13: #{tpu_custom_call.1} parent=1 // pred_fallthru
      _
    // Predicated region
    $region14: #{tpu_custom_call.1} parent=1 // pred_check
      _
    $region15: #{tpu_custom_call.1} parent=1 // pred_check_branch
      %52 = sbr.rel (0) target = $region17
    $region16: #{tpu_custom_call.1} parent=1 // pred_region
      %s54 = ssub.s32 4608, 4608
      %55 = vsyncadd [#allocation11], %s54
      %s56 = sshll.u32 [#allocation10], 4
      %s57 = int_to_ptr.vmem [resolvable:$true] %s56
      %62 = dma.hbm_to_vmem [thread:$0]  %s3, 4608, %s57, [#allocation11], 64, 64, 4
    $region17: #{tpu_custom_call.1} parent=1 // pred_fallthru
      _
    // Predicated region
    $region18: #{tpu_custom_call.1} parent=1 // pred_check
      _
    $region19: #{tpu_custom_call.1} parent=1 // pred_check_branch
      %64 = sbr.rel (0) target = $region21
    $region20: #{tpu_custom_call.1} parent=1 // pred_region
      %s66 = ssub.s32 16, 16
      %67 = vsyncadd [#allocation11], %s66
      %s69 = sshll.u32 [#allocation12], 4
      %s70 = int_to_ptr.vmem [resolvable:$true] %s69
      %72 = dma.hbm_to_vmem [thread:$0]  %s4, 16, %s70, [#allocation11]
    $region21: #{tpu_custom_call.1} parent=1 // pred_fallthru
      _
    // Predicated region
    $region22: #{tpu_custom_call.1} parent=1 // pred_check
      _
    $region23: #{tpu_custom_call.1} parent=1 // pred_check_branch
      %74 = sbr.rel (0) target = $region25
    $region24: #{tpu_custom_call.1} parent=1 // pred_region
      %s76 = ssub.s32 64, 64
      %77 = vsyncadd [#allocation14], %s76
      %s79 = sshll.u32 [#allocation13], 4
      %s80 = int_to_ptr.vmem [resolvable:$true] %s79
      %82 = dma.hbm_to_vmem [thread:$0]  %s5, 64, %s80, [#allocation14]
    $region25: #{tpu_custom_call.1} parent=1 // pred_fallthru
      _
    // Predicated region
    $region26: #{tpu_custom_call.1} parent=1 // pred_check
      _
    $region27: #{tpu_custom_call.1} parent=1 // pred_check_branch
      %84 = sbr.rel (0) target = $region29
    $region28: #{tpu_custom_call.1} parent=1 // pred_region
      %s86 = ssub.s32 16, 16
      %87 = vsyncadd [#allocation14], %s86
      %s89 = sshll.u32 [#allocation15], 4
      %s90 = int_to_ptr.vmem [resolvable:$true] %s89
      %92 = dma.hbm_to_vmem [thread:$0]  %s6, 16, %s90, [#allocation14]
    $region29: #{tpu_custom_call.1} parent=1 // pred_fallthru
      _
    // Predicated region
    $region30: #{tpu_custom_call.1} parent=1 // pred_check
      _
    $region31: #{tpu_custom_call.1} parent=1 // pred_check_branch
      %94 = sbr.rel (0) target = $region33
    $region32: #{tpu_custom_call.1} parent=1 // pred_region
      %95 = dma.done [#allocation5], 1024
    $region33: #{tpu_custom_call.1} parent=1 // pred_fallthru
      _
    // Predicated region
    $region34: #{tpu_custom_call.1} parent=1 // pred_check
      _
    $region35: #{tpu_custom_call.1} parent=1 // pred_check_branch
      %97 = sbr.rel (0) target = $region37
    $region36: #{tpu_custom_call.1} parent=1 // pred_region
      %98 = dma.done [#allocation8], 576
    $region37: #{tpu_custom_call.1} parent=1 // pred_fallthru
      _
    // Predicated region
    $region38: #{tpu_custom_call.1} parent=1 // pred_check
      _
    $region39: #{tpu_custom_call.1} parent=1 // pred_check_branch
      %100 = sbr.rel (0) target = $region41
    $region40: #{tpu_custom_call.1} parent=1 // pred_region
      %101 = dma.done [#allocation8], 16
    $region41: #{tpu_custom_call.1} parent=1 // pred_fallthru
      _
    // Predicated region
    $region42: #{tpu_custom_call.1} parent=1 // pred_check
      _
    $region43: #{tpu_custom_call.1} parent=1 // pred_check_branch
      %103 = sbr.rel (0) target = $region45
    $region44: #{tpu_custom_call.1} parent=1 // pred_region
      %104 = dma.done [#allocation11], 4608
    $region45: #{tpu_custom_call.1} parent=1 // pred_fallthru
      _
    // Predicated region
    $region46: #{tpu_custom_call.1} parent=1 // pred_check
      _
    $region47: #{tpu_custom_call.1} parent=1 // pred_check_branch
      %106 = sbr.rel (0) target = $region49
    $region48: #{tpu_custom_call.1} parent=1 // pred_region
      %107 = dma.done [#allocation11], 16
    $region49: #{tpu_custom_call.1} parent=1 // pred_fallthru
      _
    // Predicated region
    $region50: #{tpu_custom_call.1} parent=1 // pred_check
      _
    $region51: #{tpu_custom_call.1} parent=1 // pred_check_branch
      %109 = sbr.rel (0) target = $region53
    $region52: #{tpu_custom_call.1} parent=1 // pred_region
      %110 = dma.done [#allocation14], 64
    $region53: #{tpu_custom_call.1} parent=1 // pred_fallthru
      _
    // Predicated region
    $region54: #{tpu_custom_call.1} parent=1 // pred_check
      _
    $region55: #{tpu_custom_call.1} parent=1 // pred_check_branch
      %112 = sbr.rel (0) target = $region57
    $region56: #{tpu_custom_call.1} parent=1 // pred_region
      %113 = dma.done [#allocation14], 16
    $region57: #{tpu_custom_call.1} parent=1 // pred_fallthru
      _
    %v115 = vld [vmem:[#allocation4] sm:$0xf]
    %v116 = vld [vmem:[#allocation4 + $0x4] sm:$0xf]
    %v117 = vld [vmem:[#allocation4 + $0x8] sm:$0xf]
    %v118 = vld [vmem:[#allocation4 + $0xc] sm:$0xf]
    %v119 = vld [vmem:[#allocation4 + $0x10] sm:$0xf]
    %v120 = vld [vmem:[#allocation4 + $0x14] sm:$0xf]
    %v121 = vld [vmem:[#allocation4 + $0x18] sm:$0xf]
    %v122 = vld [vmem:[#allocation4 + $0x1c] sm:$0xf]
    %v123 = vld [vmem:[#allocation4 + $0x20] sm:$0xf]
    %v124 = vld [vmem:[#allocation4 + $0x24] sm:$0xf]
    %v125 = vld [vmem:[#allocation4 + $0x28] sm:$0xf]
    %v126 = vld [vmem:[#allocation4 + $0x2c] sm:$0xf]
    %v127 = vld [vmem:[#allocation4 + $0x30] sm:$0xf]
    %v128 = vld [vmem:[#allocation4 + $0x34] sm:$0xf]
    %v129 = vld [vmem:[#allocation4 + $0x38] sm:$0xf]
    %v130 = vld [vmem:[#allocation4 + $0x3c] sm:$0xf]
    %vm131 = vcmask 60416
    %132 = vst.msk [vmem:[#allocation2] sm:$0xf] %vm131, 0
    %vm133 = vcmask 57344
    %134 = vst.msk [vmem:[#allocation2 + $0x4] sm:$0x1] %vm133, 0
    %135 = vst.msk [vmem:[#allocation2 + $0x50] sm:$0xf] %vm131, 0
    %136 = vst.msk [vmem:[#allocation2 + $0x54] sm:$0x1] %vm133, 0
    %s137 = scalar_lea.vmem [#allocation2], 72
    %138 = vst.msk [vmem:[%s137] sm:$0xf] %vm131, 0
    %139 = vst.msk [vmem:[%s137 + $0x4] sm:$0x1] %vm133, 0
    %140 = vst.msk [vmem:[%s137 + $0x50] sm:$0xf] %vm131, 0
    %141 = vst.msk [vmem:[%s137 + $0x54] sm:$0x1] %vm133, 0
    %vm142 = vcmask 57344
    %vm143 = vsmask.f32 256
    %vm144 = vmand %vm142, %vm143
    %v145 = vld [vmem:[#allocation2] sm:$0x1]
    %v146 = vsel %vm144, 0, %v145
    %147 = vst [vmem:[#allocation2] sm:$0x1] %v146
    %v148 = vld [vmem:[#allocation2 + $0x8] sm:$0x1]
    %v149 = vsel %vm144, 0, %v148
    %150 = vst [vmem:[#allocation2 + $0x8] sm:$0x1] %v149
    %v151 = vld [vmem:[#allocation2 + $0x10] sm:$0x1]
    %v152 = vsel %vm144, 0, %v151
    %153 = vst [vmem:[#allocation2 + $0x10] sm:$0x1] %v152
    %v154 = vld [vmem:[#allocation2 + $0x18] sm:$0x1]
    %v155 = vsel %vm144, 0, %v154
    %156 = vst [vmem:[#allocation2 + $0x18] sm:$0x1] %v155
    %v157 = vld [vmem:[#allocation2 + $0x20] sm:$0x1]
    %v158 = vsel %vm144, 0, %v157
    %159 = vst [vmem:[#allocation2 + $0x20] sm:$0x1] %v158
    %v160 = vld [vmem:[#allocation2 + $0x28] sm:$0x1]
    %v161 = vsel %vm144, 0, %v160
    %162 = vst [vmem:[#allocation2 + $0x28] sm:$0x1] %v161
    %v163 = vld [vmem:[#allocation2 + $0x30] sm:$0x1]
    %v164 = vsel %vm144, 0, %v163
    %165 = vst [vmem:[#allocation2 + $0x30] sm:$0x1] %v164
    %v166 = vld [vmem:[#allocation2 + $0x38] sm:$0x1]
    %v167 = vsel %vm144, 0, %v166
    %168 = vst [vmem:[#allocation2 + $0x38] sm:$0x1] %v167
    %v169 = vld [vmem:[#allocation2 + $0x40] sm:$0x1]
    %v170 = vsel %vm144, 0, %v169
    %171 = vst [vmem:[#allocation2 + $0x40] sm:$0x1] %v170
    %v172 = vld [vmem:[#allocation2 + $0x48] sm:$0x1]
    %v173 = vsel %vm144, 0, %v172
    %174 = vst [vmem:[#allocation2 + $0x48] sm:$0x1] %v173
    %v175 = vld [vmem:[#allocation2 + $0x50] sm:$0x1]
    %v176 = vsel %vm144, 0, %v175
    %177 = vst [vmem:[#allocation2 + $0x50] sm:$0x1] %v176
    %v178 = vld [vmem:[#allocation2 + $0x58] sm:$0x1]
    %v179 = vsel %vm144, 0, %v178
    %180 = vst [vmem:[#allocation2 + $0x58] sm:$0x1] %v179
    %v181 = vld [vmem:[#allocation2 + $0x60] sm:$0x1]
    %v182 = vsel %vm144, 0, %v181
    %183 = vst [vmem:[#allocation2 + $0x60] sm:$0x1] %v182
    %v184 = vld [vmem:[#allocation2 + $0x68] sm:$0x1]
    %v185 = vsel %vm144, 0, %v184
    %186 = vst [vmem:[#allocation2 + $0x68] sm:$0x1] %v185
    %v187 = vld [vmem:[#allocation2 + $0x70] sm:$0x1]
    %v188 = vsel %vm144, 0, %v187
    %189 = vst [vmem:[#allocation2 + $0x70] sm:$0x1] %v188
    %v190 = vld [vmem:[#allocation2 + $0x78] sm:$0x1]
    %v191 = vsel %vm144, 0, %v190
    %192 = vst [vmem:[#allocation2 + $0x78] sm:$0x1] %v191
    %v193 = vld [vmem:[#allocation2 + $0x80] sm:$0x1]
    %v194 = vsel %vm144, 0, %v193
    %195 = vst [vmem:[#allocation2 + $0x80] sm:$0x1] %v194
    %v196 = vld [vmem:[#allocation2 + $0x88] sm:$0x1]
    %v197 = vsel %vm144, 0, %v196
    %198 = vst [vmem:[#allocation2 + $0x88] sm:$0x1] %v197
    %v199 = vld [vmem:[#allocation2 + $0x90] sm:$0x1]
    %v200 = vsel %vm144, 0, %v199
    %201 = vst [vmem:[#allocation2 + $0x90] sm:$0x1] %v200
    %v202 = vld [vmem:[#allocation2 + $0x98] sm:$0x1]
    %v203 = vsel %vm144, 0, %v202
    %204 = vst [vmem:[#allocation2 + $0x98] sm:$0x1] %v203
    %vm205 = vsmask.f32 7938
    %vm206 = vmand %vm142, %vm205
    %v207 = vld [vmem:[#allocation2 + $0x4] sm:$0x1]
    %v208 = vsel %vm206, 0, %v207
    %209 = vst [vmem:[#allocation2 + $0x4] sm:$0x1] %v208
    %v210 = vld [vmem:[#allocation2 + $0xc] sm:$0x1]
    %v211 = vsel %vm206, 0, %v210
    %212 = vst [vmem:[#allocation2 + $0xc] sm:$0x1] %v211
    %v213 = vld [vmem:[#allocation2 + $0x14] sm:$0x1]
    %v214 = vsel %vm206, 0, %v213
    %215 = vst [vmem:[#allocation2 + $0x14] sm:$0x1] %v214
    %v216 = vld [vmem:[#allocation2 + $0x1c] sm:$0x1]
    %v217 = vsel %vm206, 0, %v216
    %218 = vst [vmem:[#allocation2 + $0x1c] sm:$0x1] %v217
    %v219 = vld [vmem:[#allocation2 + $0x24] sm:$0x1]
    %v220 = vsel %vm206, 0, %v219
    %221 = vst [vmem:[#allocation2 + $0x24] sm:$0x1] %v220
    %v222 = vld [vmem:[#allocation2 + $0x2c] sm:$0x1]
    %v223 = vsel %vm206, 0, %v222
    %224 = vst [vmem:[#allocation2 + $0x2c] sm:$0x1] %v223
    %v225 = vld [vmem:[#allocation2 + $0x34] sm:$0x1]
    %v226 = vsel %vm206, 0, %v225
    %227 = vst [vmem:[#allocation2 + $0x34] sm:$0x1] %v226
    %v228 = vld [vmem:[#allocation2 + $0x3c] sm:$0x1]
    %v229 = vsel %vm206, 0, %v228
    %230 = vst [vmem:[#allocation2 + $0x3c] sm:$0x1] %v229
    %v231 = vld [vmem:[#allocation2 + $0x44] sm:$0x1]
    %v232 = vsel %vm206, 0, %v231
    %233 = vst [vmem:[#allocation2 + $0x44] sm:$0x1] %v232
    %v234 = vld [vmem:[#allocation2 + $0x4c] sm:$0x1]
    %v235 = vsel %vm206, 0, %v234
    %236 = vst [vmem:[#allocation2 + $0x4c] sm:$0x1] %v235
    %v237 = vld [vmem:[#allocation2 + $0x54] sm:$0x1]
    %v238 = vsel %vm206, 0, %v237
    %239 = vst [vmem:[#allocation2 + $0x54] sm:$0x1] %v238
    %v240 = vld [vmem:[#allocation2 + $0x5c] sm:$0x1]
    %v241 = vsel %vm206, 0, %v240
    %242 = vst [vmem:[#allocation2 + $0x5c] sm:$0x1] %v241
    %v243 = vld [vmem:[#allocation2 + $0x64] sm:$0x1]
    %v244 = vsel %vm206, 0, %v243
    %245 = vst [vmem:[#allocation2 + $0x64] sm:$0x1] %v244
    %v246 = vld [vmem:[#allocation2 + $0x6c] sm:$0x1]
    %v247 = vsel %vm206, 0, %v246
    %248 = vst [vmem:[#allocation2 + $0x6c] sm:$0x1] %v247
    %v249 = vld [vmem:[#allocation2 + $0x74] sm:$0x1]
    %v250 = vsel %vm206, 0, %v249
    %251 = vst [vmem:[#allocation2 + $0x74] sm:$0x1] %v250
    %v252 = vld [vmem:[#allocation2 + $0x7c] sm:$0x1]
    %v253 = vsel %vm206, 0, %v252
    %254 = vst [vmem:[#allocation2 + $0x7c] sm:$0x1] %v253
    %v255 = vld [vmem:[#allocation2 + $0x84] sm:$0x1]
    %v256 = vsel %vm206, 0, %v255
    %257 = vst [vmem:[#allocation2 + $0x84] sm:$0x1] %v256
    %v258 = vld [vmem:[#allocation2 + $0x8c] sm:$0x1]
    %v259 = vsel %vm206, 0, %v258
    %260 = vst [vmem:[#allocation2 + $0x8c] sm:$0x1] %v259
    %v261 = vld [vmem:[#allocation2 + $0x94] sm:$0x1]
    %v262 = vsel %vm206, 0, %v261
    %263 = vst [vmem:[#allocation2 + $0x94] sm:$0x1] %v262
    %v264 = vld [vmem:[#allocation2 + $0x9c] sm:$0x1]
    %v265 = vsel %vm206, 0, %v264
    %266 = vst [vmem:[#allocation2 + $0x9c] sm:$0x1] %v265
    %v268 = vshrl.u32 %v115, 16
    %v270 = vrot.slane %v268, 7
    %v271 = vshll.u32 %v115, 16
    %v273 = vor.u32 %v270, %v271
    %v274 = vrot.slane %v270, 4
    %v276 = vshrl.u32 %v116, 16
    %v278 = vrot.slane %v276, 7
    %v279 = vshll.u32 %v116, 16
    %v281 = vor.u32 %v278, %v279
    %v282 = vrot.slane %v278, 4
    %v284 = vshrl.u32 %v117, 16
    %v286 = vrot.slane %v284, 7
    %v287 = vshll.u32 %v117, 16
    %v289 = vor.u32 %v286, %v287
    %v290 = vrot.slane %v286, 4
    %v292 = vshrl.u32 %v118, 16
    %v294 = vrot.slane %v292, 7
    %v295 = vshll.u32 %v118, 16
    %v297 = vor.u32 %v294, %v295
    %v298 = vrot.slane %v294, 4
    %v300 = vshrl.u32 %v119, 16
    %v302 = vrot.slane %v300, 7
    %v303 = vshll.u32 %v119, 16
    %v305 = vor.u32 %v302, %v303
    %v306 = vrot.slane %v302, 4
    %v308 = vshrl.u32 %v120, 16
    %v310 = vrot.slane %v308, 7
    %v311 = vshll.u32 %v120, 16
    %v313 = vor.u32 %v310, %v311
    %v314 = vrot.slane %v310, 4
    %v316 = vshrl.u32 %v121, 16
    %v318 = vrot.slane %v316, 7
    %v319 = vshll.u32 %v121, 16
    %v321 = vor.u32 %v318, %v319
    %v322 = vrot.slane %v318, 4
    %v324 = vshrl.u32 %v122, 16
    %v326 = vrot.slane %v324, 7
    %v327 = vshll.u32 %v122, 16
    %v329 = vor.u32 %v326, %v327
    %v330 = vrot.slane %v326, 4
    %v332 = vshrl.u32 %v123, 16
    %v334 = vrot.slane %v332, 7
    %v335 = vshll.u32 %v123, 16
    %v337 = vor.u32 %v334, %v335
    %v338 = vrot.slane %v334, 4
    %v340 = vshrl.u32 %v124, 16
    %v342 = vrot.slane %v340, 7
    %v343 = vshll.u32 %v124, 16
    %v345 = vor.u32 %v342, %v343
    %v346 = vrot.slane %v342, 4
    %v348 = vshrl.u32 %v125, 16
    %v350 = vrot.slane %v348, 7
    %v351 = vshll.u32 %v125, 16
    %v353 = vor.u32 %v350, %v351
    %v354 = vrot.slane %v350, 4
    %v356 = vshrl.u32 %v126, 16
    %v358 = vrot.slane %v356, 7
    %v359 = vshll.u32 %v126, 16
    %v361 = vor.u32 %v358, %v359
    %v362 = vrot.slane %v358, 4
    %v364 = vshrl.u32 %v127, 16
    %v366 = vrot.slane %v364, 7
    %v367 = vshll.u32 %v127, 16
    %v369 = vor.u32 %v366, %v367
    %v370 = vrot.slane %v366, 4
    %v372 = vshrl.u32 %v128, 16
    %v374 = vrot.slane %v372, 7
    %v375 = vshll.u32 %v128, 16
    %v377 = vor.u32 %v374, %v375
    %v378 = vrot.slane %v374, 4
    %v380 = vshrl.u32 %v129, 16
    %v382 = vrot.slane %v380, 7
    %v383 = vshll.u32 %v129, 16
    %v385 = vor.u32 %v382, %v383
    %v386 = vrot.slane %v382, 4
    %v388 = vshrl.u32 %v130, 16
    %v390 = vrot.slane %v388, 7
    %v391 = vshll.u32 %v130, 16
    %v393 = vor.u32 %v390, %v391
    %v394 = vrot.slane %v390, 4
    %s427 = scalar_lea.vmem [#allocation2], 8
    %vm428 = vcmask 60416
    %vm429 = vmand %vm428, %vm205
    %v430 = vld [vmem:[%s427] sm:$0xf]
    %v431 = vsel %vm429, %v273, %v430
    %432 = vst [vmem:[%s427] sm:$0xf] %v431
    %v433 = vld [vmem:[%s427 + $0x4] sm:$0x1]
    %v434 = vsel %vm144, %v274, %v433
    %435 = vst [vmem:[%s427 + $0x4] sm:$0x1] %v434
    %v436 = vld [vmem:[%s427 + $0x8] sm:$0xf]
    %v437 = vsel %vm429, %v281, %v436
    %438 = vst [vmem:[%s427 + $0x8] sm:$0xf] %v437
    %v439 = vld [vmem:[%s427 + $0xc] sm:$0x1]
    %v440 = vsel %vm144, %v282, %v439
    %441 = vst [vmem:[%s427 + $0xc] sm:$0x1] %v440
    %v442 = vld [vmem:[%s427 + $0x10] sm:$0xf]
    %v443 = vsel %vm429, %v289, %v442
    %444 = vst [vmem:[%s427 + $0x10] sm:$0xf] %v443
    %v445 = vld [vmem:[%s427 + $0x14] sm:$0x1]
    %v446 = vsel %vm144, %v290, %v445
    %447 = vst [vmem:[%s427 + $0x14] sm:$0x1] %v446
    %v448 = vld [vmem:[%s427 + $0x18] sm:$0xf]
    %v449 = vsel %vm429, %v297, %v448
    %450 = vst [vmem:[%s427 + $0x18] sm:$0xf] %v449
    %v451 = vld [vmem:[%s427 + $0x1c] sm:$0x1]
    %v452 = vsel %vm144, %v298, %v451
    %453 = vst [vmem:[%s427 + $0x1c] sm:$0x1] %v452
    %v454 = vld [vmem:[%s427 + $0x20] sm:$0xf]
    %v455 = vsel %vm429, %v305, %v454
    %456 = vst [vmem:[%s427 + $0x20] sm:$0xf] %v455
    %v457 = vld [vmem:[%s427 + $0x24] sm:$0x1]
    %v458 = vsel %vm144, %v306, %v457
    %459 = vst [vmem:[%s427 + $0x24] sm:$0x1] %v458
    %v460 = vld [vmem:[%s427 + $0x28] sm:$0xf]
    %v461 = vsel %vm429, %v313, %v460
    %462 = vst [vmem:[%s427 + $0x28] sm:$0xf] %v461
    %v463 = vld [vmem:[%s427 + $0x2c] sm:$0x1]
    %v464 = vsel %vm144, %v314, %v463
    %465 = vst [vmem:[%s427 + $0x2c] sm:$0x1] %v464
    %v466 = vld [vmem:[%s427 + $0x30] sm:$0xf]
    %v467 = vsel %vm429, %v321, %v466
    %468 = vst [vmem:[%s427 + $0x30] sm:$0xf] %v467
    %v469 = vld [vmem:[%s427 + $0x34] sm:$0x1]
    %v470 = vsel %vm144, %v322, %v469
    %471 = vst [vmem:[%s427 + $0x34] sm:$0x1] %v470
    %v472 = vld [vmem:[%s427 + $0x38] sm:$0xf]
    %v473 = vsel %vm429, %v329, %v472
    %474 = vst [vmem:[%s427 + $0x38] sm:$0xf] %v473
    %v475 = vld [vmem:[%s427 + $0x3c] sm:$0x1]
    %v476 = vsel %vm144, %v330, %v475
    %477 = vst [vmem:[%s427 + $0x3c] sm:$0x1] %v476
    %v478 = vld [vmem:[%s427 + $0x50] sm:$0xf]
    %v479 = vsel %vm429, %v337, %v478
    %480 = vst [vmem:[%s427 + $0x50] sm:$0xf] %v479
    %v481 = vld [vmem:[%s427 + $0x54] sm:$0x1]
    %v482 = vsel %vm144, %v338, %v481
    %483 = vst [vmem:[%s427 + $0x54] sm:$0x1] %v482
    %v484 = vld [vmem:[%s427 + $0x58] sm:$0xf]
    %v485 = vsel %vm429, %v345, %v484
    %486 = vst [vmem:[%s427 + $0x58] sm:$0xf] %v485
    %v487 = vld [vmem:[%s427 + $0x5c] sm:$0x1]
    %v488 = vsel %vm144, %v346, %v487
    %489 = vst [vmem:[%s427 + $0x5c] sm:$0x1] %v488
    %v490 = vld [vmem:[%s427 + $0x60] sm:$0xf]
    %v491 = vsel %vm429, %v353, %v490
    %492 = vst [vmem:[%s427 + $0x60] sm:$0xf] %v491
    %v493 = vld [vmem:[%s427 + $0x64] sm:$0x1]
    %v494 = vsel %vm144, %v354, %v493
    %495 = vst [vmem:[%s427 + $0x64] sm:$0x1] %v494
    %v496 = vld [vmem:[%s427 + $0x68] sm:$0xf]
    %v497 = vsel %vm429, %v361, %v496
    %498 = vst [vmem:[%s427 + $0x68] sm:$0xf] %v497
    %v499 = vld [vmem:[%s427 + $0x6c] sm:$0x1]
    %v500 = vsel %vm144, %v362, %v499
    %501 = vst [vmem:[%s427 + $0x6c] sm:$0x1] %v500
    %v502 = vld [vmem:[%s427 + $0x70] sm:$0xf]
    %v503 = vsel %vm429, %v369, %v502
    %504 = vst [vmem:[%s427 + $0x70] sm:$0xf] %v503
    %v505 = vld [vmem:[%s427 + $0x74] sm:$0x1]
    %v506 = vsel %vm144, %v370, %v505
    %507 = vst [vmem:[%s427 + $0x74] sm:$0x1] %v506
    %v508 = vld [vmem:[%s427 + $0x78] sm:$0xf]
    %v509 = vsel %vm429, %v377, %v508
    %510 = vst [vmem:[%s427 + $0x78] sm:$0xf] %v509
    %v511 = vld [vmem:[%s427 + $0x7c] sm:$0x1]
    %v512 = vsel %vm144, %v378, %v511
    %513 = vst [vmem:[%s427 + $0x7c] sm:$0x1] %v512
    %v514 = vld [vmem:[%s427 + $0x80] sm:$0xf]
    %v515 = vsel %vm429, %v385, %v514
    %516 = vst [vmem:[%s427 + $0x80] sm:$0xf] %v515
    %v517 = vld [vmem:[%s427 + $0x84] sm:$0x1]
    %v518 = vsel %vm144, %v386, %v517
    %519 = vst [vmem:[%s427 + $0x84] sm:$0x1] %v518
    %v520 = vld [vmem:[%s427 + $0x88] sm:$0xf]
    %v521 = vsel %vm429, %v393, %v520
    %522 = vst [vmem:[%s427 + $0x88] sm:$0xf] %v521
    %v523 = vld [vmem:[%s427 + $0x8c] sm:$0x1]
    %v524 = vsel %vm144, %v394, %v523
    %525 = vst [vmem:[%s427 + $0x8c] sm:$0x1] %v524
    %v526 = vld [vmem:[#allocation2] sm:$0xf]
    %v527 = vld [vmem:[#allocation2 + $0x4] sm:$0x1]
    %v528 = vld [vmem:[#allocation2 + $0x8] sm:$0xf]
    %v529 = vld [vmem:[#allocation2 + $0xc] sm:$0x1]
    %v530 = vld [vmem:[#allocation2 + $0x10] sm:$0xf]
    %v531 = vld [vmem:[#allocation2 + $0x14] sm:$0x1]
    %v532 = vld [vmem:[#allocation2 + $0x18] sm:$0xf]
    %v533 = vld [vmem:[#allocation2 + $0x1c] sm:$0x1]
    %v534 = vld [vmem:[#allocation2 + $0x20] sm:$0xf]
    %v535 = vld [vmem:[#allocation2 + $0x24] sm:$0x1]
    %v536 = vld [vmem:[#allocation2 + $0x28] sm:$0xf]
    %v537 = vld [vmem:[#allocation2 + $0x2c] sm:$0x1]
    %v538 = vld [vmem:[#allocation2 + $0x30] sm:$0xf]
    %v539 = vld [vmem:[#allocation2 + $0x34] sm:$0x1]
    %v540 = vld [vmem:[#allocation2 + $0x38] sm:$0xf]
    %v541 = vld [vmem:[#allocation2 + $0x3c] sm:$0x1]
    %v542 = vld [vmem:[#allocation2 + $0x40] sm:$0xf]
    %v543 = vld [vmem:[#allocation2 + $0x44] sm:$0x1]
    %v544 = vld [vmem:[#allocation2 + $0x48] sm:$0xf]
    %v545 = vld [vmem:[#allocation2 + $0x4c] sm:$0x1]
    %v546 = vld [vmem:[#allocation2 + $0x50] sm:$0xf]
    %v547 = vld [vmem:[#allocation2 + $0x54] sm:$0x1]
    %v548 = vld [vmem:[#allocation2 + $0x58] sm:$0xf]
    %v549 = vld [vmem:[#allocation2 + $0x5c] sm:$0x1]
    %v550 = vld [vmem:[#allocation2 + $0x60] sm:$0xf]
    %v551 = vld [vmem:[#allocation2 + $0x64] sm:$0x1]
    %v552 = vld [vmem:[#allocation2 + $0x68] sm:$0xf]
    %v553 = vld [vmem:[#allocation2 + $0x6c] sm:$0x1]
    %v554 = vld [vmem:[#allocation2 + $0x70] sm:$0xf]
    %v555 = vld [vmem:[#allocation2 + $0x74] sm:$0x1]
    %v556 = vld [vmem:[#allocation2 + $0x78] sm:$0xf]
    %v557 = vld [vmem:[#allocation2 + $0x7c] sm:$0x1]
    %v558 = vld [vmem:[#allocation2 + $0x80] sm:$0xf]
    %v559 = vld [vmem:[#allocation2 + $0x84] sm:$0x1]
    %v560 = vld [vmem:[#allocation2 + $0x88] sm:$0xf]
    %v561 = vld [vmem:[#allocation2 + $0x8c] sm:$0x1]
    %v562 = vld [vmem:[#allocation2 + $0x90] sm:$0xf]
    %v563 = vld [vmem:[#allocation2 + $0x94] sm:$0x1]
    %v564 = vld [vmem:[#allocation2 + $0x98] sm:$0xf]
    %v565 = vld [vmem:[#allocation2 + $0x9c] sm:$0x1]
    %v566 = vld [vmem:[#allocation7] sm:$0xf]
    %vm567 = vsmask.f32 3328
    %vm568 = vsmask.f32 7440
    %vm569 = vmor %vm567, %vm568
    %v571 = vshrl.u32 %v526, 16
    %v573 = vrot.slane %v571, 4
    %v574 = vshll.u32 %v526, 16
    %v576 = vrot.slane %v574, 5
    %v577 = vor.u32 %v573, %v576
    %v578 = vrot.slane %v577, 4
    %v580 = vshll.u32 %v527, 16
    %v582 = vrot.slane %v580, 5
    %v583 = vsel %vm569, %v578, %v582
    %v585 = vshrl.u32 %v528, 16
    %v587 = vrot.slane %v585, 4
    %v588 = vshll.u32 %v528, 16
    %v590 = vrot.slane %v588, 5
    %v591 = vor.u32 %v587, %v590
    %v592 = vrot.slane %v591, 4
    %v594 = vshll.u32 %v529, 16
    %v596 = vrot.slane %v594, 5
    %v597 = vsel %vm569, %v592, %v596
    %v599 = vshrl.u32 %v530, 16
    %v601 = vrot.slane %v599, 4
    %v602 = vshll.u32 %v530, 16
    %v604 = vrot.slane %v602, 5
    %v605 = vor.u32 %v601, %v604
    %v606 = vrot.slane %v605, 4
    %v608 = vshll.u32 %v531, 16
    %v610 = vrot.slane %v608, 5
    %v611 = vsel %vm569, %v606, %v610
    %v613 = vshrl.u32 %v532, 16
    %v615 = vrot.slane %v613, 4
    %v616 = vshll.u32 %v532, 16
    %v618 = vrot.slane %v616, 5
    %v619 = vor.u32 %v615, %v618
    %v620 = vrot.slane %v619, 4
    %v622 = vshll.u32 %v533, 16
    %v624 = vrot.slane %v622, 5
    %v625 = vsel %vm569, %v620, %v624
    %v627 = vshrl.u32 %v534, 16
    %v629 = vrot.slane %v627, 4
    %v630 = vshll.u32 %v534, 16
    %v632 = vrot.slane %v630, 5
    %v633 = vor.u32 %v629, %v632
    %v634 = vrot.slane %v633, 4
    %v636 = vshll.u32 %v535, 16
    %v638 = vrot.slane %v636, 5
    %v639 = vsel %vm569, %v634, %v638
    %v641 = vshrl.u32 %v536, 16
    %v643 = vrot.slane %v641, 4
    %v644 = vshll.u32 %v536, 16
    %v646 = vrot.slane %v644, 5
    %v647 = vor.u32 %v643, %v646
    %v648 = vrot.slane %v647, 4
    %v650 = vshll.u32 %v537, 16
    %v652 = vrot.slane %v650, 5
    %v653 = vsel %vm569, %v648, %v652
    %v655 = vshrl.u32 %v538, 16
    %v657 = vrot.slane %v655, 4
    %v658 = vshll.u32 %v538, 16
    %v660 = vrot.slane %v658, 5
    %v661 = vor.u32 %v657, %v660
    %v662 = vrot.slane %v661, 4
    %v664 = vshll.u32 %v539, 16
    %v666 = vrot.slane %v664, 5
    %v667 = vsel %vm569, %v662, %v666
    %v669 = vshrl.u32 %v540, 16
    %v671 = vrot.slane %v669, 4
    %v672 = vshll.u32 %v540, 16
    %v674 = vrot.slane %v672, 5
    %v675 = vor.u32 %v671, %v674
    %v676 = vrot.slane %v675, 4
    %v678 = vshll.u32 %v541, 16
    %v680 = vrot.slane %v678, 5
    %v681 = vsel %vm569, %v676, %v680
    %v683 = vshrl.u32 %v546, 16
    %v685 = vrot.slane %v683, 4
    %v686 = vshll.u32 %v546, 16
    %v688 = vrot.slane %v686, 5
    %v689 = vor.u32 %v685, %v688
    %v690 = vrot.slane %v689, 4
    %v692 = vshll.u32 %v547, 16
    %v694 = vrot.slane %v692, 5
    %v695 = vsel %vm569, %v690, %v694
    %v697 = vshrl.u32 %v548, 16
    %v699 = vrot.slane %v697, 4
    %v700 = vshll.u32 %v548, 16
    %v702 = vrot.slane %v700, 5
    %v703 = vor.u32 %v699, %v702
    %v704 = vrot.slane %v703, 4
    %v706 = vshll.u32 %v549, 16
    %v708 = vrot.slane %v706, 5
    %v709 = vsel %vm569, %v704, %v708
    %v711 = vshrl.u32 %v550, 16
    %v713 = vrot.slane %v711, 4
    %v714 = vshll.u32 %v550, 16
    %v716 = vrot.slane %v714, 5
    %v717 = vor.u32 %v713, %v716
    %v718 = vrot.slane %v717, 4
    %v720 = vshll.u32 %v551, 16
    %v722 = vrot.slane %v720, 5
    %v723 = vsel %vm569, %v718, %v722
    %v725 = vshrl.u32 %v552, 16
    %v727 = vrot.slane %v725, 4
    %v728 = vshll.u32 %v552, 16
    %v730 = vrot.slane %v728, 5
    %v731 = vor.u32 %v727, %v730
    %v732 = vrot.slane %v731, 4
    %v734 = vshll.u32 %v553, 16
    %v736 = vrot.slane %v734, 5
    %v737 = vsel %vm569, %v732, %v736
    %v739 = vshrl.u32 %v554, 16
    %v741 = vrot.slane %v739, 4
    %v742 = vshll.u32 %v554, 16
    %v744 = vrot.slane %v742, 5
    %v745 = vor.u32 %v741, %v744
    %v746 = vrot.slane %v745, 4
    %v748 = vshll.u32 %v555, 16
    %v750 = vrot.slane %v748, 5
    %v751 = vsel %vm569, %v746, %v750
    %v753 = vshrl.u32 %v556, 16
    %v755 = vrot.slane %v753, 4
    %v756 = vshll.u32 %v556, 16
    %v758 = vrot.slane %v756, 5
    %v759 = vor.u32 %v755, %v758
    %v760 = vrot.slane %v759, 4
    %v762 = vshll.u32 %v557, 16
    %v764 = vrot.slane %v762, 5
    %v765 = vsel %vm569, %v760, %v764
    %v767 = vshrl.u32 %v558, 16
    %v769 = vrot.slane %v767, 4
    %v770 = vshll.u32 %v558, 16
    %v772 = vrot.slane %v770, 5
    %v773 = vor.u32 %v769, %v772
    %v774 = vrot.slane %v773, 4
    %v776 = vshll.u32 %v559, 16
    %v778 = vrot.slane %v776, 5
    %v779 = vsel %vm569, %v774, %v778
    %v781 = vshrl.u32 %v560, 16
    %v783 = vrot.slane %v781, 4
    %v784 = vshll.u32 %v560, 16
    %v786 = vrot.slane %v784, 5
    %v787 = vor.u32 %v783, %v786
    %v788 = vrot.slane %v787, 4
    %v790 = vshll.u32 %v561, 16
    %v792 = vrot.slane %v790, 5
    %v793 = vsel %vm569, %v788, %v792
    %v794 = vld [vmem:[#allocation7 + $0x4] sm:$0xf]
    %v795 = vunpack.c.l.b16 %v583
    %v796 = vunpack.c.l.b16 %v597
    %v797 = vunpack.c.l.b16 %v611
    %v798 = vunpack.c.l.b16 %v625
    %v799 = vunpack.c.l.b16 %v639
    %v800 = vunpack.c.l.b16 %v653
    %v801 = vunpack.c.l.b16 %v667
    %v802 = vunpack.c.l.b16 %v681
    %v803 = vunpack.c.l.b16 %v695
    %v804 = vunpack.c.l.b16 %v709
    %v805 = vunpack.c.l.b16 %v723
    %v806 = vunpack.c.l.b16 %v737
    %v807 = vunpack.c.l.b16 %v751
    %v808 = vunpack.c.l.b16 %v765
    %v809 = vunpack.c.l.b16 %v779
    %v810 = vunpack.c.l.b16 %v793
    %v811 = vpack.c.b16 %v796, %v795
    %v812 = vpack.c.b16 %v798, %v797
    %v813 = vpack.c.b16 %v800, %v799
    %v814 = vpack.c.b16 %v802, %v801
    %v815 = vpack.c.b16 %v804, %v803
    %v816 = vpack.c.b16 %v806, %v805
    %v817 = vpack.c.b16 %v808, %v807
    %v818 = vpack.c.b16 %v810, %v809
    %vm819 = vcmask 64512
    %v821 = vsel %vm819, %v811, 0
    %v824 = vsel %vm819, %v812, 0
    %v827 = vsel %vm819, %v813, 0
    %v830 = vsel %vm819, %v814, 0
    %v833 = vsel %vm819, %v815, 0
    %v836 = vsel %vm819, %v816, 0
    %v839 = vsel %vm819, %v817, 0
    %v842 = vsel %vm819, %v818, 0
    %vm844 = vcmask 1043456
    %v846 = vsel %vm844, %v794, 0
    %848 = vmatprep.subr.bf16.mxu0 0
    %849 = vmatpush1.bf16.msra.mxu0 %v846
    %850 = vmatprep.subr.bf16.mxu0 0
    %851 = vmatpush1.bf16.msra.mxu0 0
    %852 = vmatprep.subr.bf16.mxu0 0
    %853 = vmatpush1.bf16.msra.mxu0 0
    %854 = vmatprep.subr.bf16.mxu0 0
    %855 = vmatpush1.bf16.msra.mxu0 0
    %856 = vmatprep.subr.bf16.mxu0 0
    %857 = vmatpush1.bf16.msra.mxu0 0
    %858 = vmatprep.subr.bf16.mxu0 0
    %859 = vmatpush1.bf16.msra.mxu0 0
    %860 = vmatprep.subr.bf16.mxu0 0
    %861 = vmatpush1.bf16.msra.mxu0 0
    %862 = vmatprep.subr.bf16.mxu0 0
    %863 = vmatpush1.bf16.msra.mxu0 0
    %864 = vmatprep.subr.bf16.mxu0 0
    %865 = vmatpush1.bf16.msra.mxu0 0
    %866 = vmatprep.subr.bf16.mxu0 0
    %867 = vmatpush1.bf16.msra.mxu0 0
    %868 = vmatprep.subr.bf16.mxu0 0
    %869 = vmatpush1.bf16.msra.mxu0 0
    %870 = vmatprep.subr.bf16.mxu0 0
    %871 = vmatpush1.bf16.msra.mxu0 0
    %872 = vmatprep.subr.bf16.mxu0 0
    %873 = vmatpush1.bf16.msra.mxu0 0
    %874 = vmatprep.subr.bf16.mxu0 0
    %875 = vmatpush1.bf16.msra.mxu0 0
    %876 = vmatprep.subr.bf16.mxu0 0
    %877 = vmatpush1.bf16.msra.mxu0 0
    %878 = vmatprep.subr.bf16.mxu0 0
    %879 = vmatpush1.bf16.msra.mxu0 0
    %880 = vmatprep.mubr.bf16.mxu0 0
    %881 = vmatmul.mubr.bf16.gmra.mrb[0].mxu0 %v821
    %v882 = vpop.f32.mrb[0].mxu0
    %v883 = vadd.f32 0.0, %v882
    %v884 = vpop.f32.mrb[0].mxu0
    %v885 = vpop.f32.mrb[0].mxu0
    %v886 = vadd.f32 0.0, %v885
    %v887 = vpop.f32.mrb[0].mxu0
    %888 = vmatprep.mubr.bf16.mxu0 0
    %889 = vmatmul.mubr.bf16.gmra.mrb[0].mxu0 %v824
    %v890 = vpop.f32.mrb[0].mxu0
    %v891 = vadd.f32 0.0, %v890
    %v892 = vpop.f32.mrb[0].mxu0
    %v893 = vpop.f32.mrb[0].mxu0
    %v894 = vadd.f32 0.0, %v893
    %v895 = vpop.f32.mrb[0].mxu0
    %896 = vmatprep.mubr.bf16.mxu0 0
    %897 = vmatmul.mubr.bf16.gmra.mrb[0].mxu0 %v827
    %v898 = vpop.f32.mrb[0].mxu0
    %v899 = vadd.f32 0.0, %v898
    %v900 = vpop.f32.mrb[0].mxu0
    %v901 = vpop.f32.mrb[0].mxu0
    %v902 = vadd.f32 0.0, %v901
    %v903 = vpop.f32.mrb[0].mxu0
    %904 = vmatprep.mubr.bf16.mxu0 0
    %905 = vmatmul.mubr.bf16.gmra.mrb[0].mxu0 %v830
    %v906 = vpop.f32.mrb[0].mxu0
    %v907 = vadd.f32 0.0, %v906
    %v908 = vpop.f32.mrb[0].mxu0
    %v909 = vpop.f32.mrb[0].mxu0
    %v910 = vadd.f32 0.0, %v909
    %v911 = vpop.f32.mrb[0].mxu0
    %912 = vmatprep.mubr.bf16.mxu0 0
    %913 = vmatmul.mubr.bf16.gmra.mrb[0].mxu0 %v833
    %v914 = vpop.f32.mrb[0].mxu0
    %v915 = vadd.f32 0.0, %v914
    %v916 = vpop.f32.mrb[0].mxu0
    %v917 = vpop.f32.mrb[0].mxu0
    %v918 = vadd.f32 0.0, %v917
    %v919 = vpop.f32.mrb[0].mxu0
    %920 = vmatprep.mubr.bf16.mxu0 0
    %921 = vmatmul.mubr.bf16.gmra.mrb[0].mxu0 %v836
    %v922 = vpop.f32.mrb[0].mxu0
    %v923 = vadd.f32 0.0, %v922
    %v924 = vpop.f32.mrb[0].mxu0
    %v925 = vpop.f32.mrb[0].mxu0
    %v926 = vadd.f32 0.0, %v925
    %v927 = vpop.f32.mrb[0].mxu0
    %928 = vmatprep.mubr.bf16.mxu0 0
    %929 = vmatmul.mubr.bf16.gmra.mrb[0].mxu0 %v839
    %v930 = vpop.f32.mrb[0].mxu0
    %v931 = vadd.f32 0.0, %v930
    %v932 = vpop.f32.mrb[0].mxu0
    %v933 = vpop.f32.mrb[0].mxu0
    %v934 = vadd.f32 0.0, %v933
    %v935 = vpop.f32.mrb[0].mxu0
    %936 = vmatprep.mubr.bf16.mxu0 0
    %937 = vmatmul.mubr.bf16.gmra.mrb[0].mxu0 %v842
    %v938 = vpop.f32.mrb[0].mxu0
    %v939 = vadd.f32 0.0, %v938
    %v940 = vpop.f32.mrb[0].mxu0
    %v941 = vpop.f32.mrb[0].mxu0
    %v942 = vadd.f32 0.0, %v941
    %v943 = vpop.f32.mrb[0].mxu0
    %944 = vdwg.mxu0
    %v961 = vunpack.c.l.b16 %v526
    %v962 = vunpack.c.l.b16 %v528
    %v963 = vunpack.c.l.b16 %v530
    %v964 = vunpack.c.l.b16 %v532
    %v965 = vunpack.c.l.b16 %v534
    %v966 = vunpack.c.l.b16 %v536
    %v967 = vunpack.c.l.b16 %v538
    %v968 = vunpack.c.l.b16 %v540
    %v969 = vunpack.c.l.b16 %v546
    %v970 = vunpack.c.l.b16 %v548
    %v971 = vunpack.c.l.b16 %v550
    %v972 = vunpack.c.l.b16 %v552
    %v973 = vunpack.c.l.b16 %v554
    %v974 = vunpack.c.l.b16 %v556
    %v975 = vunpack.c.l.b16 %v558
    %v976 = vunpack.c.l.b16 %v560
    %v977 = vpack.c.b16 %v962, %v961
    %v978 = vpack.c.b16 %v964, %v963
    %v979 = vpack.c.b16 %v966, %v965
    %v980 = vpack.c.b16 %v968, %v967
    %v981 = vpack.c.b16 %v970, %v969
    %v982 = vpack.c.b16 %v972, %v971
    %v983 = vpack.c.b16 %v974, %v973
    %v984 = vpack.c.b16 %v976, %v975
    %v986 = vsel %vm819, %v977, 0
    %v989 = vsel %vm819, %v978, 0
    %v992 = vsel %vm819, %v979, 0
    %v995 = vsel %vm819, %v980, 0
    %v998 = vsel %vm819, %v981, 0
    %v1001 = vsel %vm819, %v982, 0
    %v1004 = vsel %vm819, %v983, 0
    %v1007 = vsel %vm819, %v984, 0
    %v1010 = vsel %vm844, %v566, 0
    %1012 = vmatprep.subr.bf16.mxu0 0
    %1013 = vmatpush1.bf16.msra.mxu0 %v1010
    %1014 = vmatprep.subr.bf16.mxu0 0
    %1015 = vmatpush1.bf16.msra.mxu0 0
    %1016 = vmatprep.subr.bf16.mxu0 0
    %1017 = vmatpush1.bf16.msra.mxu0 0
    %1018 = vmatprep.subr.bf16.mxu0 0
    %1019 = vmatpush1.bf16.msra.mxu0 0
    %1020 = vmatprep.subr.bf16.mxu0 0
    %1021 = vmatpush1.bf16.msra.mxu0 0
    %1022 = vmatprep.subr.bf16.mxu0 0
    %1023 = vmatpush1.bf16.msra.mxu0 0
    %1024 = vmatprep.subr.bf16.mxu0 0
    %1025 = vmatpush1.bf16.msra.mxu0 0
    %1026 = vmatprep.subr.bf16.mxu0 0
    %1027 = vmatpush1.bf16.msra.mxu0 0
    %1028 = vmatprep.subr.bf16.mxu0 0
    %1029 = vmatpush1.bf16.msra.mxu0 0
    %1030 = vmatprep.subr.bf16.mxu0 0
    %1031 = vmatpush1.bf16.msra.mxu0 0
    %1032 = vmatprep.subr.bf16.mxu0 0
    %1033 = vmatpush1.bf16.msra.mxu0 0
    %1034 = vmatprep.subr.bf16.mxu0 0
    %1035 = vmatpush1.bf16.msra.mxu0 0
    %1036 = vmatprep.subr.bf16.mxu0 0
    %1037 = vmatpush1.bf16.msra.mxu0 0
    %1038 = vmatprep.subr.bf16.mxu0 0
    %1039 = vmatpush1.bf16.msra.mxu0 0
    %1040 = vmatprep.subr.bf16.mxu0 0
    %1041 = vmatpush1.bf16.msra.mxu0 0
    %1042 = vmatprep.subr.bf16.mxu0 0
    %1043 = vmatpush1.bf16.msra.mxu0 0
    %1044 = vmatprep.mubr.bf16.mxu0 0
    %1045 = vmatmul.mubr.bf16.gmra.mrb[0].mxu0 %v986
    %v1046 = vpop.f32.mrb[0].mxu0
    %v1047 = vadd.f32 %v883, %v1046
    %v1048 = vpop.f32.mrb[0].mxu0
    %v1049 = vpop.f32.mrb[0].mxu0
    %v1050 = vadd.f32 %v886, %v1049
    %v1051 = vpop.f32.mrb[0].mxu0
    %1052 = vmatprep.mubr.bf16.mxu0 0
    %1053 = vmatmul.mubr.bf16.gmra.mrb[0].mxu0 %v989
    %v1054 = vpop.f32.mrb[0].mxu0
    %v1055 = vadd.f32 %v891, %v1054
    %v1056 = vpop.f32.mrb[0].mxu0
    %v1057 = vpop.f32.mrb[0].mxu0
    %v1058 = vadd.f32 %v894, %v1057
    %v1059 = vpop.f32.mrb[0].mxu0
    %1060 = vmatprep.mubr.bf16.mxu0 0
    %1061 = vmatmul.mubr.bf16.gmra.mrb[0].mxu0 %v992
    %v1062 = vpop.f32.mrb[0].mxu0
    %v1063 = vadd.f32 %v899, %v1062
    %v1064 = vpop.f32.mrb[0].mxu0
    %v1065 = vpop.f32.mrb[0].mxu0
    %v1066 = vadd.f32 %v902, %v1065
    %v1067 = vpop.f32.mrb[0].mxu0
    %1068 = vmatprep.mubr.bf16.mxu0 0
    %1069 = vmatmul.mubr.bf16.gmra.mrb[0].mxu0 %v995
    %v1070 = vpop.f32.mrb[0].mxu0
    %v1071 = vadd.f32 %v907, %v1070
    %v1072 = vpop.f32.mrb[0].mxu0
    %v1073 = vpop.f32.mrb[0].mxu0
    %v1074 = vadd.f32 %v910, %v1073
    %v1075 = vpop.f32.mrb[0].mxu0
    %1076 = vmatprep.mubr.bf16.mxu0 0
    %1077 = vmatmul.mubr.bf16.gmra.mrb[0].mxu0 %v998
    %v1078 = vpop.f32.mrb[0].mxu0
    %v1079 = vadd.f32 %v915, %v1078
    %v1080 = vpop.f32.mrb[0].mxu0
    %v1081 = vpop.f32.mrb[0].mxu0
    %v1082 = vadd.f32 %v918, %v1081
    %v1083 = vpop.f32.mrb[0].mxu0
    %1084 = vmatprep.mubr.bf16.mxu0 0
    %1085 = vmatmul.mubr.bf16.gmra.mrb[0].mxu0 %v1001
    %v1086 = vpop.f32.mrb[0].mxu0
    %v1087 = vadd.f32 %v923, %v1086
    %v1088 = vpop.f32.mrb[0].mxu0
    %v1089 = vpop.f32.mrb[0].mxu0
    %v1090 = vadd.f32 %v926, %v1089
    %v1091 = vpop.f32.mrb[0].mxu0
    %1092 = vmatprep.mubr.bf16.mxu0 0
    %1093 = vmatmul.mubr.bf16.gmra.mrb[0].mxu0 %v1004
    %v1094 = vpop.f32.mrb[0].mxu0
    %v1095 = vadd.f32 %v931, %v1094
    %v1096 = vpop.f32.mrb[0].mxu0
    %v1097 = vpop.f32.mrb[0].mxu0
    %v1098 = vadd.f32 %v934, %v1097
    %v1099 = vpop.f32.mrb[0].mxu0
    %1100 = vmatprep.mubr.bf16.mxu0 0
    %1101 = vmatmul.mubr.bf16.gmra.mrb[0].mxu0 %v1007
    %v1102 = vpop.f32.mrb[0].mxu0
    %v1103 = vadd.f32 %v939, %v1102
    %v1104 = vpop.f32.mrb[0].mxu0
    %v1105 = vpop.f32.mrb[0].mxu0
    %v1106 = vadd.f32 %v942, %v1105
    %v1107 = vpop.f32.mrb[0].mxu0
    %1108 = vdwg.mxu0
    %vm1125 = vcmask 1042432
    %vm1126 = vcmask 1046532
    %vm1127 = vmor %vm1125, %vm1126
    %v1128 = vrot.slane %v526, 5
    %v1129 = vrot.slane %v1128, 4
    %v1130 = vrot.slane %v527, 5
    %v1131 = vsel %vm1127, %v1129, %v1130
    %v1132 = vrot.slane %v528, 5
    %v1133 = vrot.slane %v1132, 4
    %v1134 = vrot.slane %v529, 5
    %v1135 = vsel %vm1127, %v1133, %v1134
    %v1136 = vrot.slane %v530, 5
    %v1137 = vrot.slane %v1136, 4
    %v1138 = vrot.slane %v531, 5
    %v1139 = vsel %vm1127, %v1137, %v1138
    %v1140 = vrot.slane %v532, 5
    %v1141 = vrot.slane %v1140, 4
    %v1142 = vrot.slane %v533, 5
    %v1143 = vsel %vm1127, %v1141, %v1142
    %v1144 = vrot.slane %v534, 5
    %v1145 = vrot.slane %v1144, 4
    %v1146 = vrot.slane %v535, 5
    %v1147 = vsel %vm1127, %v1145, %v1146
    %v1148 = vrot.slane %v536, 5
    %v1149 = vrot.slane %v1148, 4
    %v1150 = vrot.slane %v537, 5
    %v1151 = vsel %vm1127, %v1149, %v1150
    %v1152 = vrot.slane %v538, 5
    %v1153 = vrot.slane %v1152, 4
    %v1154 = vrot.slane %v539, 5
    %v1155 = vsel %vm1127, %v1153, %v1154
    %v1156 = vrot.slane %v540, 5
    %v1157 = vrot.slane %v1156, 4
    %v1158 = vrot.slane %v541, 5
    %v1159 = vsel %vm1127, %v1157, %v1158
    %v1160 = vrot.slane %v546, 5
    %v1161 = vrot.slane %v1160, 4
    %v1162 = vrot.slane %v547, 5
    %v1163 = vsel %vm1127, %v1161, %v1162
    %v1164 = vrot.slane %v548, 5
    %v1165 = vrot.slane %v1164, 4
    %v1166 = vrot.slane %v549, 5
    %v1167 = vsel %vm1127, %v1165, %v1166
    %v1168 = vrot.slane %v550, 5
    %v1169 = vrot.slane %v1168, 4
    %v1170 = vrot.slane %v551, 5
    %v1171 = vsel %vm1127, %v1169, %v1170
    %v1172 = vrot.slane %v552, 5
    %v1173 = vrot.slane %v1172, 4
    %v1174 = vrot.slane %v553, 5
    %v1175 = vsel %vm1127, %v1173, %v1174
    %v1176 = vrot.slane %v554, 5
    %v1177 = vrot.slane %v1176, 4
    %v1178 = vrot.slane %v555, 5
    %v1179 = vsel %vm1127, %v1177, %v1178
    %v1180 = vrot.slane %v556, 5
    %v1181 = vrot.slane %v1180, 4
    %v1182 = vrot.slane %v557, 5
    %v1183 = vsel %vm1127, %v1181, %v1182
    %v1184 = vrot.slane %v558, 5
    %v1185 = vrot.slane %v1184, 4
    %v1186 = vrot.slane %v559, 5
    %v1187 = vsel %vm1127, %v1185, %v1186
    %v1188 = vrot.slane %v560, 5
    %v1189 = vrot.slane %v1188, 4
    %v1190 = vrot.slane %v561, 5
    %v1191 = vsel %vm1127, %v1189, %v1190
    %v1192 = vld [vmem:[#allocation7 + $0x8] sm:$0xf]
    %v1193 = vunpack.c.l.b16 %v1131
    %v1194 = vunpack.c.l.b16 %v1135
    %v1195 = vunpack.c.l.b16 %v1139
    %v1196 = vunpack.c.l.b16 %v1143
    %v1197 = vunpack.c.l.b16 %v1147
    %v1198 = vunpack.c.l.b16 %v1151
    %v1199 = vunpack.c.l.b16 %v1155
    %v1200 = vunpack.c.l.b16 %v1159
    %v1201 = vunpack.c.l.b16 %v1163
    %v1202 = vunpack.c.l.b16 %v1167
    %v1203 = vunpack.c.l.b16 %v1171
    %v1204 = vunpack.c.l.b16 %v1175
    %v1205 = vunpack.c.l.b16 %v1179
    %v1206 = vunpack.c.l.b16 %v1183
    %v1207 = vunpack.c.l.b16 %v1187
    %v1208 = vunpack.c.l.b16 %v1191
    %v1209 = vpack.c.b16 %v1194, %v1193
    %v1210 = vpack.c.b16 %v1196, %v1195
    %v1211 = vpack.c.b16 %v1198, %v1197
    %v1212 = vpack.c.b16 %v1200, %v1199
    %v1213 = vpack.c.b16 %v1202, %v1201
    %v1214 = vpack.c.b16 %v1204, %v1203
    %v1215 = vpack.c.b16 %v1206, %v1205
    %v1216 = vpack.c.b16 %v1208, %v1207
    %v1218 = vsel %vm819, %v1209, 0
    %v1221 = vsel %vm819, %v1210, 0
    %v1224 = vsel %vm819, %v1211, 0
    %v1227 = vsel %vm819, %v1212, 0
    %v1230 = vsel %vm819, %v1213, 0
    %v1233 = vsel %vm819, %v1214, 0
    %v1236 = vsel %vm819, %v1215, 0
    %v1239 = vsel %vm819, %v1216, 0
    %v1242 = vsel %vm844, %v1192, 0
    %1244 = vmatprep.subr.bf16.mxu0 0
    %1245 = vmatpush1.bf16.msra.mxu0 %v1242
    %1246 = vmatprep.subr.bf16.mxu0 0
    %1247 = vmatpush1.bf16.msra.mxu0 0
    %1248 = vmatprep.subr.bf16.mxu0 0
    %1249 = vmatpush1.bf16.msra.mxu0 0
    %1250 = vmatprep.subr.bf16.mxu0 0
    %1251 = vmatpush1.bf16.msra.mxu0 0
    %1252 = vmatprep.subr.bf16.mxu0 0
    %1253 = vmatpush1.bf16.msra.mxu0 0
    %1254 = vmatprep.subr.bf16.mxu0 0
    %1255 = vmatpush1.bf16.msra.mxu0 0
    %1256 = vmatprep.subr.bf16.mxu0 0
    %1257 = vmatpush1.bf16.msra.mxu0 0
    %1258 = vmatprep.subr.bf16.mxu0 0
    %1259 = vmatpush1.bf16.msra.mxu0 0
    %1260 = vmatprep.subr.bf16.mxu0 0
    %1261 = vmatpush1.bf16.msra.mxu0 0
    %1262 = vmatprep.subr.bf16.mxu0 0
    %1263 = vmatpush1.bf16.msra.mxu0 0
    %1264 = vmatprep.subr.bf16.mxu0 0
    %1265 = vmatpush1.bf16.msra.mxu0 0
    %1266 = vmatprep.subr.bf16.mxu0 0
    %1267 = vmatpush1.bf16.msra.mxu0 0
    %1268 = vmatprep.subr.bf16.mxu0 0
    %1269 = vmatpush1.bf16.msra.mxu0 0
    %1270 = vmatprep.subr.bf16.mxu0 0
    %1271 = vmatpush1.bf16.msra.mxu0 0
    %1272 = vmatprep.subr.bf16.mxu0 0
    %1273 = vmatpush1.bf16.msra.mxu0 0
    %1274 = vmatprep.subr.bf16.mxu0 0
    %1275 = vmatpush1.bf16.msra.mxu0 0
    %1276 = vmatprep.mubr.bf16.mxu0 0
    %1277 = vmatmul.mubr.bf16.gmra.mrb[0].mxu0 %v1218
    %v1278 = vpop.f32.mrb[0].mxu0
    %v1279 = vadd.f32 0.0, %v1278
    %v1280 = vpop.f32.mrb[0].mxu0
    %v1281 = vpop.f32.mrb[0].mxu0
    %v1282 = vadd.f32 0.0, %v1281
    %v1283 = vpop.f32.mrb[0].mxu0
    %1284 = vmatprep.mubr.bf16.mxu0 0
    %1285 = vmatmul.mubr.bf16.gmra.mrb[0].mxu0 %v1221
    %v1286 = vpop.f32.mrb[0].mxu0
    %v1287 = vadd.f32 0.0, %v1286
    %v1288 = vpop.f32.mrb[0].mxu0
    %v1289 = vpop.f32.mrb[0].mxu0
    %v1290 = vadd.f32 0.0, %v1289
    %v1291 = vpop.f32.mrb[0].mxu0
    %1292 = vmatprep.mubr.bf16.mxu0 0
    %1293 = vmatmul.mubr.bf16.gmra.mrb[0].mxu0 %v1224
    %v1294 = vpop.f32.mrb[0].mxu0
    %v1295 = vadd.f32 0.0, %v1294
    %v1296 = vpop.f32.mrb[0].mxu0
    %v1297 = vpop.f32.mrb[0].mxu0
    %v1298 = vadd.f32 0.0, %v1297
    %v1299 = vpop.f32.mrb[0].mxu0
    %1300 = vmatprep.mubr.bf16.mxu0 0
    %1301 = vmatmul.mubr.bf16.gmra.mrb[0].mxu0 %v1227
    %v1302 = vpop.f32.mrb[0].mxu0
    %v1303 = vadd.f32 0.0, %v1302
    %v1304 = vpop.f32.mrb[0].mxu0
    %v1305 = vpop.f32.mrb[0].mxu0
    %v1306 = vadd.f32 0.0, %v1305
    %v1307 = vpop.f32.mrb[0].mxu0
    %1308 = vmatprep.mubr.bf16.mxu0 0
    %1309 = vmatmul.mubr.bf16.gmra.mrb[0].mxu0 %v1230
    %v1310 = vpop.f32.mrb[0].mxu0
    %v1311 = vadd.f32 0.0, %v1310
    %v1312 = vpop.f32.mrb[0].mxu0
    %v1313 = vpop.f32.mrb[0].mxu0
    %v1314 = vadd.f32 0.0, %v1313
    %v1315 = vpop.f32.mrb[0].mxu0
    %1316 = vmatprep.mubr.bf16.mxu0 0
    %1317 = vmatmul.mubr.bf16.gmra.mrb[0].mxu0 %v1233
    %v1318 = vpop.f32.mrb[0].mxu0
    %v1319 = vadd.f32 0.0, %v1318
    %v1320 = vpop.f32.mrb[0].mxu0
    %v1321 = vpop.f32.mrb[0].mxu0
    %v1322 = vadd.f32 0.0, %v1321
    %v1323 = vpop.f32.mrb[0].mxu0
    %1324 = vmatprep.mubr.bf16.mxu0 0
    %1325 = vmatmul.mubr.bf16.gmra.mrb[0].mxu0 %v1236
    %v1326 = vpop.f32.mrb[0].mxu0
    %v1327 = vadd.f32 0.0, %v1326
    %v1328 = vpop.f32.mrb[0].mxu0
    %v1329 = vpop.f32.mrb[0].mxu0
    %v1330 = vadd.f32 0.0, %v1329
    %v1331 = vpop.f32.mrb[0].mxu0
    %1332 = vmatprep.mubr.bf16.mxu0 0
    %1333 = vmatmul.mubr.bf16.gmra.mrb[0].mxu0 %v1239
    %v1334 = vpop.f32.mrb[0].mxu0
    %v1335 = vadd.f32 0.0, %v1334
    %v1336 = vpop.f32.mrb[0].mxu0
    %v1337 = vpop.f32.mrb[0].mxu0
    %v1338 = vadd.f32 0.0, %v1337
    %v1339 = vpop.f32.mrb[0].mxu0
    %1340 = vdwg.mxu0
    %v1341 = vadd.f32 %v1047, %v1279
    %v1342 = vadd.f32 %v1050, %v1282
    %v1343 = vadd.f32 %v1055, %v1287
    %v1344 = vadd.f32 %v1058, %v1290
    %v1345 = vadd.f32 %v1063, %v1295
    %v1346 = vadd.f32 %v1066, %v1298
    %v1347 = vadd.f32 %v1071, %v1303
    %v1348 = vadd.f32 %v1074, %v1306
    %v1349 = vadd.f32 %v1079, %v1311
    %v1350 = vadd.f32 %v1082, %v1314
    %v1351 = vadd.f32 %v1087, %v1319
    %v1352 = vadd.f32 %v1090, %v1322
    %v1353 = vadd.f32 %v1095, %v1327
    %v1354 = vadd.f32 %v1098, %v1330
    %v1355 = vadd.f32 %v1103, %v1335
    %v1356 = vadd.f32 %v1106, %v1338
    %v1357 = vld [vmem:[#allocation7 + $0xc] sm:$0xf]
    %v1360 = vunpack.c.l.b16 %v542
    %v1361 = vunpack.c.l.b16 %v562
    %v1362 = vpack.c.b16 %v963, %v962
    %v1363 = vpack.c.b16 %v965, %v964
    %v1364 = vpack.c.b16 %v967, %v966
    %v1365 = vpack.c.b16 %v1360, %v968
    %v1366 = vpack.c.b16 %v971, %v970
    %v1367 = vpack.c.b16 %v973, %v972
    %v1368 = vpack.c.b16 %v975, %v974
    %v1369 = vpack.c.b16 %v1361, %v976
    %v1371 = vsel %vm819, %v1362, 0
    %v1374 = vsel %vm819, %v1363, 0
    %v1377 = vsel %vm819, %v1364, 0
    %v1380 = vsel %vm819, %v1365, 0
    %v1383 = vsel %vm819, %v1366, 0
    %v1386 = vsel %vm819, %v1367, 0
    %v1389 = vsel %vm819, %v1368, 0
    %v1392 = vsel %vm819, %v1369, 0
    %v1395 = vsel %vm844, %v1357, 0
    %1397 = vmatprep.subr.bf16.mxu0 0
    %1398 = vmatpush1.bf16.msra.mxu0 %v1395
    %1399 = vmatprep.subr.bf16.mxu0 0
    %1400 = vmatpush1.bf16.msra.mxu0 0
    %1401 = vmatprep.subr.bf16.mxu0 0
    %1402 = vmatpush1.bf16.msra.mxu0 0
    %1403 = vmatprep.subr.bf16.mxu0 0
    %1404 = vmatpush1.bf16.msra.mxu0 0
    %1405 = vmatprep.subr.bf16.mxu0 0
    %1406 = vmatpush1.bf16.msra.mxu0 0
    %1407 = vmatprep.subr.bf16.mxu0 0
    %1408 = vmatpush1.bf16.msra.mxu0 0
    %1409 = vmatprep.subr.bf16.mxu0 0
    %1410 = vmatpush1.bf16.msra.mxu0 0
    %1411 = vmatprep.subr.bf16.mxu0 0
    %1412 = vmatpush1.bf16.msra.mxu0 0
    %1413 = vmatprep.subr.bf16.mxu0 0
    %1414 = vmatpush1.bf16.msra.mxu0 0
    %1415 = vmatprep.subr.bf16.mxu0 0
    %1416 = vmatpush1.bf16.msra.mxu0 0
    %1417 = vmatprep.subr.bf16.mxu0 0
    %1418 = vmatpush1.bf16.msra.mxu0 0
    %1419 = vmatprep.subr.bf16.mxu0 0
    %1420 = vmatpush1.bf16.msra.mxu0 0
    %1421 = vmatprep.subr.bf16.mxu0 0
    %1422 = vmatpush1.bf16.msra.mxu0 0
    %1423 = vmatprep.subr.bf16.mxu0 0
    %1424 = vmatpush1.bf16.msra.mxu0 0
    %1425 = vmatprep.subr.bf16.mxu0 0
    %1426 = vmatpush1.bf16.msra.mxu0 0
    %1427 = vmatprep.subr.bf16.mxu0 0
    %1428 = vmatpush1.bf16.msra.mxu0 0
    %1429 = vmatprep.mubr.bf16.mxu0 0
    %1430 = vmatmul.mubr.bf16.gmra.mrb[0].mxu0 %v1371
    %v1431 = vpop.f32.mrb[0].mxu0
    %v1432 = vadd.f32 0.0, %v1431
    %v1433 = vpop.f32.mrb[0].mxu0
    %v1434 = vpop.f32.mrb[0].mxu0
    %v1435 = vadd.f32 0.0, %v1434
    %v1436 = vpop.f32.mrb[0].mxu0
    %1437 = vmatprep.mubr.bf16.mxu0 0
    %1438 = vmatmul.mubr.bf16.gmra.mrb[0].mxu0 %v1374
    %v1439 = vpop.f32.mrb[0].mxu0
    %v1440 = vadd.f32 0.0, %v1439
    %v1441 = vpop.f32.mrb[0].mxu0
    %v1442 = vpop.f32.mrb[0].mxu0
    %v1443 = vadd.f32 0.0, %v1442
    %v1444 = vpop.f32.mrb[0].mxu0
    %1445 = vmatprep.mubr.bf16.mxu0 0
    %1446 = vmatmul.mubr.bf16.gmra.mrb[0].mxu0 %v1377
    %v1447 = vpop.f32.mrb[0].mxu0
    %v1448 = vadd.f32 0.0, %v1447
    %v1449 = vpop.f32.mrb[0].mxu0
    %v1450 = vpop.f32.mrb[0].mxu0
    %v1451 = vadd.f32 0.0, %v1450
    %v1452 = vpop.f32.mrb[0].mxu0
    %1453 = vmatprep.mubr.bf16.mxu0 0
    %1454 = vmatmul.mubr.bf16.gmra.mrb[0].mxu0 %v1380
    %v1455 = vpop.f32.mrb[0].mxu0
    %v1456 = vadd.f32 0.0, %v1455
    %v1457 = vpop.f32.mrb[0].mxu0
    %v1458 = vpop.f32.mrb[0].mxu0
    %v1459 = vadd.f32 0.0, %v1458
    %v1460 = vpop.f32.mrb[0].mxu0
    %1461 = vmatprep.mubr.bf16.mxu0 0
    %1462 = vmatmul.mubr.bf16.gmra.mrb[0].mxu0 %v1383
    %v1463 = vpop.f32.mrb[0].mxu0
    %v1464 = vadd.f32 0.0, %v1463
    %v1465 = vpop.f32.mrb[0].mxu0
    %v1466 = vpop.f32.mrb[0].mxu0
    %v1467 = vadd.f32 0.0, %v1466
    %v1468 = vpop.f32.mrb[0].mxu0
    %1469 = vmatprep.mubr.bf16.mxu0 0
    %1470 = vmatmul.mubr.bf16.gmra.mrb[0].mxu0 %v1386
    %v1471 = vpop.f32.mrb[0].mxu0
    %v1472 = vadd.f32 0.0, %v1471
    %v1473 = vpop.f32.mrb[0].mxu0
    %v1474 = vpop.f32.mrb[0].mxu0
    %v1475 = vadd.f32 0.0, %v1474
    %v1476 = vpop.f32.mrb[0].mxu0
    %1477 = vmatprep.mubr.bf16.mxu0 0
    %1478 = vmatmul.mubr.bf16.gmra.mrb[0].mxu0 %v1389
    %v1479 = vpop.f32.mrb[0].mxu0
    %v1480 = vadd.f32 0.0, %v1479
    %v1481 = vpop.f32.mrb[0].mxu0
    %v1482 = vpop.f32.mrb[0].mxu0
    %v1483 = vadd.f32 0.0, %v1482
    %v1484 = vpop.f32.mrb[0].mxu0
    %1485 = vmatprep.mubr.bf16.mxu0 0
    %1486 = vmatmul.mubr.bf16.gmra.mrb[0].mxu0 %v1392
    %v1487 = vpop.f32.mrb[0].mxu0
    %v1488 = vadd.f32 0.0, %v1487
    %v1489 = vpop.f32.mrb[0].mxu0
    %v1490 = vpop.f32.mrb[0].mxu0
    %v1491 = vadd.f32 0.0, %v1490
    %v1492 = vpop.f32.mrb[0].mxu0
    %1493 = vdwg.mxu0
    %v1494 = vadd.f32 %v1341, %v1432
    %v1495 = vadd.f32 %v1342, %v1435
    %v1496 = vadd.f32 %v1343, %v1440
    %v1497 = vadd.f32 %v1344, %v1443
    %v1498 = vadd.f32 %v1345, %v1448
    %v1499 = vadd.f32 %v1346, %v1451
    %v1500 = vadd.f32 %v1347, %v1456
    %v1501 = vadd.f32 %v1348, %v1459
    %v1502 = vadd.f32 %v1349, %v1464
    %v1503 = vadd.f32 %v1350, %v1467
    %v1504 = vadd.f32 %v1351, %v1472
    %v1505 = vadd.f32 %v1352, %v1475
    %v1506 = vadd.f32 %v1353, %v1480
    %v1507 = vadd.f32 %v1354, %v1483
    %v1508 = vadd.f32 %v1355, %v1488
    %v1509 = vadd.f32 %v1356, %v1491
    %v1511 = vshrl.u32 %v542, 16
    %v1513 = vrot.slane %v1511, 4
    %v1514 = vshll.u32 %v542, 16
    %v1516 = vrot.slane %v1514, 5
    %v1517 = vor.u32 %v1513, %v1516
    %v1518 = vrot.slane %v1517, 4
    %v1520 = vshll.u32 %v543, 16
    %v1522 = vrot.slane %v1520, 5
    %v1523 = vsel %vm569, %v1518, %v1522
    %v1525 = vshrl.u32 %v562, 16
    %v1527 = vrot.slane %v1525, 4
    %v1528 = vshll.u32 %v562, 16
    %v1530 = vrot.slane %v1528, 5
    %v1531 = vor.u32 %v1527, %v1530
    %v1532 = vrot.slane %v1531, 4
    %v1534 = vshll.u32 %v563, 16
    %v1536 = vrot.slane %v1534, 5
    %v1537 = vsel %vm569, %v1532, %v1536
    %v1538 = vld [vmem:[#allocation7 + $0x10] sm:$0xf]
    %v1539 = vunpack.c.l.b16 %v1523
    %v1540 = vunpack.c.l.b16 %v1537
    %v1541 = vpack.c.b16 %v797, %v796
    %v1542 = vpack.c.b16 %v799, %v798
    %v1543 = vpack.c.b16 %v801, %v800
    %v1544 = vpack.c.b16 %v1539, %v802
    %v1545 = vpack.c.b16 %v805, %v804
    %v1546 = vpack.c.b16 %v807, %v806
    %v1547 = vpack.c.b16 %v809, %v808
    %v1548 = vpack.c.b16 %v1540, %v810
    %v1550 = vsel %vm819, %v1541, 0
    %v1553 = vsel %vm819, %v1542, 0
    %v1556 = vsel %vm819, %v1543, 0
    %v1559 = vsel %vm819, %v1544, 0
    %v1562 = vsel %vm819, %v1545, 0
    %v1565 = vsel %vm819, %v1546, 0
    %v1568 = vsel %vm819, %v1547, 0
    %v1571 = vsel %vm819, %v1548, 0
    %v1574 = vsel %vm844, %v1538, 0
    %1576 = vmatprep.subr.bf16.mxu0 0
    %1577 = vmatpush1.bf16.msra.mxu0 %v1574
    %1578 = vmatprep.subr.bf16.mxu0 0
    %1579 = vmatpush1.bf16.msra.mxu0 0
    %1580 = vmatprep.subr.bf16.mxu0 0
    %1581 = vmatpush1.bf16.msra.mxu0 0
    %1582 = vmatprep.subr.bf16.mxu0 0
    %1583 = vmatpush1.bf16.msra.mxu0 0
    %1584 = vmatprep.subr.bf16.mxu0 0
    %1585 = vmatpush1.bf16.msra.mxu0 0
    %1586 = vmatprep.subr.bf16.mxu0 0
    %1587 = vmatpush1.bf16.msra.mxu0 0
    %1588 = vmatprep.subr.bf16.mxu0 0
    %1589 = vmatpush1.bf16.msra.mxu0 0
    %1590 = vmatprep.subr.bf16.mxu0 0
    %1591 = vmatpush1.bf16.msra.mxu0 0
    %1592 = vmatprep.subr.bf16.mxu0 0
    %1593 = vmatpush1.bf16.msra.mxu0 0
    %1594 = vmatprep.subr.bf16.mxu0 0
    %1595 = vmatpush1.bf16.msra.mxu0 0
    %1596 = vmatprep.subr.bf16.mxu0 0
    %1597 = vmatpush1.bf16.msra.mxu0 0
    %1598 = vmatprep.subr.bf16.mxu0 0
    %1599 = vmatpush1.bf16.msra.mxu0 0
    %1600 = vmatprep.subr.bf16.mxu0 0
    %1601 = vmatpush1.bf16.msra.mxu0 0
    %1602 = vmatprep.subr.bf16.mxu0 0
    %1603 = vmatpush1.bf16.msra.mxu0 0
    %1604 = vmatprep.subr.bf16.mxu0 0
    %1605 = vmatpush1.bf16.msra.mxu0 0
    %1606 = vmatprep.subr.bf16.mxu0 0
    %1607 = vmatpush1.bf16.msra.mxu0 0
    %1608 = vmatprep.mubr.bf16.mxu0 0
    %1609 = vmatmul.mubr.bf16.gmra.mrb[0].mxu0 %v1550
    %v1610 = vpop.f32.mrb[0].mxu0
    %v1611 = vadd.f32 0.0, %v1610
    %v1612 = vpop.f32.mrb[0].mxu0
    %v1613 = vpop.f32.mrb[0].mxu0
    %v1614 = vadd.f32 0.0, %v1613
    %v1615 = vpop.f32.mrb[0].mxu0
    %1616 = vmatprep.mubr.bf16.mxu0 0
    %1617 = vmatmul.mubr.bf16.gmra.mrb[0].mxu0 %v1553
    %v1618 = vpop.f32.mrb[0].mxu0
    %v1619 = vadd.f32 0.0, %v1618
    %v1620 = vpop.f32.mrb[0].mxu0
    %v1621 = vpop.f32.mrb[0].mxu0
    %v1622 = vadd.f32 0.0, %v1621
    %v1623 = vpop.f32.mrb[0].mxu0
    %1624 = vmatprep.mubr.bf16.mxu0 0
    %1625 = vmatmul.mubr.bf16.gmra.mrb[0].mxu0 %v1556
    %v1626 = vpop.f32.mrb[0].mxu0
    %v1627 = vadd.f32 0.0, %v1626
    %v1628 = vpop.f32.mrb[0].mxu0
    %v1629 = vpop.f32.mrb[0].mxu0
    %v1630 = vadd.f32 0.0, %v1629
    %v1631 = vpop.f32.mrb[0].mxu0
    %1632 = vmatprep.mubr.bf16.mxu0 0
    %1633 = vmatmul.mubr.bf16.gmra.mrb[0].mxu0 %v1559
    %v1634 = vpop.f32.mrb[0].mxu0
    %v1635 = vadd.f32 0.0, %v1634
    %v1636 = vpop.f32.mrb[0].mxu0
    %v1637 = vpop.f32.mrb[0].mxu0
    %v1638 = vadd.f32 0.0, %v1637
    %v1639 = vpop.f32.mrb[0].mxu0
    %1640 = vmatprep.mubr.bf16.mxu0 0
    %1641 = vmatmul.mubr.bf16.gmra.mrb[0].mxu0 %v1562
    %v1642 = vpop.f32.mrb[0].mxu0
    %v1643 = vadd.f32 0.0, %v1642
    %v1644 = vpop.f32.mrb[0].mxu0
    %v1645 = vpop.f32.mrb[0].mxu0
    %v1646 = vadd.f32 0.0, %v1645
    %v1647 = vpop.f32.mrb[0].mxu0
    %1648 = vmatprep.mubr.bf16.mxu0 0
    %1649 = vmatmul.mubr.bf16.gmra.mrb[0].mxu0 %v1565
    %v1650 = vpop.f32.mrb[0].mxu0
    %v1651 = vadd.f32 0.0, %v1650
    %v1652 = vpop.f32.mrb[0].mxu0
    %v1653 = vpop.f32.mrb[0].mxu0
    %v1654 = vadd.f32 0.0, %v1653
    %v1655 = vpop.f32.mrb[0].mxu0
    %1656 = vmatprep.mubr.bf16.mxu0 0
    %1657 = vmatmul.mubr.bf16.gmra.mrb[0].mxu0 %v1568
    %v1658 = vpop.f32.mrb[0].mxu0
    %v1659 = vadd.f32 0.0, %v1658
    %v1660 = vpop.f32.mrb[0].mxu0
    %v1661 = vpop.f32.mrb[0].mxu0
    %v1662 = vadd.f32 0.0, %v1661
    %v1663 = vpop.f32.mrb[0].mxu0
    %1664 = vmatprep.mubr.bf16.mxu0 0
    %1665 = vmatmul.mubr.bf16.gmra.mrb[0].mxu0 %v1571
    %v1666 = vpop.f32.mrb[0].mxu0
    %v1667 = vadd.f32 0.0, %v1666
    %v1668 = vpop.f32.mrb[0].mxu0
    %v1669 = vpop.f32.mrb[0].mxu0
    %v1670 = vadd.f32 0.0, %v1669
    %v1671 = vpop.f32.mrb[0].mxu0
    %1672 = vdwg.mxu0
    %v1673 = vadd.f32 %v1494, %v1611
    %v1674 = vadd.f32 %v1495, %v1614
    %v1675 = vadd.f32 %v1496, %v1619
    %v1676 = vadd.f32 %v1497, %v1622
    %v1677 = vadd.f32 %v1498, %v1627
    %v1678 = vadd.f32 %v1499, %v1630
    %v1679 = vadd.f32 %v1500, %v1635
    %v1680 = vadd.f32 %v1501, %v1638
    %v1681 = vadd.f32 %v1502, %v1643
    %v1682 = vadd.f32 %v1503, %v1646
    %v1683 = vadd.f32 %v1504, %v1651
    %v1684 = vadd.f32 %v1505, %v1654
    %v1685 = vadd.f32 %v1506, %v1659
    %v1686 = vadd.f32 %v1507, %v1662
    %v1687 = vadd.f32 %v1508, %v1667
    %v1688 = vadd.f32 %v1509, %v1670
    %v1691 = vrot.slane %v542, 5
    %v1692 = vrot.slane %v1691, 4
    %v1693 = vrot.slane %v543, 5
    %v1694 = vsel %vm1127, %v1692, %v1693
    %v1695 = vrot.slane %v562, 5
    %v1696 = vrot.slane %v1695, 4
    %v1697 = vrot.slane %v563, 5
    %v1698 = vsel %vm1127, %v1696, %v1697
    %v1699 = vld [vmem:[#allocation7 + $0x14] sm:$0xf]
    %v1700 = vunpack.c.l.b16 %v1694
    %v1701 = vunpack.c.l.b16 %v1698
    %v1702 = vpack.c.b16 %v1195, %v1194
    %v1703 = vpack.c.b16 %v1197, %v1196
    %v1704 = vpack.c.b16 %v1199, %v1198
    %v1705 = vpack.c.b16 %v1700, %v1200
    %v1706 = vpack.c.b16 %v1203, %v1202
    %v1707 = vpack.c.b16 %v1205, %v1204
    %v1708 = vpack.c.b16 %v1207, %v1206
    %v1709 = vpack.c.b16 %v1701, %v1208
    %v1711 = vsel %vm819, %v1702, 0
    %v1714 = vsel %vm819, %v1703, 0
    %v1717 = vsel %vm819, %v1704, 0
    %v1720 = vsel %vm819, %v1705, 0
    %v1723 = vsel %vm819, %v1706, 0
    %v1726 = vsel %vm819, %v1707, 0
    %v1729 = vsel %vm819, %v1708, 0
    %v1732 = vsel %vm819, %v1709, 0
    %v1735 = vsel %vm844, %v1699, 0
    %1737 = vmatprep.subr.bf16.mxu0 0
    %1738 = vmatpush1.bf16.msra.mxu0 %v1735
    %1739 = vmatprep.subr.bf16.mxu0 0
    %1740 = vmatpush1.bf16.msra.mxu0 0
    %1741 = vmatprep.subr.bf16.mxu0 0
    %1742 = vmatpush1.bf16.msra.mxu0 0
    %1743 = vmatprep.subr.bf16.mxu0 0
    %1744 = vmatpush1.bf16.msra.mxu0 0
    %1745 = vmatprep.subr.bf16.mxu0 0
    %1746 = vmatpush1.bf16.msra.mxu0 0
    %1747 = vmatprep.subr.bf16.mxu0 0
    %1748 = vmatpush1.bf16.msra.mxu0 0
    %1749 = vmatprep.subr.bf16.mxu0 0
    %1750 = vmatpush1.bf16.msra.mxu0 0
    %1751 = vmatprep.subr.bf16.mxu0 0
    %1752 = vmatpush1.bf16.msra.mxu0 0
    %1753 = vmatprep.subr.bf16.mxu0 0
    %1754 = vmatpush1.bf16.msra.mxu0 0
    %1755 = vmatprep.subr.bf16.mxu0 0
    %1756 = vmatpush1.bf16.msra.mxu0 0
    %1757 = vmatprep.subr.bf16.mxu0 0
    %1758 = vmatpush1.bf16.msra.mxu0 0
    %1759 = vmatprep.subr.bf16.mxu0 0
    %1760 = vmatpush1.bf16.msra.mxu0 0
    %1761 = vmatprep.subr.bf16.mxu0 0
    %1762 = vmatpush1.bf16.msra.mxu0 0
    %1763 = vmatprep.subr.bf16.mxu0 0
    %1764 = vmatpush1.bf16.msra.mxu0 0
    %1765 = vmatprep.subr.bf16.mxu0 0
    %1766 = vmatpush1.bf16.msra.mxu0 0
    %1767 = vmatprep.subr.bf16.mxu0 0
    %1768 = vmatpush1.bf16.msra.mxu0 0
    %1769 = vmatprep.mubr.bf16.mxu0 0
    %1770 = vmatmul.mubr.bf16.gmra.mrb[0].mxu0 %v1711
    %v1771 = vpop.f32.mrb[0].mxu0
    %v1772 = vadd.f32 0.0, %v1771
    %v1773 = vpop.f32.mrb[0].mxu0
    %v1774 = vpop.f32.mrb[0].mxu0
    %v1775 = vadd.f32 0.0, %v1774
    %v1776 = vpop.f32.mrb[0].mxu0
    %1777 = vmatprep.mubr.bf16.mxu0 0
    %1778 = vmatmul.mubr.bf16.gmra.mrb[0].mxu0 %v1714
    %v1779 = vpop.f32.mrb[0].mxu0
    %v1780 = vadd.f32 0.0, %v1779
    %v1781 = vpop.f32.mrb[0].mxu0
    %v1782 = vpop.f32.mrb[0].mxu0
    %v1783 = vadd.f32 0.0, %v1782
    %v1784 = vpop.f32.mrb[0].mxu0
    %1785 = vmatprep.mubr.bf16.mxu0 0
    %1786 = vmatmul.mubr.bf16.gmra.mrb[0].mxu0 %v1717
    %v1787 = vpop.f32.mrb[0].mxu0
    %v1788 = vadd.f32 0.0, %v1787
    %v1789 = vpop.f32.mrb[0].mxu0
    %v1790 = vpop.f32.mrb[0].mxu0
    %v1791 = vadd.f32 0.0, %v1790
    %v1792 = vpop.f32.mrb[0].mxu0
    %1793 = vmatprep.mubr.bf16.mxu0 0
    %1794 = vmatmul.mubr.bf16.gmra.mrb[0].mxu0 %v1720
    %v1795 = vpop.f32.mrb[0].mxu0
    %v1796 = vadd.f32 0.0, %v1795
    %v1797 = vpop.f32.mrb[0].mxu0
    %v1798 = vpop.f32.mrb[0].mxu0
    %v1799 = vadd.f32 0.0, %v1798
    %v1800 = vpop.f32.mrb[0].mxu0
    %1801 = vmatprep.mubr.bf16.mxu0 0
    %1802 = vmatmul.mubr.bf16.gmra.mrb[0].mxu0 %v1723
    %v1803 = vpop.f32.mrb[0].mxu0
    %v1804 = vadd.f32 0.0, %v1803
    %v1805 = vpop.f32.mrb[0].mxu0
    %v1806 = vpop.f32.mrb[0].mxu0
    %v1807 = vadd.f32 0.0, %v1806
    %v1808 = vpop.f32.mrb[0].mxu0
    %1809 = vmatprep.mubr.bf16.mxu0 0
    %1810 = vmatmul.mubr.bf16.gmra.mrb[0].mxu0 %v1726
    %v1811 = vpop.f32.mrb[0].mxu0
    %v1812 = vadd.f32 0.0, %v1811
    %v1813 = vpop.f32.mrb[0].mxu0
    %v1814 = vpop.f32.mrb[0].mxu0
    %v1815 = vadd.f32 0.0, %v1814
    %v1816 = vpop.f32.mrb[0].mxu0
    %1817 = vmatprep.mubr.bf16.mxu0 0
    %1818 = vmatmul.mubr.bf16.gmra.mrb[0].mxu0 %v1729
    %v1819 = vpop.f32.mrb[0].mxu0
    %v1820 = vadd.f32 0.0, %v1819
    %v1821 = vpop.f32.mrb[0].mxu0
    %v1822 = vpop.f32.mrb[0].mxu0
    %v1823 = vadd.f32 0.0, %v1822
    %v1824 = vpop.f32.mrb[0].mxu0
    %1825 = vmatprep.mubr.bf16.mxu0 0
    %1826 = vmatmul.mubr.bf16.gmra.mrb[0].mxu0 %v1732
    %v1827 = vpop.f32.mrb[0].mxu0
    %v1828 = vadd.f32 0.0, %v1827
    %v1829 = vpop.f32.mrb[0].mxu0
    %v1830 = vpop.f32.mrb[0].mxu0
    %v1831 = vadd.f32 0.0, %v1830
    %v1832 = vpop.f32.mrb[0].mxu0
    %1833 = vdwg.mxu0
    %v1834 = vadd.f32 %v1673, %v1772
    %v1835 = vadd.f32 %v1674, %v1775
    %v1836 = vadd.f32 %v1675, %v1780
    %v1837 = vadd.f32 %v1676, %v1783
    %v1838 = vadd.f32 %v1677, %v1788
    %v1839 = vadd.f32 %v1678, %v1791
    %v1840 = vadd.f32 %v1679, %v1796
    %v1841 = vadd.f32 %v1680, %v1799
    %v1842 = vadd.f32 %v1681, %v1804
    %v1843 = vadd.f32 %v1682, %v1807
    %v1844 = vadd.f32 %v1683, %v1812
    %v1845 = vadd.f32 %v1684, %v1815
    %v1846 = vadd.f32 %v1685, %v1820
    %v1847 = vadd.f32 %v1686, %v1823
    %v1848 = vadd.f32 %v1687, %v1828
    %v1849 = vadd.f32 %v1688, %v1831
    %v1850 = vld [vmem:[#allocation7 + $0x18] sm:$0xf]
    %v1853 = vunpack.c.l.b16 %v544
    %v1854 = vunpack.c.l.b16 %v564
    %v1855 = vpack.c.b16 %v1853, %v1360
    %v1856 = vpack.c.b16 %v1854, %v1361
    %v1858 = vsel %vm819, %v1855, 0
    %v1861 = vsel %vm819, %v1856, 0
    %v1864 = vsel %vm844, %v1850, 0
    %1866 = vmatprep.subr.bf16.mxu0 0
    %1867 = vmatpush1.bf16.msra.mxu0 %v1864
    %1868 = vmatprep.subr.bf16.mxu0 0
    %1869 = vmatpush1.bf16.msra.mxu0 0
    %1870 = vmatprep.subr.bf16.mxu0 0
    %1871 = vmatpush1.bf16.msra.mxu0 0
    %1872 = vmatprep.subr.bf16.mxu0 0
    %1873 = vmatpush1.bf16.msra.mxu0 0
    %1874 = vmatprep.subr.bf16.mxu0 0
    %1875 = vmatpush1.bf16.msra.mxu0 0
    %1876 = vmatprep.subr.bf16.mxu0 0
    %1877 = vmatpush1.bf16.msra.mxu0 0
    %1878 = vmatprep.subr.bf16.mxu0 0
    %1879 = vmatpush1.bf16.msra.mxu0 0
    %1880 = vmatprep.subr.bf16.mxu0 0
    %1881 = vmatpush1.bf16.msra.mxu0 0
    %1882 = vmatprep.subr.bf16.mxu0 0
    %1883 = vmatpush1.bf16.msra.mxu0 0
    %1884 = vmatprep.subr.bf16.mxu0 0
    %1885 = vmatpush1.bf16.msra.mxu0 0
    %1886 = vmatprep.subr.bf16.mxu0 0
    %1887 = vmatpush1.bf16.msra.mxu0 0
    %1888 = vmatprep.subr.bf16.mxu0 0
    %1889 = vmatpush1.bf16.msra.mxu0 0
    %1890 = vmatprep.subr.bf16.mxu0 0
    %1891 = vmatpush1.bf16.msra.mxu0 0
    %1892 = vmatprep.subr.bf16.mxu0 0
    %1893 = vmatpush1.bf16.msra.mxu0 0
    %1894 = vmatprep.subr.bf16.mxu0 0
    %1895 = vmatpush1.bf16.msra.mxu0 0
    %1896 = vmatprep.subr.bf16.mxu0 0
    %1897 = vmatpush1.bf16.msra.mxu0 0
    %1898 = vmatprep.mubr.bf16.mxu0 0
    %1899 = vmatmul.mubr.bf16.gmra.mrb[0].mxu0 %v989
    %v1900 = vpop.f32.mrb[0].mxu0
    %v1901 = vadd.f32 0.0, %v1900
    %v1902 = vpop.f32.mrb[0].mxu0
    %v1903 = vpop.f32.mrb[0].mxu0
    %v1904 = vadd.f32 0.0, %v1903
    %v1905 = vpop.f32.mrb[0].mxu0
    %1906 = vmatprep.mubr.bf16.mxu0 0
    %1907 = vmatmul.mubr.bf16.gmra.mrb[0].mxu0 %v992
    %v1908 = vpop.f32.mrb[0].mxu0
    %v1909 = vadd.f32 0.0, %v1908
    %v1910 = vpop.f32.mrb[0].mxu0
    %v1911 = vpop.f32.mrb[0].mxu0
    %v1912 = vadd.f32 0.0, %v1911
    %v1913 = vpop.f32.mrb[0].mxu0
    %1914 = vmatprep.mubr.bf16.mxu0 0
    %1915 = vmatmul.mubr.bf16.gmra.mrb[0].mxu0 %v995
    %v1916 = vpop.f32.mrb[0].mxu0
    %v1917 = vadd.f32 0.0, %v1916
    %v1918 = vpop.f32.mrb[0].mxu0
    %v1919 = vpop.f32.mrb[0].mxu0
    %v1920 = vadd.f32 0.0, %v1919
    %v1921 = vpop.f32.mrb[0].mxu0
    %1922 = vmatprep.mubr.bf16.mxu0 0
    %1923 = vmatmul.mubr.bf16.gmra.mrb[0].mxu0 %v1858
    %v1924 = vpop.f32.mrb[0].mxu0
    %v1925 = vadd.f32 0.0, %v1924
    %v1926 = vpop.f32.mrb[0].mxu0
    %v1927 = vpop.f32.mrb[0].mxu0
    %v1928 = vadd.f32 0.0, %v1927
    %v1929 = vpop.f32.mrb[0].mxu0
    %1930 = vmatprep.mubr.bf16.mxu0 0
    %1931 = vmatmul.mubr.bf16.gmra.mrb[0].mxu0 %v1001
    %v1932 = vpop.f32.mrb[0].mxu0
    %v1933 = vadd.f32 0.0, %v1932
    %v1934 = vpop.f32.mrb[0].mxu0
    %v1935 = vpop.f32.mrb[0].mxu0
    %v1936 = vadd.f32 0.0, %v1935
    %v1937 = vpop.f32.mrb[0].mxu0
    %1938 = vmatprep.mubr.bf16.mxu0 0
    %1939 = vmatmul.mubr.bf16.gmra.mrb[0].mxu0 %v1004
    %v1940 = vpop.f32.mrb[0].mxu0
    %v1941 = vadd.f32 0.0, %v1940
    %v1942 = vpop.f32.mrb[0].mxu0
    %v1943 = vpop.f32.mrb[0].mxu0
    %v1944 = vadd.f32 0.0, %v1943
    %v1945 = vpop.f32.mrb[0].mxu0
    %1946 = vmatprep.mubr.bf16.mxu0 0
    %1947 = vmatmul.mubr.bf16.gmra.mrb[0].mxu0 %v1007
    %v1948 = vpop.f32.mrb[0].mxu0
    %v1949 = vadd.f32 0.0, %v1948
    %v1950 = vpop.f32.mrb[0].mxu0
    %v1951 = vpop.f32.mrb[0].mxu0
    %v1952 = vadd.f32 0.0, %v1951
    %v1953 = vpop.f32.mrb[0].mxu0
    %1954 = vmatprep.mubr.bf16.mxu0 0
    %1955 = vmatmul.mubr.bf16.gmra.mrb[0].mxu0 %v1861
    %v1956 = vpop.f32.mrb[0].mxu0
    %v1957 = vadd.f32 0.0, %v1956
    %v1958 = vpop.f32.mrb[0].mxu0
    %v1959 = vpop.f32.mrb[0].mxu0
    %v1960 = vadd.f32 0.0, %v1959
    %v1961 = vpop.f32.mrb[0].mxu0
    %1962 = vdwg.mxu0
    %v1963 = vadd.f32 %v1834, %v1901
    %v1964 = vadd.f32 %v1835, %v1904
    %v1965 = vadd.f32 %v1836, %v1909
    %v1966 = vadd.f32 %v1837, %v1912
    %v1967 = vadd.f32 %v1838, %v1917
    %v1968 = vadd.f32 %v1839, %v1920
    %v1969 = vadd.f32 %v1840, %v1925
    %v1970 = vadd.f32 %v1841, %v1928
    %v1971 = vadd.f32 %v1842, %v1933
    %v1972 = vadd.f32 %v1843, %v1936
    %v1973 = vadd.f32 %v1844, %v1941
    %v1974 = vadd.f32 %v1845, %v1944
    %v1975 = vadd.f32 %v1846, %v1949
    %v1976 = vadd.f32 %v1847, %v1952
    %v1977 = vadd.f32 %v1848, %v1957
    %v1978 = vadd.f32 %v1849, %v1960
    %v1980 = vshrl.u32 %v544, 16
    %v1982 = vrot.slane %v1980, 4
    %v1983 = vshll.u32 %v544, 16
    %v1985 = vrot.slane %v1983, 5
    %v1986 = vor.u32 %v1982, %v1985
    %v1987 = vrot.slane %v1986, 4
    %v1989 = vshll.u32 %v545, 16
    %v1991 = vrot.slane %v1989, 5
    %v1992 = vsel %vm569, %v1987, %v1991
    %v1994 = vshrl.u32 %v564, 16
    %v1996 = vrot.slane %v1994, 4
    %v1997 = vshll.u32 %v564, 16
    %v1999 = vrot.slane %v1997, 5
    %v2000 = vor.u32 %v1996, %v1999
    %v2001 = vrot.slane %v2000, 4
    %v2003 = vshll.u32 %v565, 16
    %v2005 = vrot.slane %v2003, 5
    %v2006 = vsel %vm569, %v2001, %v2005
    %v2007 = vld [vmem:[#allocation7 + $0x1c] sm:$0xf]
    %v2008 = vunpack.c.l.b16 %v1992
    %v2009 = vunpack.c.l.b16 %v2006
    %v2010 = vpack.c.b16 %v2008, %v1539
    %v2011 = vpack.c.b16 %v2009, %v1540
    %v2013 = vsel %vm819, %v2010, 0
    %v2016 = vsel %vm819, %v2011, 0
    %v2019 = vsel %vm844, %v2007, 0
    %2021 = vmatprep.subr.bf16.mxu0 0
    %2022 = vmatpush1.bf16.msra.mxu0 %v2019
    %2023 = vmatprep.subr.bf16.mxu0 0
    %2024 = vmatpush1.bf16.msra.mxu0 0
    %2025 = vmatprep.subr.bf16.mxu0 0
    %2026 = vmatpush1.bf16.msra.mxu0 0
    %2027 = vmatprep.subr.bf16.mxu0 0
    %2028 = vmatpush1.bf16.msra.mxu0 0
    %2029 = vmatprep.subr.bf16.mxu0 0
    %2030 = vmatpush1.bf16.msra.mxu0 0
    %2031 = vmatprep.subr.bf16.mxu0 0
    %2032 = vmatpush1.bf16.msra.mxu0 0
    %2033 = vmatprep.subr.bf16.mxu0 0
    %2034 = vmatpush1.bf16.msra.mxu0 0
    %2035 = vmatprep.subr.bf16.mxu0 0
    %2036 = vmatpush1.bf16.msra.mxu0 0
    %2037 = vmatprep.subr.bf16.mxu0 0
    %2038 = vmatpush1.bf16.msra.mxu0 0
    %2039 = vmatprep.subr.bf16.mxu0 0
    %2040 = vmatpush1.bf16.msra.mxu0 0
    %2041 = vmatprep.subr.bf16.mxu0 0
    %2042 = vmatpush1.bf16.msra.mxu0 0
    %2043 = vmatprep.subr.bf16.mxu0 0
    %2044 = vmatpush1.bf16.msra.mxu0 0
    %2045 = vmatprep.subr.bf16.mxu0 0
    %2046 = vmatpush1.bf16.msra.mxu0 0
    %2047 = vmatprep.subr.bf16.mxu0 0
    %2048 = vmatpush1.bf16.msra.mxu0 0
    %2049 = vmatprep.subr.bf16.mxu0 0
    %2050 = vmatpush1.bf16.msra.mxu0 0
    %2051 = vmatprep.subr.bf16.mxu0 0
    %2052 = vmatpush1.bf16.msra.mxu0 0
    %2053 = vmatprep.mubr.bf16.mxu0 0
    %2054 = vmatmul.mubr.bf16.gmra.mrb[0].mxu0 %v824
    %v2055 = vpop.f32.mrb[0].mxu0
    %v2056 = vadd.f32 0.0, %v2055
    %v2057 = vpop.f32.mrb[0].mxu0
    %v2058 = vpop.f32.mrb[0].mxu0
    %v2059 = vadd.f32 0.0, %v2058
    %v2060 = vpop.f32.mrb[0].mxu0
    %2061 = vmatprep.mubr.bf16.mxu0 0
    %2062 = vmatmul.mubr.bf16.gmra.mrb[0].mxu0 %v827
    %v2063 = vpop.f32.mrb[0].mxu0
    %v2064 = vadd.f32 0.0, %v2063
    %v2065 = vpop.f32.mrb[0].mxu0
    %v2066 = vpop.f32.mrb[0].mxu0
    %v2067 = vadd.f32 0.0, %v2066
    %v2068 = vpop.f32.mrb[0].mxu0
    %2069 = vmatprep.mubr.bf16.mxu0 0
    %2070 = vmatmul.mubr.bf16.gmra.mrb[0].mxu0 %v830
    %v2071 = vpop.f32.mrb[0].mxu0
    %v2072 = vadd.f32 0.0, %v2071
    %v2073 = vpop.f32.mrb[0].mxu0
    %v2074 = vpop.f32.mrb[0].mxu0
    %v2075 = vadd.f32 0.0, %v2074
    %v2076 = vpop.f32.mrb[0].mxu0
    %2077 = vmatprep.mubr.bf16.mxu0 0
    %2078 = vmatmul.mubr.bf16.gmra.mrb[0].mxu0 %v2013
    %v2079 = vpop.f32.mrb[0].mxu0
    %v2080 = vadd.f32 0.0, %v2079
    %v2081 = vpop.f32.mrb[0].mxu0
    %v2082 = vpop.f32.mrb[0].mxu0
    %v2083 = vadd.f32 0.0, %v2082
    %v2084 = vpop.f32.mrb[0].mxu0
    %2085 = vmatprep.mubr.bf16.mxu0 0
    %2086 = vmatmul.mubr.bf16.gmra.mrb[0].mxu0 %v836
    %v2087 = vpop.f32.mrb[0].mxu0
    %v2088 = vadd.f32 0.0, %v2087
    %v2089 = vpop.f32.mrb[0].mxu0
    %v2090 = vpop.f32.mrb[0].mxu0
    %v2091 = vadd.f32 0.0, %v2090
    %v2092 = vpop.f32.mrb[0].mxu0
    %2093 = vmatprep.mubr.bf16.mxu0 0
    %2094 = vmatmul.mubr.bf16.gmra.mrb[0].mxu0 %v839
    %v2095 = vpop.f32.mrb[0].mxu0
    %v2096 = vadd.f32 0.0, %v2095
    %v2097 = vpop.f32.mrb[0].mxu0
    %v2098 = vpop.f32.mrb[0].mxu0
    %v2099 = vadd.f32 0.0, %v2098
    %v2100 = vpop.f32.mrb[0].mxu0
    %2101 = vmatprep.mubr.bf16.mxu0 0
    %2102 = vmatmul.mubr.bf16.gmra.mrb[0].mxu0 %v842
    %v2103 = vpop.f32.mrb[0].mxu0
    %v2104 = vadd.f32 0.0, %v2103
    %v2105 = vpop.f32.mrb[0].mxu0
    %v2106 = vpop.f32.mrb[0].mxu0
    %v2107 = vadd.f32 0.0, %v2106
    %v2108 = vpop.f32.mrb[0].mxu0
    %2109 = vmatprep.mubr.bf16.mxu0 0
    %2110 = vmatmul.mubr.bf16.gmra.mrb[0].mxu0 %v2016
    %v2111 = vpop.f32.mrb[0].mxu0
    %v2112 = vadd.f32 0.0, %v2111
    %v2113 = vpop.f32.mrb[0].mxu0
    %v2114 = vpop.f32.mrb[0].mxu0
    %v2115 = vadd.f32 0.0, %v2114
    %v2116 = vpop.f32.mrb[0].mxu0
    %2117 = vdwg.mxu0
    %v2118 = vadd.f32 %v1963, %v2056
    %v2119 = vadd.f32 %v1964, %v2059
    %v2120 = vadd.f32 %v1965, %v2064
    %v2121 = vadd.f32 %v1966, %v2067
    %v2122 = vadd.f32 %v1967, %v2072
    %v2123 = vadd.f32 %v1968, %v2075
    %v2124 = vadd.f32 %v1969, %v2080
    %v2125 = vadd.f32 %v1970, %v2083
    %v2126 = vadd.f32 %v1971, %v2088
    %v2127 = vadd.f32 %v1972, %v2091
    %v2128 = vadd.f32 %v1973, %v2096
    %v2129 = vadd.f32 %v1974, %v2099
    %v2130 = vadd.f32 %v1975, %v2104
    %v2131 = vadd.f32 %v1976, %v2107
    %v2132 = vadd.f32 %v1977, %v2112
    %v2133 = vadd.f32 %v1978, %v2115
    %v2136 = vrot.slane %v544, 5
    %v2137 = vrot.slane %v2136, 4
    %v2138 = vrot.slane %v545, 5
    %v2139 = vsel %vm1127, %v2137, %v2138
    %v2140 = vrot.slane %v564, 5
    %v2141 = vrot.slane %v2140, 4
    %v2142 = vrot.slane %v565, 5
    %v2143 = vsel %vm1127, %v2141, %v2142
    %v2144 = vld [vmem:[#allocation7 + $0x20] sm:$0xf]
    %v2145 = vunpack.c.l.b16 %v2139
    %v2146 = vunpack.c.l.b16 %v2143
    %v2147 = vpack.c.b16 %v2145, %v1700
    %v2148 = vpack.c.b16 %v2146, %v1701
    %v2150 = vsel %vm819, %v2147, 0
    %v2153 = vsel %vm819, %v2148, 0
    %v2156 = vsel %vm844, %v2144, 0
    %2158 = vmatprep.subr.bf16.mxu0 0
    %2159 = vmatpush1.bf16.msra.mxu0 %v2156
    %2160 = vmatprep.subr.bf16.mxu0 0
    %2161 = vmatpush1.bf16.msra.mxu0 0
    %2162 = vmatprep.subr.bf16.mxu0 0
    %2163 = vmatpush1.bf16.msra.mxu0 0
    %2164 = vmatprep.subr.bf16.mxu0 0
    %2165 = vmatpush1.bf16.msra.mxu0 0
    %2166 = vmatprep.subr.bf16.mxu0 0
    %2167 = vmatpush1.bf16.msra.mxu0 0
    %2168 = vmatprep.subr.bf16.mxu0 0
    %2169 = vmatpush1.bf16.msra.mxu0 0
    %2170 = vmatprep.subr.bf16.mxu0 0
    %2171 = vmatpush1.bf16.msra.mxu0 0
    %2172 = vmatprep.subr.bf16.mxu0 0
    %2173 = vmatpush1.bf16.msra.mxu0 0
    %2174 = vmatprep.subr.bf16.mxu0 0
    %2175 = vmatpush1.bf16.msra.mxu0 0
    %2176 = vmatprep.subr.bf16.mxu0 0
    %2177 = vmatpush1.bf16.msra.mxu0 0
    %2178 = vmatprep.subr.bf16.mxu0 0
    %2179 = vmatpush1.bf16.msra.mxu0 0
    %2180 = vmatprep.subr.bf16.mxu0 0
    %2181 = vmatpush1.bf16.msra.mxu0 0
    %2182 = vmatprep.subr.bf16.mxu0 0
    %2183 = vmatpush1.bf16.msra.mxu0 0
    %2184 = vmatprep.subr.bf16.mxu0 0
    %2185 = vmatpush1.bf16.msra.mxu0 0
    %2186 = vmatprep.subr.bf16.mxu0 0
    %2187 = vmatpush1.bf16.msra.mxu0 0
    %2188 = vmatprep.subr.bf16.mxu0 0
    %2189 = vmatpush1.bf16.msra.mxu0 0
    %2190 = vmatprep.mubr.bf16.mxu0 0
    %2191 = vmatmul.mubr.bf16.gmra.mrb[0].mxu0 %v1221
    %v2192 = vpop.f32.mrb[0].mxu0
    %v2193 = vadd.f32 0.0, %v2192
    %v2194 = vpop.f32.mrb[0].mxu0
    %v2195 = vpop.f32.mrb[0].mxu0
    %v2196 = vadd.f32 0.0, %v2195
    %v2197 = vpop.f32.mrb[0].mxu0
    %2198 = vmatprep.mubr.bf16.mxu0 0
    %2199 = vmatmul.mubr.bf16.gmra.mrb[0].mxu0 %v1224
    %v2200 = vpop.f32.mrb[0].mxu0
    %v2201 = vadd.f32 0.0, %v2200
    %v2202 = vpop.f32.mrb[0].mxu0
    %v2203 = vpop.f32.mrb[0].mxu0
    %v2204 = vadd.f32 0.0, %v2203
    %v2205 = vpop.f32.mrb[0].mxu0
    %2206 = vmatprep.mubr.bf16.mxu0 0
    %2207 = vmatmul.mubr.bf16.gmra.mrb[0].mxu0 %v1227
    %v2208 = vpop.f32.mrb[0].mxu0
    %v2209 = vadd.f32 0.0, %v2208
    %v2210 = vpop.f32.mrb[0].mxu0
    %v2211 = vpop.f32.mrb[0].mxu0
    %v2212 = vadd.f32 0.0, %v2211
    %v2213 = vpop.f32.mrb[0].mxu0
    %2214 = vmatprep.mubr.bf16.mxu0 0
    %2215 = vmatmul.mubr.bf16.gmra.mrb[0].mxu0 %v2150
    %v2216 = vpop.f32.mrb[0].mxu0
    %v2217 = vadd.f32 0.0, %v2216
    %v2218 = vpop.f32.mrb[0].mxu0
    %v2219 = vpop.f32.mrb[0].mxu0
    %v2220 = vadd.f32 0.0, %v2219
    %v2221 = vpop.f32.mrb[0].mxu0
    %2222 = vmatprep.mubr.bf16.mxu0 0
    %2223 = vmatmul.mubr.bf16.gmra.mrb[0].mxu0 %v1233
    %v2224 = vpop.f32.mrb[0].mxu0
    %v2225 = vadd.f32 0.0, %v2224
    %v2226 = vpop.f32.mrb[0].mxu0
    %v2227 = vpop.f32.mrb[0].mxu0
    %v2228 = vadd.f32 0.0, %v2227
    %v2229 = vpop.f32.mrb[0].mxu0
    %2230 = vmatprep.mubr.bf16.mxu0 0
    %2231 = vmatmul.mubr.bf16.gmra.mrb[0].mxu0 %v1236
    %v2232 = vpop.f32.mrb[0].mxu0
    %v2233 = vadd.f32 0.0, %v2232
    %v2234 = vpop.f32.mrb[0].mxu0
    %v2235 = vpop.f32.mrb[0].mxu0
    %v2236 = vadd.f32 0.0, %v2235
    %v2237 = vpop.f32.mrb[0].mxu0
    %2238 = vmatprep.mubr.bf16.mxu0 0
    %2239 = vmatmul.mubr.bf16.gmra.mrb[0].mxu0 %v1239
    %v2240 = vpop.f32.mrb[0].mxu0
    %v2241 = vadd.f32 0.0, %v2240
    %v2242 = vpop.f32.mrb[0].mxu0
    %v2243 = vpop.f32.mrb[0].mxu0
    %v2244 = vadd.f32 0.0, %v2243
    %v2245 = vpop.f32.mrb[0].mxu0
    %2246 = vmatprep.mubr.bf16.mxu0 0
    %2247 = vmatmul.mubr.bf16.gmra.mrb[0].mxu0 %v2153
    %v2248 = vpop.f32.mrb[0].mxu0
    %v2249 = vadd.f32 0.0, %v2248
    %v2250 = vpop.f32.mrb[0].mxu0
    %v2251 = vpop.f32.mrb[0].mxu0
    %v2252 = vadd.f32 0.0, %v2251
    %v2253 = vpop.f32.mrb[0].mxu0
    %2254 = vdwg.mxu0
    %v2255 = vadd.f32 %v2118, %v2193
    %v2256 = vadd.f32 %v2119, %v2196
    %v2257 = vadd.f32 %v2120, %v2201
    %v2258 = vadd.f32 %v2121, %v2204
    %v2259 = vadd.f32 %v2122, %v2209
    %v2260 = vadd.f32 %v2123, %v2212
    %v2261 = vadd.f32 %v2124, %v2217
    %v2262 = vadd.f32 %v2125, %v2220
    %v2263 = vadd.f32 %v2126, %v2225
    %v2264 = vadd.f32 %v2127, %v2228
    %v2265 = vadd.f32 %v2128, %v2233
    %v2266 = vadd.f32 %v2129, %v2236
    %v2267 = vadd.f32 %v2130, %v2241
    %v2268 = vadd.f32 %v2131, %v2244
    %v2269 = vadd.f32 %v2132, %v2249
    %v2270 = vadd.f32 %v2133, %v2252
    %v2271 = vld [vmem:[#allocation9] sm:$0x1]
    %v2273 = vlaneseq
    %v2274 = vshrl.u32 %v2273, 7
    %v2275 = vsub.s32 0, %v2274
    %v2276 = vrot.slane %v2271, %v2275
    %v2278 = vadd.f32 %v2255, %v2276
    %v2279 = vadd.f32 %v2256, %v2276
    %v2280 = vadd.f32 %v2257, %v2276
    %v2281 = vadd.f32 %v2258, %v2276
    %v2282 = vadd.f32 %v2259, %v2276
    %v2283 = vadd.f32 %v2260, %v2276
    %v2284 = vadd.f32 %v2261, %v2276
    %v2285 = vadd.f32 %v2262, %v2276
    %v2286 = vadd.f32 %v2263, %v2276
    %v2287 = vadd.f32 %v2264, %v2276
    %v2288 = vadd.f32 %v2265, %v2276
    %v2289 = vadd.f32 %v2266, %v2276
    %v2290 = vadd.f32 %v2267, %v2276
    %v2291 = vadd.f32 %v2268, %v2276
    %v2292 = vadd.f32 %v2269, %v2276
    %v2293 = vadd.f32 %v2270, %v2276
    %v2294 = vmax.f32 %v2278, 0.0
    %v2295 = vmax.f32 %v2279, 0.0
    %v2296 = vmax.f32 %v2280, 0.0
    %v2297 = vmax.f32 %v2281, 0.0
    %v2298 = vmax.f32 %v2282, 0.0
    %v2299 = vmax.f32 %v2283, 0.0
    %v2300 = vmax.f32 %v2284, 0.0
    %v2301 = vmax.f32 %v2285, 0.0
    %v2302 = vmax.f32 %v2286, 0.0
    %v2303 = vmax.f32 %v2287, 0.0
    %v2304 = vmax.f32 %v2288, 0.0
    %v2305 = vmax.f32 %v2289, 0.0
    %v2306 = vmax.f32 %v2290, 0.0
    %v2307 = vmax.f32 %v2291, 0.0
    %v2308 = vmax.f32 %v2292, 0.0
    %v2309 = vmax.f32 %v2293, 0.0
    %v2310 = vpack.c.bf16 %v2294, %v2294
    %v2311 = vpack.c.bf16 %v2295, %v2295
    %v2312 = vpack.c.bf16 %v2296, %v2296
    %v2313 = vpack.c.bf16 %v2297, %v2297
    %v2314 = vpack.c.bf16 %v2298, %v2298
    %v2315 = vpack.c.bf16 %v2299, %v2299
    %v2316 = vpack.c.bf16 %v2300, %v2300
    %v2317 = vpack.c.bf16 %v2301, %v2301
    %v2318 = vpack.c.bf16 %v2302, %v2302
    %v2319 = vpack.c.bf16 %v2303, %v2303
    %v2320 = vpack.c.bf16 %v2304, %v2304
    %v2321 = vpack.c.bf16 %v2305, %v2305
    %v2322 = vpack.c.bf16 %v2306, %v2306
    %v2323 = vpack.c.bf16 %v2307, %v2307
    %v2324 = vpack.c.bf16 %v2308, %v2308
    %v2325 = vpack.c.bf16 %v2309, %v2309
    %vm2326 = vcmask 519168
    %2327 = vst.msk [vmem:[#allocation3] sm:$0xf] %vm2326, 0
    %vm2328 = vcmask 516096
    %2329 = vst.msk [vmem:[#allocation3 + $0x4] sm:$0x1] %vm2328, 0
    %2330 = vst.msk [vmem:[#allocation3 + $0x50] sm:$0xf] %vm2326, 0
    %2331 = vst.msk [vmem:[#allocation3 + $0x54] sm:$0x1] %vm2328, 0
    %s2332 = scalar_lea.vmem [#allocation3], 72
    %2333 = vst.msk [vmem:[%s2332] sm:$0xf] %vm2326, 0
    %2334 = vst.msk [vmem:[%s2332 + $0x4] sm:$0x1] %vm2328, 0
    %2335 = vst.msk [vmem:[%s2332 + $0x50] sm:$0xf] %vm2326, 0
    %2336 = vst.msk [vmem:[%s2332 + $0x54] sm:$0x1] %vm2328, 0
    %vm2337 = vcmask 516096
    %vm2338 = vmand %vm2337, %vm143
    %v2339 = vld [vmem:[#allocation3] sm:$0x1]
    %v2340 = vsel %vm2338, 0, %v2339
    %2341 = vst [vmem:[#allocation3] sm:$0x1] %v2340
    %v2342 = vld [vmem:[#allocation3 + $0x8] sm:$0x1]
    %v2343 = vsel %vm2338, 0, %v2342
    %2344 = vst [vmem:[#allocation3 + $0x8] sm:$0x1] %v2343
    %v2345 = vld [vmem:[#allocation3 + $0x10] sm:$0x1]
    %v2346 = vsel %vm2338, 0, %v2345
    %2347 = vst [vmem:[#allocation3 + $0x10] sm:$0x1] %v2346
    %v2348 = vld [vmem:[#allocation3 + $0x18] sm:$0x1]
    %v2349 = vsel %vm2338, 0, %v2348
    %2350 = vst [vmem:[#allocation3 + $0x18] sm:$0x1] %v2349
    %v2351 = vld [vmem:[#allocation3 + $0x20] sm:$0x1]
    %v2352 = vsel %vm2338, 0, %v2351
    %2353 = vst [vmem:[#allocation3 + $0x20] sm:$0x1] %v2352
    %v2354 = vld [vmem:[#allocation3 + $0x28] sm:$0x1]
    %v2355 = vsel %vm2338, 0, %v2354
    %2356 = vst [vmem:[#allocation3 + $0x28] sm:$0x1] %v2355
    %v2357 = vld [vmem:[#allocation3 + $0x30] sm:$0x1]
    %v2358 = vsel %vm2338, 0, %v2357
    %2359 = vst [vmem:[#allocation3 + $0x30] sm:$0x1] %v2358
    %v2360 = vld [vmem:[#allocation3 + $0x38] sm:$0x1]
    %v2361 = vsel %vm2338, 0, %v2360
    %2362 = vst [vmem:[#allocation3 + $0x38] sm:$0x1] %v2361
    %v2363 = vld [vmem:[#allocation3 + $0x40] sm:$0x1]
    %v2364 = vsel %vm2338, 0, %v2363
    %2365 = vst [vmem:[#allocation3 + $0x40] sm:$0x1] %v2364
    %v2366 = vld [vmem:[#allocation3 + $0x48] sm:$0x1]
    %v2367 = vsel %vm2338, 0, %v2366
    %2368 = vst [vmem:[#allocation3 + $0x48] sm:$0x1] %v2367
    %v2369 = vld [vmem:[#allocation3 + $0x50] sm:$0x1]
    %v2370 = vsel %vm2338, 0, %v2369
    %2371 = vst [vmem:[#allocation3 + $0x50] sm:$0x1] %v2370
    %v2372 = vld [vmem:[#allocation3 + $0x58] sm:$0x1]
    %v2373 = vsel %vm2338, 0, %v2372
    %2374 = vst [vmem:[#allocation3 + $0x58] sm:$0x1] %v2373
    %v2375 = vld [vmem:[#allocation3 + $0x60] sm:$0x1]
    %v2376 = vsel %vm2338, 0, %v2375
    %2377 = vst [vmem:[#allocation3 + $0x60] sm:$0x1] %v2376
    %v2378 = vld [vmem:[#allocation3 + $0x68] sm:$0x1]
    %v2379 = vsel %vm2338, 0, %v2378
    %2380 = vst [vmem:[#allocation3 + $0x68] sm:$0x1] %v2379
    %v2381 = vld [vmem:[#allocation3 + $0x70] sm:$0x1]
    %v2382 = vsel %vm2338, 0, %v2381
    %2383 = vst [vmem:[#allocation3 + $0x70] sm:$0x1] %v2382
    %v2384 = vld [vmem:[#allocation3 + $0x78] sm:$0x1]
    %v2385 = vsel %vm2338, 0, %v2384
    %2386 = vst [vmem:[#allocation3 + $0x78] sm:$0x1] %v2385
    %v2387 = vld [vmem:[#allocation3 + $0x80] sm:$0x1]
    %v2388 = vsel %vm2338, 0, %v2387
    %2389 = vst [vmem:[#allocation3 + $0x80] sm:$0x1] %v2388
    %v2390 = vld [vmem:[#allocation3 + $0x88] sm:$0x1]
    %v2391 = vsel %vm2338, 0, %v2390
    %2392 = vst [vmem:[#allocation3 + $0x88] sm:$0x1] %v2391
    %v2393 = vld [vmem:[#allocation3 + $0x90] sm:$0x1]
    %v2394 = vsel %vm2338, 0, %v2393
    %2395 = vst [vmem:[#allocation3 + $0x90] sm:$0x1] %v2394
    %v2396 = vld [vmem:[#allocation3 + $0x98] sm:$0x1]
    %v2397 = vsel %vm2338, 0, %v2396
    %2398 = vst [vmem:[#allocation3 + $0x98] sm:$0x1] %v2397
    %vm2399 = vmand %vm2337, %vm205
    %v2400 = vld [vmem:[#allocation3 + $0x4] sm:$0x1]
    %v2401 = vsel %vm2399, 0, %v2400
    %2402 = vst [vmem:[#allocation3 + $0x4] sm:$0x1] %v2401
    %v2403 = vld [vmem:[#allocation3 + $0xc] sm:$0x1]
    %v2404 = vsel %vm2399, 0, %v2403
    %2405 = vst [vmem:[#allocation3 + $0xc] sm:$0x1] %v2404
    %v2406 = vld [vmem:[#allocation3 + $0x14] sm:$0x1]
    %v2407 = vsel %vm2399, 0, %v2406
    %2408 = vst [vmem:[#allocation3 + $0x14] sm:$0x1] %v2407
    %v2409 = vld [vmem:[#allocation3 + $0x1c] sm:$0x1]
    %v2410 = vsel %vm2399, 0, %v2409
    %2411 = vst [vmem:[#allocation3 + $0x1c] sm:$0x1] %v2410
    %v2412 = vld [vmem:[#allocation3 + $0x24] sm:$0x1]
    %v2413 = vsel %vm2399, 0, %v2412
    %2414 = vst [vmem:[#allocation3 + $0x24] sm:$0x1] %v2413
    %v2415 = vld [vmem:[#allocation3 + $0x2c] sm:$0x1]
    %v2416 = vsel %vm2399, 0, %v2415
    %2417 = vst [vmem:[#allocation3 + $0x2c] sm:$0x1] %v2416
    %v2418 = vld [vmem:[#allocation3 + $0x34] sm:$0x1]
    %v2419 = vsel %vm2399, 0, %v2418
    %2420 = vst [vmem:[#allocation3 + $0x34] sm:$0x1] %v2419
    %v2421 = vld [vmem:[#allocation3 + $0x3c] sm:$0x1]
    %v2422 = vsel %vm2399, 0, %v2421
    %2423 = vst [vmem:[#allocation3 + $0x3c] sm:$0x1] %v2422
    %v2424 = vld [vmem:[#allocation3 + $0x44] sm:$0x1]
    %v2425 = vsel %vm2399, 0, %v2424
    %2426 = vst [vmem:[#allocation3 + $0x44] sm:$0x1] %v2425
    %v2427 = vld [vmem:[#allocation3 + $0x4c] sm:$0x1]
    %v2428 = vsel %vm2399, 0, %v2427
    %2429 = vst [vmem:[#allocation3 + $0x4c] sm:$0x1] %v2428
    %v2430 = vld [vmem:[#allocation3 + $0x54] sm:$0x1]
    %v2431 = vsel %vm2399, 0, %v2430
    %2432 = vst [vmem:[#allocation3 + $0x54] sm:$0x1] %v2431
    %v2433 = vld [vmem:[#allocation3 + $0x5c] sm:$0x1]
    %v2434 = vsel %vm2399, 0, %v2433
    %2435 = vst [vmem:[#allocation3 + $0x5c] sm:$0x1] %v2434
    %v2436 = vld [vmem:[#allocation3 + $0x64] sm:$0x1]
    %v2437 = vsel %vm2399, 0, %v2436
    %2438 = vst [vmem:[#allocation3 + $0x64] sm:$0x1] %v2437
    %v2439 = vld [vmem:[#allocation3 + $0x6c] sm:$0x1]
    %v2440 = vsel %vm2399, 0, %v2439
    %2441 = vst [vmem:[#allocation3 + $0x6c] sm:$0x1] %v2440
    %v2442 = vld [vmem:[#allocation3 + $0x74] sm:$0x1]
    %v2443 = vsel %vm2399, 0, %v2442
    %2444 = vst [vmem:[#allocation3 + $0x74] sm:$0x1] %v2443
    %v2445 = vld [vmem:[#allocation3 + $0x7c] sm:$0x1]
    %v2446 = vsel %vm2399, 0, %v2445
    %2447 = vst [vmem:[#allocation3 + $0x7c] sm:$0x1] %v2446
    %v2448 = vld [vmem:[#allocation3 + $0x84] sm:$0x1]
    %v2449 = vsel %vm2399, 0, %v2448
    %2450 = vst [vmem:[#allocation3 + $0x84] sm:$0x1] %v2449
    %v2451 = vld [vmem:[#allocation3 + $0x8c] sm:$0x1]
    %v2452 = vsel %vm2399, 0, %v2451
    %2453 = vst [vmem:[#allocation3 + $0x8c] sm:$0x1] %v2452
    %v2454 = vld [vmem:[#allocation3 + $0x94] sm:$0x1]
    %v2455 = vsel %vm2399, 0, %v2454
    %2456 = vst [vmem:[#allocation3 + $0x94] sm:$0x1] %v2455
    %v2457 = vld [vmem:[#allocation3 + $0x9c] sm:$0x1]
    %v2458 = vsel %vm2399, 0, %v2457
    %2459 = vst [vmem:[#allocation3 + $0x9c] sm:$0x1] %v2458
    %v2476 = vunpack.c.l.b16 %v2310
    %v2477 = vunpack.c.l.b16 %v2311
    %v2478 = vunpack.c.l.b16 %v2312
    %v2479 = vunpack.c.l.b16 %v2313
    %v2480 = vunpack.c.l.b16 %v2314
    %v2481 = vunpack.c.l.b16 %v2315
    %v2482 = vunpack.c.l.b16 %v2316
    %v2483 = vunpack.c.l.b16 %v2317
    %v2484 = vunpack.c.l.b16 %v2318
    %v2485 = vunpack.c.l.b16 %v2319
    %v2486 = vunpack.c.l.b16 %v2320
    %v2487 = vunpack.c.l.b16 %v2321
    %v2488 = vunpack.c.l.b16 %v2322
    %v2489 = vunpack.c.l.b16 %v2323
    %v2490 = vunpack.c.l.b16 %v2324
    %v2491 = vunpack.c.l.b16 %v2325
    %v2492 = vpack.c.b16 %v2476, %v2476
    %v2493 = vpack.c.b16 %v2477, %v2477
    %v2494 = vpack.c.b16 %v2478, %v2478
    %v2495 = vpack.c.b16 %v2479, %v2479
    %v2496 = vpack.c.b16 %v2480, %v2480
    %v2497 = vpack.c.b16 %v2481, %v2481
    %v2498 = vpack.c.b16 %v2482, %v2482
    %v2499 = vpack.c.b16 %v2483, %v2483
    %v2500 = vpack.c.b16 %v2484, %v2484
    %v2501 = vpack.c.b16 %v2485, %v2485
    %v2502 = vpack.c.b16 %v2486, %v2486
    %v2503 = vpack.c.b16 %v2487, %v2487
    %v2504 = vpack.c.b16 %v2488, %v2488
    %v2505 = vpack.c.b16 %v2489, %v2489
    %v2506 = vpack.c.b16 %v2490, %v2490
    %v2507 = vpack.c.b16 %v2491, %v2491
    %v2509 = vshrl.u32 %v2492, 16
    %v2511 = vrot.slane %v2509, 7
    %v2512 = vshll.u32 %v2492, 16
    %v2514 = vor.u32 %v2511, %v2512
    %v2515 = vrot.slane %v2511, 4
    %v2517 = vshrl.u32 %v2493, 16
    %v2519 = vrot.slane %v2517, 7
    %v2520 = vshll.u32 %v2493, 16
    %v2522 = vor.u32 %v2519, %v2520
    %v2523 = vrot.slane %v2519, 4
    %v2525 = vshrl.u32 %v2494, 16
    %v2527 = vrot.slane %v2525, 7
    %v2528 = vshll.u32 %v2494, 16
    %v2530 = vor.u32 %v2527, %v2528
    %v2531 = vrot.slane %v2527, 4
    %v2533 = vshrl.u32 %v2495, 16
    %v2535 = vrot.slane %v2533, 7
    %v2536 = vshll.u32 %v2495, 16
    %v2538 = vor.u32 %v2535, %v2536
    %v2539 = vrot.slane %v2535, 4
    %v2541 = vshrl.u32 %v2496, 16
    %v2543 = vrot.slane %v2541, 7
    %v2544 = vshll.u32 %v2496, 16
    %v2546 = vor.u32 %v2543, %v2544
    %v2547 = vrot.slane %v2543, 4
    %v2549 = vshrl.u32 %v2497, 16
    %v2551 = vrot.slane %v2549, 7
    %v2552 = vshll.u32 %v2497, 16
    %v2554 = vor.u32 %v2551, %v2552
    %v2555 = vrot.slane %v2551, 4
    %v2557 = vshrl.u32 %v2498, 16
    %v2559 = vrot.slane %v2557, 7
    %v2560 = vshll.u32 %v2498, 16
    %v2562 = vor.u32 %v2559, %v2560
    %v2563 = vrot.slane %v2559, 4
    %v2565 = vshrl.u32 %v2499, 16
    %v2567 = vrot.slane %v2565, 7
    %v2568 = vshll.u32 %v2499, 16
    %v2570 = vor.u32 %v2567, %v2568
    %v2571 = vrot.slane %v2567, 4
    %v2573 = vshrl.u32 %v2500, 16
    %v2575 = vrot.slane %v2573, 7
    %v2576 = vshll.u32 %v2500, 16
    %v2578 = vor.u32 %v2575, %v2576
    %v2579 = vrot.slane %v2575, 4
    %v2581 = vshrl.u32 %v2501, 16
    %v2583 = vrot.slane %v2581, 7
    %v2584 = vshll.u32 %v2501, 16
    %v2586 = vor.u32 %v2583, %v2584
    %v2587 = vrot.slane %v2583, 4
    %v2589 = vshrl.u32 %v2502, 16
    %v2591 = vrot.slane %v2589, 7
    %v2592 = vshll.u32 %v2502, 16
    %v2594 = vor.u32 %v2591, %v2592
    %v2595 = vrot.slane %v2591, 4
    %v2597 = vshrl.u32 %v2503, 16
    %v2599 = vrot.slane %v2597, 7
    %v2600 = vshll.u32 %v2503, 16
    %v2602 = vor.u32 %v2599, %v2600
    %v2603 = vrot.slane %v2599, 4
    %v2605 = vshrl.u32 %v2504, 16
    %v2607 = vrot.slane %v2605, 7
    %v2608 = vshll.u32 %v2504, 16
    %v2610 = vor.u32 %v2607, %v2608
    %v2611 = vrot.slane %v2607, 4
    %v2613 = vshrl.u32 %v2505, 16
    %v2615 = vrot.slane %v2613, 7
    %v2616 = vshll.u32 %v2505, 16
    %v2618 = vor.u32 %v2615, %v2616
    %v2619 = vrot.slane %v2615, 4
    %v2621 = vshrl.u32 %v2506, 16
    %v2623 = vrot.slane %v2621, 7
    %v2624 = vshll.u32 %v2506, 16
    %v2626 = vor.u32 %v2623, %v2624
    %v2627 = vrot.slane %v2623, 4
    %v2629 = vshrl.u32 %v2507, 16
    %v2631 = vrot.slane %v2629, 7
    %v2632 = vshll.u32 %v2507, 16
    %v2634 = vor.u32 %v2631, %v2632
    %v2635 = vrot.slane %v2631, 4
    %s2668 = scalar_lea.vmem [#allocation3], 8
    %vm2669 = vcmask 519168
    %vm2670 = vmand %vm2669, %vm205
    %v2671 = vld [vmem:[%s2668] sm:$0xf]
    %v2672 = vsel %vm2670, %v2514, %v2671
    %2673 = vst [vmem:[%s2668] sm:$0xf] %v2672
    %v2674 = vld [vmem:[%s2668 + $0x4] sm:$0x1]
    %v2675 = vsel %vm2338, %v2515, %v2674
    %2676 = vst [vmem:[%s2668 + $0x4] sm:$0x1] %v2675
    %v2677 = vld [vmem:[%s2668 + $0x8] sm:$0xf]
    %v2678 = vsel %vm2670, %v2522, %v2677
    %2679 = vst [vmem:[%s2668 + $0x8] sm:$0xf] %v2678
    %v2680 = vld [vmem:[%s2668 + $0xc] sm:$0x1]
    %v2681 = vsel %vm2338, %v2523, %v2680
    %2682 = vst [vmem:[%s2668 + $0xc] sm:$0x1] %v2681
    %v2683 = vld [vmem:[%s2668 + $0x10] sm:$0xf]
    %v2684 = vsel %vm2670, %v2530, %v2683
    %2685 = vst [vmem:[%s2668 + $0x10] sm:$0xf] %v2684
    %v2686 = vld [vmem:[%s2668 + $0x14] sm:$0x1]
    %v2687 = vsel %vm2338, %v2531, %v2686
    %2688 = vst [vmem:[%s2668 + $0x14] sm:$0x1] %v2687
    %v2689 = vld [vmem:[%s2668 + $0x18] sm:$0xf]
    %v2690 = vsel %vm2670, %v2538, %v2689
    %2691 = vst [vmem:[%s2668 + $0x18] sm:$0xf] %v2690
    %v2692 = vld [vmem:[%s2668 + $0x1c] sm:$0x1]
    %v2693 = vsel %vm2338, %v2539, %v2692
    %2694 = vst [vmem:[%s2668 + $0x1c] sm:$0x1] %v2693
    %v2695 = vld [vmem:[%s2668 + $0x20] sm:$0xf]
    %v2696 = vsel %vm2670, %v2546, %v2695
    %2697 = vst [vmem:[%s2668 + $0x20] sm:$0xf] %v2696
    %v2698 = vld [vmem:[%s2668 + $0x24] sm:$0x1]
    %v2699 = vsel %vm2338, %v2547, %v2698
    %2700 = vst [vmem:[%s2668 + $0x24] sm:$0x1] %v2699
    %v2701 = vld [vmem:[%s2668 + $0x28] sm:$0xf]
    %v2702 = vsel %vm2670, %v2554, %v2701
    %2703 = vst [vmem:[%s2668 + $0x28] sm:$0xf] %v2702
    %v2704 = vld [vmem:[%s2668 + $0x2c] sm:$0x1]
    %v2705 = vsel %vm2338, %v2555, %v2704
    %2706 = vst [vmem:[%s2668 + $0x2c] sm:$0x1] %v2705
    %v2707 = vld [vmem:[%s2668 + $0x30] sm:$0xf]
    %v2708 = vsel %vm2670, %v2562, %v2707
    %2709 = vst [vmem:[%s2668 + $0x30] sm:$0xf] %v2708
    %v2710 = vld [vmem:[%s2668 + $0x34] sm:$0x1]
    %v2711 = vsel %vm2338, %v2563, %v2710
    %2712 = vst [vmem:[%s2668 + $0x34] sm:$0x1] %v2711
    %v2713 = vld [vmem:[%s2668 + $0x38] sm:$0xf]
    %v2714 = vsel %vm2670, %v2570, %v2713
    %2715 = vst [vmem:[%s2668 + $0x38] sm:$0xf] %v2714
    %v2716 = vld [vmem:[%s2668 + $0x3c] sm:$0x1]
    %v2717 = vsel %vm2338, %v2571, %v2716
    %2718 = vst [vmem:[%s2668 + $0x3c] sm:$0x1] %v2717
    %v2719 = vld [vmem:[%s2668 + $0x50] sm:$0xf]
    %v2720 = vsel %vm2670, %v2578, %v2719
    %2721 = vst [vmem:[%s2668 + $0x50] sm:$0xf] %v2720
    %v2722 = vld [vmem:[%s2668 + $0x54] sm:$0x1]
    %v2723 = vsel %vm2338, %v2579, %v2722
    %2724 = vst [vmem:[%s2668 + $0x54] sm:$0x1] %v2723
    %v2725 = vld [vmem:[%s2668 + $0x58] sm:$0xf]
    %v2726 = vsel %vm2670, %v2586, %v2725
    %2727 = vst [vmem:[%s2668 + $0x58] sm:$0xf] %v2726
    %v2728 = vld [vmem:[%s2668 + $0x5c] sm:$0x1]
    %v2729 = vsel %vm2338, %v2587, %v2728
    %2730 = vst [vmem:[%s2668 + $0x5c] sm:$0x1] %v2729
    %v2731 = vld [vmem:[%s2668 + $0x60] sm:$0xf]
    %v2732 = vsel %vm2670, %v2594, %v2731
    %2733 = vst [vmem:[%s2668 + $0x60] sm:$0xf] %v2732
    %v2734 = vld [vmem:[%s2668 + $0x64] sm:$0x1]
    %v2735 = vsel %vm2338, %v2595, %v2734
    %2736 = vst [vmem:[%s2668 + $0x64] sm:$0x1] %v2735
    %v2737 = vld [vmem:[%s2668 + $0x68] sm:$0xf]
    %v2738 = vsel %vm2670, %v2602, %v2737
    %2739 = vst [vmem:[%s2668 + $0x68] sm:$0xf] %v2738
    %v2740 = vld [vmem:[%s2668 + $0x6c] sm:$0x1]
    %v2741 = vsel %vm2338, %v2603, %v2740
    %2742 = vst [vmem:[%s2668 + $0x6c] sm:$0x1] %v2741
    %v2743 = vld [vmem:[%s2668 + $0x70] sm:$0xf]
    %v2744 = vsel %vm2670, %v2610, %v2743
    %2745 = vst [vmem:[%s2668 + $0x70] sm:$0xf] %v2744
    %v2746 = vld [vmem:[%s2668 + $0x74] sm:$0x1]
    %v2747 = vsel %vm2338, %v2611, %v2746
    %2748 = vst [vmem:[%s2668 + $0x74] sm:$0x1] %v2747
    %v2749 = vld [vmem:[%s2668 + $0x78] sm:$0xf]
    %v2750 = vsel %vm2670, %v2618, %v2749
    %2751 = vst [vmem:[%s2668 + $0x78] sm:$0xf] %v2750
    %v2752 = vld [vmem:[%s2668 + $0x7c] sm:$0x1]
    %v2753 = vsel %vm2338, %v2619, %v2752
    %2754 = vst [vmem:[%s2668 + $0x7c] sm:$0x1] %v2753
    %v2755 = vld [vmem:[%s2668 + $0x80] sm:$0xf]
    %v2756 = vsel %vm2670, %v2626, %v2755
    %2757 = vst [vmem:[%s2668 + $0x80] sm:$0xf] %v2756
    %v2758 = vld [vmem:[%s2668 + $0x84] sm:$0x1]
    %v2759 = vsel %vm2338, %v2627, %v2758
    %2760 = vst [vmem:[%s2668 + $0x84] sm:$0x1] %v2759
    %v2761 = vld [vmem:[%s2668 + $0x88] sm:$0xf]
    %v2762 = vsel %vm2670, %v2634, %v2761
    %2763 = vst [vmem:[%s2668 + $0x88] sm:$0xf] %v2762
    %v2764 = vld [vmem:[%s2668 + $0x8c] sm:$0x1]
    %v2765 = vsel %vm2338, %v2635, %v2764
    %2766 = vst [vmem:[%s2668 + $0x8c] sm:$0x1] %v2765
    %v2767 = vld [vmem:[#allocation3] sm:$0xf]
    %v2768 = vld [vmem:[#allocation3 + $0x4] sm:$0x1]
    %v2769 = vld [vmem:[#allocation3 + $0x8] sm:$0xf]
    %v2770 = vld [vmem:[#allocation3 + $0xc] sm:$0x1]
    %v2771 = vld [vmem:[#allocation3 + $0x10] sm:$0xf]
    %v2772 = vld [vmem:[#allocation3 + $0x14] sm:$0x1]
    %v2773 = vld [vmem:[#allocation3 + $0x18] sm:$0xf]
    %v2774 = vld [vmem:[#allocation3 + $0x1c] sm:$0x1]
    %v2775 = vld [vmem:[#allocation3 + $0x20] sm:$0xf]
    %v2776 = vld [vmem:[#allocation3 + $0x24] sm:$0x1]
    %v2777 = vld [vmem:[#allocation3 + $0x28] sm:$0xf]
    %v2778 = vld [vmem:[#allocation3 + $0x2c] sm:$0x1]
    %v2779 = vld [vmem:[#allocation3 + $0x30] sm:$0xf]
    %v2780 = vld [vmem:[#allocation3 + $0x34] sm:$0x1]
    %v2781 = vld [vmem:[#allocation3 + $0x38] sm:$0xf]
    %v2782 = vld [vmem:[#allocation3 + $0x3c] sm:$0x1]
    %v2783 = vld [vmem:[#allocation3 + $0x40] sm:$0xf]
    %v2784 = vld [vmem:[#allocation3 + $0x44] sm:$0x1]
    %v2785 = vld [vmem:[#allocation3 + $0x48] sm:$0xf]
    %v2786 = vld [vmem:[#allocation3 + $0x4c] sm:$0x1]
    %v2787 = vld [vmem:[#allocation3 + $0x50] sm:$0xf]
    %v2788 = vld [vmem:[#allocation3 + $0x54] sm:$0x1]
    %v2789 = vld [vmem:[#allocation3 + $0x58] sm:$0xf]
    %v2790 = vld [vmem:[#allocation3 + $0x5c] sm:$0x1]
    %v2791 = vld [vmem:[#allocation3 + $0x60] sm:$0xf]
    %v2792 = vld [vmem:[#allocation3 + $0x64] sm:$0x1]
    %v2793 = vld [vmem:[#allocation3 + $0x68] sm:$0xf]
    %v2794 = vld [vmem:[#allocation3 + $0x6c] sm:$0x1]
    %v2795 = vld [vmem:[#allocation3 + $0x70] sm:$0xf]
    %v2796 = vld [vmem:[#allocation3 + $0x74] sm:$0x1]
    %v2797 = vld [vmem:[#allocation3 + $0x78] sm:$0xf]
    %v2798 = vld [vmem:[#allocation3 + $0x7c] sm:$0x1]
    %v2799 = vld [vmem:[#allocation3 + $0x80] sm:$0xf]
    %v2800 = vld [vmem:[#allocation3 + $0x84] sm:$0x1]
    %v2801 = vld [vmem:[#allocation3 + $0x88] sm:$0xf]
    %v2802 = vld [vmem:[#allocation3 + $0x8c] sm:$0x1]
    %v2803 = vld [vmem:[#allocation3 + $0x90] sm:$0xf]
    %v2804 = vld [vmem:[#allocation3 + $0x94] sm:$0x1]
    %v2805 = vld [vmem:[#allocation3 + $0x98] sm:$0xf]
    %v2806 = vld [vmem:[#allocation3 + $0x9c] sm:$0x1]
    %v2807 = vld [vmem:[#allocation10] sm:$0xf]
    %v2808 = vld [vmem:[#allocation10 + $0x4] sm:$0xf]
    %v2809 = vld [vmem:[#allocation10 + $0x8] sm:$0xf]
    %v2810 = vld [vmem:[#allocation10 + $0xc] sm:$0xf]
    %v2811 = vld [vmem:[#allocation10 + $0x10] sm:$0xf]
    %v2812 = vld [vmem:[#allocation10 + $0x14] sm:$0xf]
    %v2813 = vld [vmem:[#allocation10 + $0x18] sm:$0xf]
    %v2814 = vld [vmem:[#allocation10 + $0x1c] sm:$0xf]
    %v2816 = vshrl.u32 %v2767, 16
    %v2818 = vrot.slane %v2816, 4
    %v2819 = vshll.u32 %v2767, 16
    %v2821 = vrot.slane %v2819, 5
    %v2822 = vor.u32 %v2818, %v2821
    %v2823 = vrot.slane %v2822, 4
    %v2825 = vshll.u32 %v2768, 16
    %v2827 = vrot.slane %v2825, 5
    %v2828 = vsel %vm569, %v2823, %v2827
    %v2830 = vshrl.u32 %v2769, 16
    %v2832 = vrot.slane %v2830, 4
    %v2833 = vshll.u32 %v2769, 16
    %v2835 = vrot.slane %v2833, 5
    %v2836 = vor.u32 %v2832, %v2835
    %v2837 = vrot.slane %v2836, 4
    %v2839 = vshll.u32 %v2770, 16
    %v2841 = vrot.slane %v2839, 5
    %v2842 = vsel %vm569, %v2837, %v2841
    %v2844 = vshrl.u32 %v2771, 16
    %v2846 = vrot.slane %v2844, 4
    %v2847 = vshll.u32 %v2771, 16
    %v2849 = vrot.slane %v2847, 5
    %v2850 = vor.u32 %v2846, %v2849
    %v2851 = vrot.slane %v2850, 4
    %v2853 = vshll.u32 %v2772, 16
    %v2855 = vrot.slane %v2853, 5
    %v2856 = vsel %vm569, %v2851, %v2855
    %v2858 = vshrl.u32 %v2773, 16
    %v2860 = vrot.slane %v2858, 4
    %v2861 = vshll.u32 %v2773, 16
    %v2863 = vrot.slane %v2861, 5
    %v2864 = vor.u32 %v2860, %v2863
    %v2865 = vrot.slane %v2864, 4
    %v2867 = vshll.u32 %v2774, 16
    %v2869 = vrot.slane %v2867, 5
    %v2870 = vsel %vm569, %v2865, %v2869
    %v2872 = vshrl.u32 %v2775, 16
    %v2874 = vrot.slane %v2872, 4
    %v2875 = vshll.u32 %v2775, 16
    %v2877 = vrot.slane %v2875, 5
    %v2878 = vor.u32 %v2874, %v2877
    %v2879 = vrot.slane %v2878, 4
    %v2881 = vshll.u32 %v2776, 16
    %v2883 = vrot.slane %v2881, 5
    %v2884 = vsel %vm569, %v2879, %v2883
    %v2886 = vshrl.u32 %v2777, 16
    %v2888 = vrot.slane %v2886, 4
    %v2889 = vshll.u32 %v2777, 16
    %v2891 = vrot.slane %v2889, 5
    %v2892 = vor.u32 %v2888, %v2891
    %v2893 = vrot.slane %v2892, 4
    %v2895 = vshll.u32 %v2778, 16
    %v2897 = vrot.slane %v2895, 5
    %v2898 = vsel %vm569, %v2893, %v2897
    %v2900 = vshrl.u32 %v2779, 16
    %v2902 = vrot.slane %v2900, 4
    %v2903 = vshll.u32 %v2779, 16
    %v2905 = vrot.slane %v2903, 5
    %v2906 = vor.u32 %v2902, %v2905
    %v2907 = vrot.slane %v2906, 4
    %v2909 = vshll.u32 %v2780, 16
    %v2911 = vrot.slane %v2909, 5
    %v2912 = vsel %vm569, %v2907, %v2911
    %v2914 = vshrl.u32 %v2781, 16
    %v2916 = vrot.slane %v2914, 4
    %v2917 = vshll.u32 %v2781, 16
    %v2919 = vrot.slane %v2917, 5
    %v2920 = vor.u32 %v2916, %v2919
    %v2921 = vrot.slane %v2920, 4
    %v2923 = vshll.u32 %v2782, 16
    %v2925 = vrot.slane %v2923, 5
    %v2926 = vsel %vm569, %v2921, %v2925
    %v2928 = vshrl.u32 %v2787, 16
    %v2930 = vrot.slane %v2928, 4
    %v2931 = vshll.u32 %v2787, 16
    %v2933 = vrot.slane %v2931, 5
    %v2934 = vor.u32 %v2930, %v2933
    %v2935 = vrot.slane %v2934, 4
    %v2937 = vshll.u32 %v2788, 16
    %v2939 = vrot.slane %v2937, 5
    %v2940 = vsel %vm569, %v2935, %v2939
    %v2942 = vshrl.u32 %v2789, 16
    %v2944 = vrot.slane %v2942, 4
    %v2945 = vshll.u32 %v2789, 16
    %v2947 = vrot.slane %v2945, 5
    %v2948 = vor.u32 %v2944, %v2947
    %v2949 = vrot.slane %v2948, 4
    %v2951 = vshll.u32 %v2790, 16
    %v2953 = vrot.slane %v2951, 5
    %v2954 = vsel %vm569, %v2949, %v2953
    %v2956 = vshrl.u32 %v2791, 16
    %v2958 = vrot.slane %v2956, 4
    %v2959 = vshll.u32 %v2791, 16
    %v2961 = vrot.slane %v2959, 5
    %v2962 = vor.u32 %v2958, %v2961
    %v2963 = vrot.slane %v2962, 4
    %v2965 = vshll.u32 %v2792, 16
    %v2967 = vrot.slane %v2965, 5
    %v2968 = vsel %vm569, %v2963, %v2967
    %v2970 = vshrl.u32 %v2793, 16
    %v2972 = vrot.slane %v2970, 4
    %v2973 = vshll.u32 %v2793, 16
    %v2975 = vrot.slane %v2973, 5
    %v2976 = vor.u32 %v2972, %v2975
    %v2977 = vrot.slane %v2976, 4
    %v2979 = vshll.u32 %v2794, 16
    %v2981 = vrot.slane %v2979, 5
    %v2982 = vsel %vm569, %v2977, %v2981
    %v2984 = vshrl.u32 %v2795, 16
    %v2986 = vrot.slane %v2984, 4
    %v2987 = vshll.u32 %v2795, 16
    %v2989 = vrot.slane %v2987, 5
    %v2990 = vor.u32 %v2986, %v2989
    %v2991 = vrot.slane %v2990, 4
    %v2993 = vshll.u32 %v2796, 16
    %v2995 = vrot.slane %v2993, 5
    %v2996 = vsel %vm569, %v2991, %v2995
    %v2998 = vshrl.u32 %v2797, 16
    %v3000 = vrot.slane %v2998, 4
    %v3001 = vshll.u32 %v2797, 16
    %v3003 = vrot.slane %v3001, 5
    %v3004 = vor.u32 %v3000, %v3003
    %v3005 = vrot.slane %v3004, 4
    %v3007 = vshll.u32 %v2798, 16
    %v3009 = vrot.slane %v3007, 5
    %v3010 = vsel %vm569, %v3005, %v3009
    %v3012 = vshrl.u32 %v2799, 16
    %v3014 = vrot.slane %v3012, 4
    %v3015 = vshll.u32 %v2799, 16
    %v3017 = vrot.slane %v3015, 5
    %v3018 = vor.u32 %v3014, %v3017
    %v3019 = vrot.slane %v3018, 4
    %v3021 = vshll.u32 %v2800, 16
    %v3023 = vrot.slane %v3021, 5
    %v3024 = vsel %vm569, %v3019, %v3023
    %v3026 = vshrl.u32 %v2801, 16
    %v3028 = vrot.slane %v3026, 4
    %v3029 = vshll.u32 %v2801, 16
    %v3031 = vrot.slane %v3029, 5
    %v3032 = vor.u32 %v3028, %v3031
    %v3033 = vrot.slane %v3032, 4
    %v3035 = vshll.u32 %v2802, 16
    %v3037 = vrot.slane %v3035, 5
    %v3038 = vsel %vm569, %v3033, %v3037
    %v3039 = vld [vmem:[#allocation10 + $0x20] sm:$0xf]
    %v3040 = vld [vmem:[#allocation10 + $0x24] sm:$0xf]
    %v3041 = vld [vmem:[#allocation10 + $0x28] sm:$0xf]
    %v3042 = vld [vmem:[#allocation10 + $0x2c] sm:$0xf]
    %v3043 = vld [vmem:[#allocation10 + $0x30] sm:$0xf]
    %v3044 = vld [vmem:[#allocation10 + $0x34] sm:$0xf]
    %v3045 = vld [vmem:[#allocation10 + $0x38] sm:$0xf]
    %v3046 = vld [vmem:[#allocation10 + $0x3c] sm:$0xf]
    %v3047 = vunpack.c.l.b16 %v2828
    %v3048 = vunpack.c.l.b16 %v2842
    %v3049 = vunpack.c.l.b16 %v2856
    %v3050 = vunpack.c.l.b16 %v2870
    %v3051 = vunpack.c.l.b16 %v2884
    %v3052 = vunpack.c.l.b16 %v2898
    %v3053 = vunpack.c.l.b16 %v2912
    %v3054 = vunpack.c.l.b16 %v2926
    %v3055 = vunpack.c.l.b16 %v2940
    %v3056 = vunpack.c.l.b16 %v2954
    %v3057 = vunpack.c.l.b16 %v2968
    %v3058 = vunpack.c.l.b16 %v2982
    %v3059 = vunpack.c.l.b16 %v2996
    %v3060 = vunpack.c.l.b16 %v3010
    %v3061 = vunpack.c.l.b16 %v3024
    %v3062 = vunpack.c.l.b16 %v3038
    %v3063 = vpack.c.b16 %v3048, %v3047
    %v3064 = vpack.c.b16 %v3050, %v3049
    %v3065 = vpack.c.b16 %v3052, %v3051
    %v3066 = vpack.c.b16 %v3054, %v3053
    %v3067 = vpack.c.b16 %v3056, %v3055
    %v3068 = vpack.c.b16 %v3058, %v3057
    %v3069 = vpack.c.b16 %v3060, %v3059
    %v3070 = vpack.c.b16 %v3062, %v3061
    %v3079 = vunpack.c.l.b16 %v3039
    %v3080 = vunpack.c.l.b16 %v3040
    %v3081 = vunpack.c.l.b16 %v3041
    %v3082 = vunpack.c.l.b16 %v3042
    %v3083 = vunpack.c.l.b16 %v3043
    %v3084 = vunpack.c.l.b16 %v3044
    %v3085 = vunpack.c.l.b16 %v3045
    %v3086 = vunpack.c.l.b16 %v3046
    %v3087 = vpack.c.b16 %v3080, %v3079
    %v3088 = vpack.c.b16 %v3082, %v3081
    %v3089 = vpack.c.b16 %v3084, %v3083
    %v3090 = vpack.c.b16 %v3086, %v3085
    %vm3095 = vcmask 523264
    %v3097 = vsel %vm3095, %v3063, 0
    %v3100 = vsel %vm3095, %v3064, 0
    %v3103 = vsel %vm3095, %v3065, 0
    %v3106 = vsel %vm3095, %v3066, 0
    %v3109 = vsel %vm3095, %v3067, 0
    %v3112 = vsel %vm3095, %v3068, 0
    %v3115 = vsel %vm3095, %v3069, 0
    %v3118 = vsel %vm3095, %v3070, 0
    %3120 = vmatprep.subr.bf16.mxu0 0
    %3121 = vmatpush1.bf16.msra.mxu0 %v3087
    %3122 = vmatprep.subr.bf16.mxu0 0
    %3123 = vmatpush1.bf16.msra.mxu0 %v3088
    %3124 = vmatprep.subr.bf16.mxu0 0
    %3125 = vmatpush1.bf16.msra.mxu0 %v3089
    %3126 = vmatprep.subr.bf16.mxu0 0
    %3127 = vmatpush1.bf16.msra.mxu0 %v3090
    %3128 = vmatprep.subr.bf16.mxu0 0
    %3129 = vmatpush1.bf16.msra.mxu0 0
    %3130 = vmatprep.subr.bf16.mxu0 0
    %3131 = vmatpush1.bf16.msra.mxu0 0
    %3132 = vmatprep.subr.bf16.mxu0 0
    %3133 = vmatpush1.bf16.msra.mxu0 0
    %3134 = vmatprep.subr.bf16.mxu0 0
    %3135 = vmatpush1.bf16.msra.mxu0 0
    %3136 = vmatprep.subr.bf16.mxu0 0
    %3137 = vmatpush1.bf16.msra.mxu0 0
    %3138 = vmatprep.subr.bf16.mxu0 0
    %3139 = vmatpush1.bf16.msra.mxu0 0
    %3140 = vmatprep.subr.bf16.mxu0 0
    %3141 = vmatpush1.bf16.msra.mxu0 0
    %3142 = vmatprep.subr.bf16.mxu0 0
    %3143 = vmatpush1.bf16.msra.mxu0 0
    %3144 = vmatprep.subr.bf16.mxu0 0
    %3145 = vmatpush1.bf16.msra.mxu0 0
    %3146 = vmatprep.subr.bf16.mxu0 0
    %3147 = vmatpush1.bf16.msra.mxu0 0
    %3148 = vmatprep.subr.bf16.mxu0 0
    %3149 = vmatpush1.bf16.msra.mxu0 0
    %3150 = vmatprep.subr.bf16.mxu0 0
    %3151 = vmatpush1.bf16.msra.mxu0 0
    %3152 = vmatprep.mubr.bf16.mxu0 0
    %3153 = vmatmul.mubr.bf16.gmra.mrb[0].mxu0 %v3097
    %v3154 = vpop.f32.mrb[0].mxu0
    %v3155 = vadd.f32 0.0, %v3154
    %v3156 = vpop.f32.mrb[0].mxu0
    %v3157 = vpop.f32.mrb[0].mxu0
    %v3158 = vadd.f32 0.0, %v3157
    %v3159 = vpop.f32.mrb[0].mxu0
    %3160 = vmatprep.mubr.bf16.mxu0 0
    %3161 = vmatmul.mubr.bf16.gmra.mrb[0].mxu0 %v3100
    %v3162 = vpop.f32.mrb[0].mxu0
    %v3163 = vadd.f32 0.0, %v3162
    %v3164 = vpop.f32.mrb[0].mxu0
    %v3165 = vpop.f32.mrb[0].mxu0
    %v3166 = vadd.f32 0.0, %v3165
    %v3167 = vpop.f32.mrb[0].mxu0
    %3168 = vmatprep.mubr.bf16.mxu0 0
    %3169 = vmatmul.mubr.bf16.gmra.mrb[0].mxu0 %v3103
    %v3170 = vpop.f32.mrb[0].mxu0
    %v3171 = vadd.f32 0.0, %v3170
    %v3172 = vpop.f32.mrb[0].mxu0
    %v3173 = vpop.f32.mrb[0].mxu0
    %v3174 = vadd.f32 0.0, %v3173
    %v3175 = vpop.f32.mrb[0].mxu0
    %3176 = vmatprep.mubr.bf16.mxu0 0
    %3177 = vmatmul.mubr.bf16.gmra.mrb[0].mxu0 %v3106
    %v3178 = vpop.f32.mrb[0].mxu0
    %v3179 = vadd.f32 0.0, %v3178
    %v3180 = vpop.f32.mrb[0].mxu0
    %v3181 = vpop.f32.mrb[0].mxu0
    %v3182 = vadd.f32 0.0, %v3181
    %v3183 = vpop.f32.mrb[0].mxu0
    %3184 = vmatprep.mubr.bf16.mxu0 0
    %3185 = vmatmul.mubr.bf16.gmra.mrb[0].mxu0 %v3109
    %v3186 = vpop.f32.mrb[0].mxu0
    %v3187 = vadd.f32 0.0, %v3186
    %v3188 = vpop.f32.mrb[0].mxu0
    %v3189 = vpop.f32.mrb[0].mxu0
    %v3190 = vadd.f32 0.0, %v3189
    %v3191 = vpop.f32.mrb[0].mxu0
    %3192 = vmatprep.mubr.bf16.mxu0 0
    %3193 = vmatmul.mubr.bf16.gmra.mrb[0].mxu0 %v3112
    %v3194 = vpop.f32.mrb[0].mxu0
    %v3195 = vadd.f32 0.0, %v3194
    %v3196 = vpop.f32.mrb[0].mxu0
    %v3197 = vpop.f32.mrb[0].mxu0
    %v3198 = vadd.f32 0.0, %v3197
    %v3199 = vpop.f32.mrb[0].mxu0
    %3200 = vmatprep.mubr.bf16.mxu0 0
    %3201 = vmatmul.mubr.bf16.gmra.mrb[0].mxu0 %v3115
    %v3202 = vpop.f32.mrb[0].mxu0
    %v3203 = vadd.f32 0.0, %v3202
    %v3204 = vpop.f32.mrb[0].mxu0
    %v3205 = vpop.f32.mrb[0].mxu0
    %v3206 = vadd.f32 0.0, %v3205
    %v3207 = vpop.f32.mrb[0].mxu0
    %3208 = vmatprep.mubr.bf16.mxu0 0
    %3209 = vmatmul.mubr.bf16.gmra.mrb[0].mxu0 %v3118
    %v3210 = vpop.f32.mrb[0].mxu0
    %v3211 = vadd.f32 0.0, %v3210
    %v3212 = vpop.f32.mrb[0].mxu0
    %v3213 = vpop.f32.mrb[0].mxu0
    %v3214 = vadd.f32 0.0, %v3213
    %v3215 = vpop.f32.mrb[0].mxu0
    %3216 = vdwg.mxu0
    %v3233 = vunpack.c.l.b16 %v2767
    %v3234 = vunpack.c.l.b16 %v2769
    %v3235 = vunpack.c.l.b16 %v2771
    %v3236 = vunpack.c.l.b16 %v2773
    %v3237 = vunpack.c.l.b16 %v2775
    %v3238 = vunpack.c.l.b16 %v2777
    %v3239 = vunpack.c.l.b16 %v2779
    %v3240 = vunpack.c.l.b16 %v2781
    %v3241 = vunpack.c.l.b16 %v2787
    %v3242 = vunpack.c.l.b16 %v2789
    %v3243 = vunpack.c.l.b16 %v2791
    %v3244 = vunpack.c.l.b16 %v2793
    %v3245 = vunpack.c.l.b16 %v2795
    %v3246 = vunpack.c.l.b16 %v2797
    %v3247 = vunpack.c.l.b16 %v2799
    %v3248 = vunpack.c.l.b16 %v2801
    %v3249 = vpack.c.b16 %v3234, %v3233
    %v3250 = vpack.c.b16 %v3236, %v3235
    %v3251 = vpack.c.b16 %v3238, %v3237
    %v3252 = vpack.c.b16 %v3240, %v3239
    %v3253 = vpack.c.b16 %v3242, %v3241
    %v3254 = vpack.c.b16 %v3244, %v3243
    %v3255 = vpack.c.b16 %v3246, %v3245
    %v3256 = vpack.c.b16 %v3248, %v3247
    %v3265 = vunpack.c.l.b16 %v2807
    %v3266 = vunpack.c.l.b16 %v2808
    %v3267 = vunpack.c.l.b16 %v2809
    %v3268 = vunpack.c.l.b16 %v2810
    %v3269 = vunpack.c.l.b16 %v2811
    %v3270 = vunpack.c.l.b16 %v2812
    %v3271 = vunpack.c.l.b16 %v2813
    %v3272 = vunpack.c.l.b16 %v2814
    %v3273 = vpack.c.b16 %v3266, %v3265
    %v3274 = vpack.c.b16 %v3268, %v3267
    %v3275 = vpack.c.b16 %v3270, %v3269
    %v3276 = vpack.c.b16 %v3272, %v3271
    %v3282 = vsel %vm3095, %v3249, 0
    %v3285 = vsel %vm3095, %v3250, 0
    %v3288 = vsel %vm3095, %v3251, 0
    %v3291 = vsel %vm3095, %v3252, 0
    %v3294 = vsel %vm3095, %v3253, 0
    %v3297 = vsel %vm3095, %v3254, 0
    %v3300 = vsel %vm3095, %v3255, 0
    %v3303 = vsel %vm3095, %v3256, 0
    %3305 = vmatprep.subr.bf16.mxu0 0
    %3306 = vmatpush1.bf16.msra.mxu0 %v3273
    %3307 = vmatprep.subr.bf16.mxu0 0
    %3308 = vmatpush1.bf16.msra.mxu0 %v3274
    %3309 = vmatprep.subr.bf16.mxu0 0
    %3310 = vmatpush1.bf16.msra.mxu0 %v3275
    %3311 = vmatprep.subr.bf16.mxu0 0
    %3312 = vmatpush1.bf16.msra.mxu0 %v3276
    %3313 = vmatprep.subr.bf16.mxu0 0
    %3314 = vmatpush1.bf16.msra.mxu0 0
    %3315 = vmatprep.subr.bf16.mxu0 0
    %3316 = vmatpush1.bf16.msra.mxu0 0
    %3317 = vmatprep.subr.bf16.mxu0 0
    %3318 = vmatpush1.bf16.msra.mxu0 0
    %3319 = vmatprep.subr.bf16.mxu0 0
    %3320 = vmatpush1.bf16.msra.mxu0 0
    %3321 = vmatprep.subr.bf16.mxu0 0
    %3322 = vmatpush1.bf16.msra.mxu0 0
    %3323 = vmatprep.subr.bf16.mxu0 0
    %3324 = vmatpush1.bf16.msra.mxu0 0
    %3325 = vmatprep.subr.bf16.mxu0 0
    %3326 = vmatpush1.bf16.msra.mxu0 0
    %3327 = vmatprep.subr.bf16.mxu0 0
    %3328 = vmatpush1.bf16.msra.mxu0 0
    %3329 = vmatprep.subr.bf16.mxu0 0
    %3330 = vmatpush1.bf16.msra.mxu0 0
    %3331 = vmatprep.subr.bf16.mxu0 0
    %3332 = vmatpush1.bf16.msra.mxu0 0
    %3333 = vmatprep.subr.bf16.mxu0 0
    %3334 = vmatpush1.bf16.msra.mxu0 0
    %3335 = vmatprep.subr.bf16.mxu0 0
    %3336 = vmatpush1.bf16.msra.mxu0 0
    %3337 = vmatprep.mubr.bf16.mxu0 0
    %3338 = vmatmul.mubr.bf16.gmra.mrb[0].mxu0 %v3282
    %v3339 = vpop.f32.mrb[0].mxu0
    %v3340 = vadd.f32 %v3155, %v3339
    %v3341 = vpop.f32.mrb[0].mxu0
    %v3342 = vpop.f32.mrb[0].mxu0
    %v3343 = vadd.f32 %v3158, %v3342
    %v3344 = vpop.f32.mrb[0].mxu0
    %3345 = vmatprep.mubr.bf16.mxu0 0
    %3346 = vmatmul.mubr.bf16.gmra.mrb[0].mxu0 %v3285
    %v3347 = vpop.f32.mrb[0].mxu0
    %v3348 = vadd.f32 %v3163, %v3347
    %v3349 = vpop.f32.mrb[0].mxu0
    %v3350 = vpop.f32.mrb[0].mxu0
    %v3351 = vadd.f32 %v3166, %v3350
    %v3352 = vpop.f32.mrb[0].mxu0
    %3353 = vmatprep.mubr.bf16.mxu0 0
    %3354 = vmatmul.mubr.bf16.gmra.mrb[0].mxu0 %v3288
    %v3355 = vpop.f32.mrb[0].mxu0
    %v3356 = vadd.f32 %v3171, %v3355
    %v3357 = vpop.f32.mrb[0].mxu0
    %v3358 = vpop.f32.mrb[0].mxu0
    %v3359 = vadd.f32 %v3174, %v3358
    %v3360 = vpop.f32.mrb[0].mxu0
    %3361 = vmatprep.mubr.bf16.mxu0 0
    %3362 = vmatmul.mubr.bf16.gmra.mrb[0].mxu0 %v3291
    %v3363 = vpop.f32.mrb[0].mxu0
    %v3364 = vadd.f32 %v3179, %v3363
    %v3365 = vpop.f32.mrb[0].mxu0
    %v3366 = vpop.f32.mrb[0].mxu0
    %v3367 = vadd.f32 %v3182, %v3366
    %v3368 = vpop.f32.mrb[0].mxu0
    %3369 = vmatprep.mubr.bf16.mxu0 0
    %3370 = vmatmul.mubr.bf16.gmra.mrb[0].mxu0 %v3294
    %v3371 = vpop.f32.mrb[0].mxu0
    %v3372 = vadd.f32 %v3187, %v3371
    %v3373 = vpop.f32.mrb[0].mxu0
    %v3374 = vpop.f32.mrb[0].mxu0
    %v3375 = vadd.f32 %v3190, %v3374
    %v3376 = vpop.f32.mrb[0].mxu0
    %3377 = vmatprep.mubr.bf16.mxu0 0
    %3378 = vmatmul.mubr.bf16.gmra.mrb[0].mxu0 %v3297
    %v3379 = vpop.f32.mrb[0].mxu0
    %v3380 = vadd.f32 %v3195, %v3379
    %v3381 = vpop.f32.mrb[0].mxu0
    %v3382 = vpop.f32.mrb[0].mxu0
    %v3383 = vadd.f32 %v3198, %v3382
    %v3384 = vpop.f32.mrb[0].mxu0
    %3385 = vmatprep.mubr.bf16.mxu0 0
    %3386 = vmatmul.mubr.bf16.gmra.mrb[0].mxu0 %v3300
    %v3387 = vpop.f32.mrb[0].mxu0
    %v3388 = vadd.f32 %v3203, %v3387
    %v3389 = vpop.f32.mrb[0].mxu0
    %v3390 = vpop.f32.mrb[0].mxu0
    %v3391 = vadd.f32 %v3206, %v3390
    %v3392 = vpop.f32.mrb[0].mxu0
    %3393 = vmatprep.mubr.bf16.mxu0 0
    %3394 = vmatmul.mubr.bf16.gmra.mrb[0].mxu0 %v3303
    %v3395 = vpop.f32.mrb[0].mxu0
    %v3396 = vadd.f32 %v3211, %v3395
    %v3397 = vpop.f32.mrb[0].mxu0
    %v3398 = vpop.f32.mrb[0].mxu0
    %v3399 = vadd.f32 %v3214, %v3398
    %v3400 = vpop.f32.mrb[0].mxu0
    %3401 = vdwg.mxu0
    %v3418 = vrot.slane %v2767, 5
    %v3419 = vrot.slane %v3418, 4
    %v3420 = vrot.slane %v2768, 5
    %v3421 = vsel %vm1127, %v3419, %v3420
    %v3422 = vrot.slane %v2769, 5
    %v3423 = vrot.slane %v3422, 4
    %v3424 = vrot.slane %v2770, 5
    %v3425 = vsel %vm1127, %v3423, %v3424
    %v3426 = vrot.slane %v2771, 5
    %v3427 = vrot.slane %v3426, 4
    %v3428 = vrot.slane %v2772, 5
    %v3429 = vsel %vm1127, %v3427, %v3428
    %v3430 = vrot.slane %v2773, 5
    %v3431 = vrot.slane %v3430, 4
    %v3432 = vrot.slane %v2774, 5
    %v3433 = vsel %vm1127, %v3431, %v3432
    %v3434 = vrot.slane %v2775, 5
    %v3435 = vrot.slane %v3434, 4
    %v3436 = vrot.slane %v2776, 5
    %v3437 = vsel %vm1127, %v3435, %v3436
    %v3438 = vrot.slane %v2777, 5
    %v3439 = vrot.slane %v3438, 4
    %v3440 = vrot.slane %v2778, 5
    %v3441 = vsel %vm1127, %v3439, %v3440
    %v3442 = vrot.slane %v2779, 5
    %v3443 = vrot.slane %v3442, 4
    %v3444 = vrot.slane %v2780, 5
    %v3445 = vsel %vm1127, %v3443, %v3444
    %v3446 = vrot.slane %v2781, 5
    %v3447 = vrot.slane %v3446, 4
    %v3448 = vrot.slane %v2782, 5
    %v3449 = vsel %vm1127, %v3447, %v3448
    %v3450 = vrot.slane %v2787, 5
    %v3451 = vrot.slane %v3450, 4
    %v3452 = vrot.slane %v2788, 5
    %v3453 = vsel %vm1127, %v3451, %v3452
    %v3454 = vrot.slane %v2789, 5
    %v3455 = vrot.slane %v3454, 4
    %v3456 = vrot.slane %v2790, 5
    %v3457 = vsel %vm1127, %v3455, %v3456
    %v3458 = vrot.slane %v2791, 5
    %v3459 = vrot.slane %v3458, 4
    %v3460 = vrot.slane %v2792, 5
    %v3461 = vsel %vm1127, %v3459, %v3460
    %v3462 = vrot.slane %v2793, 5
    %v3463 = vrot.slane %v3462, 4
    %v3464 = vrot.slane %v2794, 5
    %v3465 = vsel %vm1127, %v3463, %v3464
    %v3466 = vrot.slane %v2795, 5
    %v3467 = vrot.slane %v3466, 4
    %v3468 = vrot.slane %v2796, 5
    %v3469 = vsel %vm1127, %v3467, %v3468
    %v3470 = vrot.slane %v2797, 5
    %v3471 = vrot.slane %v3470, 4
    %v3472 = vrot.slane %v2798, 5
    %v3473 = vsel %vm1127, %v3471, %v3472
    %v3474 = vrot.slane %v2799, 5
    %v3475 = vrot.slane %v3474, 4
    %v3476 = vrot.slane %v2800, 5
    %v3477 = vsel %vm1127, %v3475, %v3476
    %v3478 = vrot.slane %v2801, 5
    %v3479 = vrot.slane %v3478, 4
    %v3480 = vrot.slane %v2802, 5
    %v3481 = vsel %vm1127, %v3479, %v3480
    %v3482 = vld [vmem:[#allocation10 + $0x40] sm:$0xf]
    %v3483 = vld [vmem:[#allocation10 + $0x44] sm:$0xf]
    %v3484 = vld [vmem:[#allocation10 + $0x48] sm:$0xf]
    %v3485 = vld [vmem:[#allocation10 + $0x4c] sm:$0xf]
    %v3486 = vld [vmem:[#allocation10 + $0x50] sm:$0xf]
    %v3487 = vld [vmem:[#allocation10 + $0x54] sm:$0xf]
    %v3488 = vld [vmem:[#allocation10 + $0x58] sm:$0xf]
    %v3489 = vld [vmem:[#allocation10 + $0x5c] sm:$0xf]
    %v3490 = vunpack.c.l.b16 %v3421
    %v3491 = vunpack.c.l.b16 %v3425
    %v3492 = vunpack.c.l.b16 %v3429
    %v3493 = vunpack.c.l.b16 %v3433
    %v3494 = vunpack.c.l.b16 %v3437
    %v3495 = vunpack.c.l.b16 %v3441
    %v3496 = vunpack.c.l.b16 %v3445
    %v3497 = vunpack.c.l.b16 %v3449
    %v3498 = vunpack.c.l.b16 %v3453
    %v3499 = vunpack.c.l.b16 %v3457
    %v3500 = vunpack.c.l.b16 %v3461
    %v3501 = vunpack.c.l.b16 %v3465
    %v3502 = vunpack.c.l.b16 %v3469
    %v3503 = vunpack.c.l.b16 %v3473
    %v3504 = vunpack.c.l.b16 %v3477
    %v3505 = vunpack.c.l.b16 %v3481
    %v3506 = vpack.c.b16 %v3491, %v3490
    %v3507 = vpack.c.b16 %v3493, %v3492
    %v3508 = vpack.c.b16 %v3495, %v3494
    %v3509 = vpack.c.b16 %v3497, %v3496
    %v3510 = vpack.c.b16 %v3499, %v3498
    %v3511 = vpack.c.b16 %v3501, %v3500
    %v3512 = vpack.c.b16 %v3503, %v3502
    %v3513 = vpack.c.b16 %v3505, %v3504
    %v3522 = vunpack.c.l.b16 %v3482
    %v3523 = vunpack.c.l.b16 %v3483
    %v3524 = vunpack.c.l.b16 %v3484
    %v3525 = vunpack.c.l.b16 %v3485
    %v3526 = vunpack.c.l.b16 %v3486
    %v3527 = vunpack.c.l.b16 %v3487
    %v3528 = vunpack.c.l.b16 %v3488
    %v3529 = vunpack.c.l.b16 %v3489
    %v3530 = vpack.c.b16 %v3523, %v3522
    %v3531 = vpack.c.b16 %v3525, %v3524
    %v3532 = vpack.c.b16 %v3527, %v3526
    %v3533 = vpack.c.b16 %v3529, %v3528
    %v3539 = vsel %vm3095, %v3506, 0
    %v3542 = vsel %vm3095, %v3507, 0
    %v3545 = vsel %vm3095, %v3508, 0
    %v3548 = vsel %vm3095, %v3509, 0
    %v3551 = vsel %vm3095, %v3510, 0
    %v3554 = vsel %vm3095, %v3511, 0
    %v3557 = vsel %vm3095, %v3512, 0
    %v3560 = vsel %vm3095, %v3513, 0
    %3562 = vmatprep.subr.bf16.mxu0 0
    %3563 = vmatpush1.bf16.msra.mxu0 %v3530
    %3564 = vmatprep.subr.bf16.mxu0 0
    %3565 = vmatpush1.bf16.msra.mxu0 %v3531
    %3566 = vmatprep.subr.bf16.mxu0 0
    %3567 = vmatpush1.bf16.msra.mxu0 %v3532
    %3568 = vmatprep.subr.bf16.mxu0 0
    %3569 = vmatpush1.bf16.msra.mxu0 %v3533
    %3570 = vmatprep.subr.bf16.mxu0 0
    %3571 = vmatpush1.bf16.msra.mxu0 0
    %3572 = vmatprep.subr.bf16.mxu0 0
    %3573 = vmatpush1.bf16.msra.mxu0 0
    %3574 = vmatprep.subr.bf16.mxu0 0
    %3575 = vmatpush1.bf16.msra.mxu0 0
    %3576 = vmatprep.subr.bf16.mxu0 0
    %3577 = vmatpush1.bf16.msra.mxu0 0
    %3578 = vmatprep.subr.bf16.mxu0 0
    %3579 = vmatpush1.bf16.msra.mxu0 0
    %3580 = vmatprep.subr.bf16.mxu0 0
    %3581 = vmatpush1.bf16.msra.mxu0 0
    %3582 = vmatprep.subr.bf16.mxu0 0
    %3583 = vmatpush1.bf16.msra.mxu0 0
    %3584 = vmatprep.subr.bf16.mxu0 0
    %3585 = vmatpush1.bf16.msra.mxu0 0
    %3586 = vmatprep.subr.bf16.mxu0 0
    %3587 = vmatpush1.bf16.msra.mxu0 0
    %3588 = vmatprep.subr.bf16.mxu0 0
    %3589 = vmatpush1.bf16.msra.mxu0 0
    %3590 = vmatprep.subr.bf16.mxu0 0
    %3591 = vmatpush1.bf16.msra.mxu0 0
    %3592 = vmatprep.subr.bf16.mxu0 0
    %3593 = vmatpush1.bf16.msra.mxu0 0
    %3594 = vmatprep.mubr.bf16.mxu0 0
    %3595 = vmatmul.mubr.bf16.gmra.mrb[0].mxu0 %v3539
    %v3596 = vpop.f32.mrb[0].mxu0
    %v3597 = vadd.f32 0.0, %v3596
    %v3598 = vpop.f32.mrb[0].mxu0
    %v3599 = vpop.f32.mrb[0].mxu0
    %v3600 = vadd.f32 0.0, %v3599
    %v3601 = vpop.f32.mrb[0].mxu0
    %3602 = vmatprep.mubr.bf16.mxu0 0
    %3603 = vmatmul.mubr.bf16.gmra.mrb[0].mxu0 %v3542
    %v3604 = vpop.f32.mrb[0].mxu0
    %v3605 = vadd.f32 0.0, %v3604
    %v3606 = vpop.f32.mrb[0].mxu0
    %v3607 = vpop.f32.mrb[0].mxu0
    %v3608 = vadd.f32 0.0, %v3607
    %v3609 = vpop.f32.mrb[0].mxu0
    %3610 = vmatprep.mubr.bf16.mxu0 0
    %3611 = vmatmul.mubr.bf16.gmra.mrb[0].mxu0 %v3545
    %v3612 = vpop.f32.mrb[0].mxu0
    %v3613 = vadd.f32 0.0, %v3612
    %v3614 = vpop.f32.mrb[0].mxu0
    %v3615 = vpop.f32.mrb[0].mxu0
    %v3616 = vadd.f32 0.0, %v3615
    %v3617 = vpop.f32.mrb[0].mxu0
    %3618 = vmatprep.mubr.bf16.mxu0 0
    %3619 = vmatmul.mubr.bf16.gmra.mrb[0].mxu0 %v3548
    %v3620 = vpop.f32.mrb[0].mxu0
    %v3621 = vadd.f32 0.0, %v3620
    %v3622 = vpop.f32.mrb[0].mxu0
    %v3623 = vpop.f32.mrb[0].mxu0
    %v3624 = vadd.f32 0.0, %v3623
    %v3625 = vpop.f32.mrb[0].mxu0
    %3626 = vmatprep.mubr.bf16.mxu0 0
    %3627 = vmatmul.mubr.bf16.gmra.mrb[0].mxu0 %v3551
    %v3628 = vpop.f32.mrb[0].mxu0
    %v3629 = vadd.f32 0.0, %v3628
    %v3630 = vpop.f32.mrb[0].mxu0
    %v3631 = vpop.f32.mrb[0].mxu0
    %v3632 = vadd.f32 0.0, %v3631
    %v3633 = vpop.f32.mrb[0].mxu0
    %3634 = vmatprep.mubr.bf16.mxu0 0
    %3635 = vmatmul.mubr.bf16.gmra.mrb[0].mxu0 %v3554
    %v3636 = vpop.f32.mrb[0].mxu0
    %v3637 = vadd.f32 0.0, %v3636
    %v3638 = vpop.f32.mrb[0].mxu0
    %v3639 = vpop.f32.mrb[0].mxu0
    %v3640 = vadd.f32 0.0, %v3639
    %v3641 = vpop.f32.mrb[0].mxu0
    %3642 = vmatprep.mubr.bf16.mxu0 0
    %3643 = vmatmul.mubr.bf16.gmra.mrb[0].mxu0 %v3557
    %v3644 = vpop.f32.mrb[0].mxu0
    %v3645 = vadd.f32 0.0, %v3644
    %v3646 = vpop.f32.mrb[0].mxu0
    %v3647 = vpop.f32.mrb[0].mxu0
    %v3648 = vadd.f32 0.0, %v3647
    %v3649 = vpop.f32.mrb[0].mxu0
    %3650 = vmatprep.mubr.bf16.mxu0 0
    %3651 = vmatmul.mubr.bf16.gmra.mrb[0].mxu0 %v3560
    %v3652 = vpop.f32.mrb[0].mxu0
    %v3653 = vadd.f32 0.0, %v3652
    %v3654 = vpop.f32.mrb[0].mxu0
    %v3655 = vpop.f32.mrb[0].mxu0
    %v3656 = vadd.f32 0.0, %v3655
    %v3657 = vpop.f32.mrb[0].mxu0
    %3658 = vdwg.mxu0
    %v3659 = vadd.f32 %v3340, %v3597
    %v3660 = vadd.f32 %v3343, %v3600
    %v3661 = vadd.f32 %v3348, %v3605
    %v3662 = vadd.f32 %v3351, %v3608
    %v3663 = vadd.f32 %v3356, %v3613
    %v3664 = vadd.f32 %v3359, %v3616
    %v3665 = vadd.f32 %v3364, %v3621
    %v3666 = vadd.f32 %v3367, %v3624
    %v3667 = vadd.f32 %v3372, %v3629
    %v3668 = vadd.f32 %v3375, %v3632
    %v3669 = vadd.f32 %v3380, %v3637
    %v3670 = vadd.f32 %v3383, %v3640
    %v3671 = vadd.f32 %v3388, %v3645
    %v3672 = vadd.f32 %v3391, %v3648
    %v3673 = vadd.f32 %v3396, %v3653
    %v3674 = vadd.f32 %v3399, %v3656
    %v3675 = vld [vmem:[#allocation10 + $0x60] sm:$0xf]
    %v3676 = vld [vmem:[#allocation10 + $0x64] sm:$0xf]
    %v3677 = vld [vmem:[#allocation10 + $0x68] sm:$0xf]
    %v3678 = vld [vmem:[#allocation10 + $0x6c] sm:$0xf]
    %v3679 = vld [vmem:[#allocation10 + $0x70] sm:$0xf]
    %v3680 = vld [vmem:[#allocation10 + $0x74] sm:$0xf]
    %v3681 = vld [vmem:[#allocation10 + $0x78] sm:$0xf]
    %v3682 = vld [vmem:[#allocation10 + $0x7c] sm:$0xf]
    %v3685 = vunpack.c.l.b16 %v2783
    %v3686 = vunpack.c.l.b16 %v2803
    %v3687 = vpack.c.b16 %v3235, %v3234
    %v3688 = vpack.c.b16 %v3237, %v3236
    %v3689 = vpack.c.b16 %v3239, %v3238
    %v3690 = vpack.c.b16 %v3685, %v3240
    %v3691 = vpack.c.b16 %v3243, %v3242
    %v3692 = vpack.c.b16 %v3245, %v3244
    %v3693 = vpack.c.b16 %v3247, %v3246
    %v3694 = vpack.c.b16 %v3686, %v3248
    %v3703 = vunpack.c.l.b16 %v3675
    %v3704 = vunpack.c.l.b16 %v3676
    %v3705 = vunpack.c.l.b16 %v3677
    %v3706 = vunpack.c.l.b16 %v3678
    %v3707 = vunpack.c.l.b16 %v3679
    %v3708 = vunpack.c.l.b16 %v3680
    %v3709 = vunpack.c.l.b16 %v3681
    %v3710 = vunpack.c.l.b16 %v3682
    %v3711 = vpack.c.b16 %v3704, %v3703
    %v3712 = vpack.c.b16 %v3706, %v3705
    %v3713 = vpack.c.b16 %v3708, %v3707
    %v3714 = vpack.c.b16 %v3710, %v3709
    %v3720 = vsel %vm3095, %v3687, 0
    %v3723 = vsel %vm3095, %v3688, 0
    %v3726 = vsel %vm3095, %v3689, 0
    %v3729 = vsel %vm3095, %v3690, 0
    %v3732 = vsel %vm3095, %v3691, 0
    %v3735 = vsel %vm3095, %v3692, 0
    %v3738 = vsel %vm3095, %v3693, 0
    %v3741 = vsel %vm3095, %v3694, 0
    %3743 = vmatprep.subr.bf16.mxu0 0
    %3744 = vmatpush1.bf16.msra.mxu0 %v3711
    %3745 = vmatprep.subr.bf16.mxu0 0
    %3746 = vmatpush1.bf16.msra.mxu0 %v3712
    %3747 = vmatprep.subr.bf16.mxu0 0
    %3748 = vmatpush1.bf16.msra.mxu0 %v3713
    %3749 = vmatprep.subr.bf16.mxu0 0
    %3750 = vmatpush1.bf16.msra.mxu0 %v3714
    %3751 = vmatprep.subr.bf16.mxu0 0
    %3752 = vmatpush1.bf16.msra.mxu0 0
    %3753 = vmatprep.subr.bf16.mxu0 0
    %3754 = vmatpush1.bf16.msra.mxu0 0
    %3755 = vmatprep.subr.bf16.mxu0 0
    %3756 = vmatpush1.bf16.msra.mxu0 0
    %3757 = vmatprep.subr.bf16.mxu0 0
    %3758 = vmatpush1.bf16.msra.mxu0 0
    %3759 = vmatprep.subr.bf16.mxu0 0
    %3760 = vmatpush1.bf16.msra.mxu0 0
    %3761 = vmatprep.subr.bf16.mxu0 0
    %3762 = vmatpush1.bf16.msra.mxu0 0
    %3763 = vmatprep.subr.bf16.mxu0 0
    %3764 = vmatpush1.bf16.msra.mxu0 0
    %3765 = vmatprep.subr.bf16.mxu0 0
    %3766 = vmatpush1.bf16.msra.mxu0 0
    %3767 = vmatprep.subr.bf16.mxu0 0
    %3768 = vmatpush1.bf16.msra.mxu0 0
    %3769 = vmatprep.subr.bf16.mxu0 0
    %3770 = vmatpush1.bf16.msra.mxu0 0
    %3771 = vmatprep.subr.bf16.mxu0 0
    %3772 = vmatpush1.bf16.msra.mxu0 0
    %3773 = vmatprep.subr.bf16.mxu0 0
    %3774 = vmatpush1.bf16.msra.mxu0 0
    %3775 = vmatprep.mubr.bf16.mxu0 0
    %3776 = vmatmul.mubr.bf16.gmra.mrb[0].mxu0 %v3720
    %v3777 = vpop.f32.mrb[0].mxu0
    %v3778 = vadd.f32 0.0, %v3777
    %v3779 = vpop.f32.mrb[0].mxu0
    %v3780 = vpop.f32.mrb[0].mxu0
    %v3781 = vadd.f32 0.0, %v3780
    %v3782 = vpop.f32.mrb[0].mxu0
    %3783 = vmatprep.mubr.bf16.mxu0 0
    %3784 = vmatmul.mubr.bf16.gmra.mrb[0].mxu0 %v3723
    %v3785 = vpop.f32.mrb[0].mxu0
    %v3786 = vadd.f32 0.0, %v3785
    %v3787 = vpop.f32.mrb[0].mxu0
    %v3788 = vpop.f32.mrb[0].mxu0
    %v3789 = vadd.f32 0.0, %v3788
    %v3790 = vpop.f32.mrb[0].mxu0
    %3791 = vmatprep.mubr.bf16.mxu0 0
    %3792 = vmatmul.mubr.bf16.gmra.mrb[0].mxu0 %v3726
    %v3793 = vpop.f32.mrb[0].mxu0
    %v3794 = vadd.f32 0.0, %v3793
    %v3795 = vpop.f32.mrb[0].mxu0
    %v3796 = vpop.f32.mrb[0].mxu0
    %v3797 = vadd.f32 0.0, %v3796
    %v3798 = vpop.f32.mrb[0].mxu0
    %3799 = vmatprep.mubr.bf16.mxu0 0
    %3800 = vmatmul.mubr.bf16.gmra.mrb[0].mxu0 %v3729
    %v3801 = vpop.f32.mrb[0].mxu0
    %v3802 = vadd.f32 0.0, %v3801
    %v3803 = vpop.f32.mrb[0].mxu0
    %v3804 = vpop.f32.mrb[0].mxu0
    %v3805 = vadd.f32 0.0, %v3804
    %v3806 = vpop.f32.mrb[0].mxu0
    %3807 = vmatprep.mubr.bf16.mxu0 0
    %3808 = vmatmul.mubr.bf16.gmra.mrb[0].mxu0 %v3732
    %v3809 = vpop.f32.mrb[0].mxu0
    %v3810 = vadd.f32 0.0, %v3809
    %v3811 = vpop.f32.mrb[0].mxu0
    %v3812 = vpop.f32.mrb[0].mxu0
    %v3813 = vadd.f32 0.0, %v3812
    %v3814 = vpop.f32.mrb[0].mxu0
    %3815 = vmatprep.mubr.bf16.mxu0 0
    %3816 = vmatmul.mubr.bf16.gmra.mrb[0].mxu0 %v3735
    %v3817 = vpop.f32.mrb[0].mxu0
    %v3818 = vadd.f32 0.0, %v3817
    %v3819 = vpop.f32.mrb[0].mxu0
    %v3820 = vpop.f32.mrb[0].mxu0
    %v3821 = vadd.f32 0.0, %v3820
    %v3822 = vpop.f32.mrb[0].mxu0
    %3823 = vmatprep.mubr.bf16.mxu0 0
    %3824 = vmatmul.mubr.bf16.gmra.mrb[0].mxu0 %v3738
    %v3825 = vpop.f32.mrb[0].mxu0
    %v3826 = vadd.f32 0.0, %v3825
    %v3827 = vpop.f32.mrb[0].mxu0
    %v3828 = vpop.f32.mrb[0].mxu0
    %v3829 = vadd.f32 0.0, %v3828
    %v3830 = vpop.f32.mrb[0].mxu0
    %3831 = vmatprep.mubr.bf16.mxu0 0
    %3832 = vmatmul.mubr.bf16.gmra.mrb[0].mxu0 %v3741
    %v3833 = vpop.f32.mrb[0].mxu0
    %v3834 = vadd.f32 0.0, %v3833
    %v3835 = vpop.f32.mrb[0].mxu0
    %v3836 = vpop.f32.mrb[0].mxu0
    %v3837 = vadd.f32 0.0, %v3836
    %v3838 = vpop.f32.mrb[0].mxu0
    %3839 = vdwg.mxu0
    %v3840 = vadd.f32 %v3659, %v3778
    %v3841 = vadd.f32 %v3660, %v3781
    %v3842 = vadd.f32 %v3661, %v3786
    %v3843 = vadd.f32 %v3662, %v3789
    %v3844 = vadd.f32 %v3663, %v3794
    %v3845 = vadd.f32 %v3664, %v3797
    %v3846 = vadd.f32 %v3665, %v3802
    %v3847 = vadd.f32 %v3666, %v3805
    %v3848 = vadd.f32 %v3667, %v3810
    %v3849 = vadd.f32 %v3668, %v3813
    %v3850 = vadd.f32 %v3669, %v3818
    %v3851 = vadd.f32 %v3670, %v3821
    %v3852 = vadd.f32 %v3671, %v3826
    %v3853 = vadd.f32 %v3672, %v3829
    %v3854 = vadd.f32 %v3673, %v3834
    %v3855 = vadd.f32 %v3674, %v3837
    %v3857 = vshrl.u32 %v2783, 16
    %v3859 = vrot.slane %v3857, 4
    %v3860 = vshll.u32 %v2783, 16
    %v3862 = vrot.slane %v3860, 5
    %v3863 = vor.u32 %v3859, %v3862
    %v3864 = vrot.slane %v3863, 4
    %v3866 = vshll.u32 %v2784, 16
    %v3868 = vrot.slane %v3866, 5
    %v3869 = vsel %vm569, %v3864, %v3868
    %v3871 = vshrl.u32 %v2803, 16
    %v3873 = vrot.slane %v3871, 4
    %v3874 = vshll.u32 %v2803, 16
    %v3876 = vrot.slane %v3874, 5
    %v3877 = vor.u32 %v3873, %v3876
    %v3878 = vrot.slane %v3877, 4
    %v3880 = vshll.u32 %v2804, 16
    %v3882 = vrot.slane %v3880, 5
    %v3883 = vsel %vm569, %v3878, %v3882
    %v3884 = vld [vmem:[#allocation10 + $0x80] sm:$0xf]
    %v3885 = vld [vmem:[#allocation10 + $0x84] sm:$0xf]
    %v3886 = vld [vmem:[#allocation10 + $0x88] sm:$0xf]
    %v3887 = vld [vmem:[#allocation10 + $0x8c] sm:$0xf]
    %v3888 = vld [vmem:[#allocation10 + $0x90] sm:$0xf]
    %v3889 = vld [vmem:[#allocation10 + $0x94] sm:$0xf]
    %v3890 = vld [vmem:[#allocation10 + $0x98] sm:$0xf]
    %v3891 = vld [vmem:[#allocation10 + $0x9c] sm:$0xf]
    %v3892 = vunpack.c.l.b16 %v3869
    %v3893 = vunpack.c.l.b16 %v3883
    %v3894 = vpack.c.b16 %v3049, %v3048
    %v3895 = vpack.c.b16 %v3051, %v3050
    %v3896 = vpack.c.b16 %v3053, %v3052
    %v3897 = vpack.c.b16 %v3892, %v3054
    %v3898 = vpack.c.b16 %v3057, %v3056
    %v3899 = vpack.c.b16 %v3059, %v3058
    %v3900 = vpack.c.b16 %v3061, %v3060
    %v3901 = vpack.c.b16 %v3893, %v3062
    %v3910 = vunpack.c.l.b16 %v3884
    %v3911 = vunpack.c.l.b16 %v3885
    %v3912 = vunpack.c.l.b16 %v3886
    %v3913 = vunpack.c.l.b16 %v3887
    %v3914 = vunpack.c.l.b16 %v3888
    %v3915 = vunpack.c.l.b16 %v3889
    %v3916 = vunpack.c.l.b16 %v3890
    %v3917 = vunpack.c.l.b16 %v3891
    %v3918 = vpack.c.b16 %v3911, %v3910
    %v3919 = vpack.c.b16 %v3913, %v3912
    %v3920 = vpack.c.b16 %v3915, %v3914
    %v3921 = vpack.c.b16 %v3917, %v3916
    %v3927 = vsel %vm3095, %v3894, 0
    %v3930 = vsel %vm3095, %v3895, 0
    %v3933 = vsel %vm3095, %v3896, 0
    %v3936 = vsel %vm3095, %v3897, 0
    %v3939 = vsel %vm3095, %v3898, 0
    %v3942 = vsel %vm3095, %v3899, 0
    %v3945 = vsel %vm3095, %v3900, 0
    %v3948 = vsel %vm3095, %v3901, 0
    %3950 = vmatprep.subr.bf16.mxu0 0
    %3951 = vmatpush1.bf16.msra.mxu0 %v3918
    %3952 = vmatprep.subr.bf16.mxu0 0
    %3953 = vmatpush1.bf16.msra.mxu0 %v3919
    %3954 = vmatprep.subr.bf16.mxu0 0
    %3955 = vmatpush1.bf16.msra.mxu0 %v3920
    %3956 = vmatprep.subr.bf16.mxu0 0
    %3957 = vmatpush1.bf16.msra.mxu0 %v3921
    %3958 = vmatprep.subr.bf16.mxu0 0
    %3959 = vmatpush1.bf16.msra.mxu0 0
    %3960 = vmatprep.subr.bf16.mxu0 0
    %3961 = vmatpush1.bf16.msra.mxu0 0
    %3962 = vmatprep.subr.bf16.mxu0 0
    %3963 = vmatpush1.bf16.msra.mxu0 0
    %3964 = vmatprep.subr.bf16.mxu0 0
    %3965 = vmatpush1.bf16.msra.mxu0 0
    %3966 = vmatprep.subr.bf16.mxu0 0
    %3967 = vmatpush1.bf16.msra.mxu0 0
    %3968 = vmatprep.subr.bf16.mxu0 0
    %3969 = vmatpush1.bf16.msra.mxu0 0
    %3970 = vmatprep.subr.bf16.mxu0 0
    %3971 = vmatpush1.bf16.msra.mxu0 0
    %3972 = vmatprep.subr.bf16.mxu0 0
    %3973 = vmatpush1.bf16.msra.mxu0 0
    %3974 = vmatprep.subr.bf16.mxu0 0
    %3975 = vmatpush1.bf16.msra.mxu0 0
    %3976 = vmatprep.subr.bf16.mxu0 0
    %3977 = vmatpush1.bf16.msra.mxu0 0
    %3978 = vmatprep.subr.bf16.mxu0 0
    %3979 = vmatpush1.bf16.msra.mxu0 0
    %3980 = vmatprep.subr.bf16.mxu0 0
    %3981 = vmatpush1.bf16.msra.mxu0 0
    %3982 = vmatprep.mubr.bf16.mxu0 0
    %3983 = vmatmul.mubr.bf16.gmra.mrb[0].mxu0 %v3927
    %v3984 = vpop.f32.mrb[0].mxu0
    %v3985 = vadd.f32 0.0, %v3984
    %v3986 = vpop.f32.mrb[0].mxu0
    %v3987 = vpop.f32.mrb[0].mxu0
    %v3988 = vadd.f32 0.0, %v3987
    %v3989 = vpop.f32.mrb[0].mxu0
    %3990 = vmatprep.mubr.bf16.mxu0 0
    %3991 = vmatmul.mubr.bf16.gmra.mrb[0].mxu0 %v3930
    %v3992 = vpop.f32.mrb[0].mxu0
    %v3993 = vadd.f32 0.0, %v3992
    %v3994 = vpop.f32.mrb[0].mxu0
    %v3995 = vpop.f32.mrb[0].mxu0
    %v3996 = vadd.f32 0.0, %v3995
    %v3997 = vpop.f32.mrb[0].mxu0
    %3998 = vmatprep.mubr.bf16.mxu0 0
    %3999 = vmatmul.mubr.bf16.gmra.mrb[0].mxu0 %v3933
    %v4000 = vpop.f32.mrb[0].mxu0
    %v4001 = vadd.f32 0.0, %v4000
    %v4002 = vpop.f32.mrb[0].mxu0
    %v4003 = vpop.f32.mrb[0].mxu0
    %v4004 = vadd.f32 0.0, %v4003
    %v4005 = vpop.f32.mrb[0].mxu0
    %4006 = vmatprep.mubr.bf16.mxu0 0
    %4007 = vmatmul.mubr.bf16.gmra.mrb[0].mxu0 %v3936
    %v4008 = vpop.f32.mrb[0].mxu0
    %v4009 = vadd.f32 0.0, %v4008
    %v4010 = vpop.f32.mrb[0].mxu0
    %v4011 = vpop.f32.mrb[0].mxu0
    %v4012 = vadd.f32 0.0, %v4011
    %v4013 = vpop.f32.mrb[0].mxu0
    %4014 = vmatprep.mubr.bf16.mxu0 0
    %4015 = vmatmul.mubr.bf16.gmra.mrb[0].mxu0 %v3939
    %v4016 = vpop.f32.mrb[0].mxu0
    %v4017 = vadd.f32 0.0, %v4016
    %v4018 = vpop.f32.mrb[0].mxu0
    %v4019 = vpop.f32.mrb[0].mxu0
    %v4020 = vadd.f32 0.0, %v4019
    %v4021 = vpop.f32.mrb[0].mxu0
    %4022 = vmatprep.mubr.bf16.mxu0 0
    %4023 = vmatmul.mubr.bf16.gmra.mrb[0].mxu0 %v3942
    %v4024 = vpop.f32.mrb[0].mxu0
    %v4025 = vadd.f32 0.0, %v4024
    %v4026 = vpop.f32.mrb[0].mxu0
    %v4027 = vpop.f32.mrb[0].mxu0
    %v4028 = vadd.f32 0.0, %v4027
    %v4029 = vpop.f32.mrb[0].mxu0
    %4030 = vmatprep.mubr.bf16.mxu0 0
    %4031 = vmatmul.mubr.bf16.gmra.mrb[0].mxu0 %v3945
    %v4032 = vpop.f32.mrb[0].mxu0
    %v4033 = vadd.f32 0.0, %v4032
    %v4034 = vpop.f32.mrb[0].mxu0
    %v4035 = vpop.f32.mrb[0].mxu0
    %v4036 = vadd.f32 0.0, %v4035
    %v4037 = vpop.f32.mrb[0].mxu0
    %4038 = vmatprep.mubr.bf16.mxu0 0
    %4039 = vmatmul.mubr.bf16.gmra.mrb[0].mxu0 %v3948
    %v4040 = vpop.f32.mrb[0].mxu0
    %v4041 = vadd.f32 0.0, %v4040
    %v4042 = vpop.f32.mrb[0].mxu0
    %v4043 = vpop.f32.mrb[0].mxu0
    %v4044 = vadd.f32 0.0, %v4043
    %v4045 = vpop.f32.mrb[0].mxu0
    %4046 = vdwg.mxu0
    %v4047 = vadd.f32 %v3840, %v3985
    %v4048 = vadd.f32 %v3841, %v3988
    %v4049 = vadd.f32 %v3842, %v3993
    %v4050 = vadd.f32 %v3843, %v3996
    %v4051 = vadd.f32 %v3844, %v4001
    %v4052 = vadd.f32 %v3845, %v4004
    %v4053 = vadd.f32 %v3846, %v4009
    %v4054 = vadd.f32 %v3847, %v4012
    %v4055 = vadd.f32 %v3848, %v4017
    %v4056 = vadd.f32 %v3849, %v4020
    %v4057 = vadd.f32 %v3850, %v4025
    %v4058 = vadd.f32 %v3851, %v4028
    %v4059 = vadd.f32 %v3852, %v4033
    %v4060 = vadd.f32 %v3853, %v4036
    %v4061 = vadd.f32 %v3854, %v4041
    %v4062 = vadd.f32 %v3855, %v4044
    %v4065 = vrot.slane %v2783, 5
    %v4066 = vrot.slane %v4065, 4
    %v4067 = vrot.slane %v2784, 5
    %v4068 = vsel %vm1127, %v4066, %v4067
    %v4069 = vrot.slane %v2803, 5
    %v4070 = vrot.slane %v4069, 4
    %v4071 = vrot.slane %v2804, 5
    %v4072 = vsel %vm1127, %v4070, %v4071
    %v4073 = vld [vmem:[#allocation10 + $0xa0] sm:$0xf]
    %v4074 = vld [vmem:[#allocation10 + $0xa4] sm:$0xf]
    %v4075 = vld [vmem:[#allocation10 + $0xa8] sm:$0xf]
    %v4076 = vld [vmem:[#allocation10 + $0xac] sm:$0xf]
    %v4077 = vld [vmem:[#allocation10 + $0xb0] sm:$0xf]
    %v4078 = vld [vmem:[#allocation10 + $0xb4] sm:$0xf]
    %v4079 = vld [vmem:[#allocation10 + $0xb8] sm:$0xf]
    %v4080 = vld [vmem:[#allocation10 + $0xbc] sm:$0xf]
    %v4081 = vunpack.c.l.b16 %v4068
    %v4082 = vunpack.c.l.b16 %v4072
    %v4083 = vpack.c.b16 %v3492, %v3491
    %v4084 = vpack.c.b16 %v3494, %v3493
    %v4085 = vpack.c.b16 %v3496, %v3495
    %v4086 = vpack.c.b16 %v4081, %v3497
    %v4087 = vpack.c.b16 %v3500, %v3499
    %v4088 = vpack.c.b16 %v3502, %v3501
    %v4089 = vpack.c.b16 %v3504, %v3503
    %v4090 = vpack.c.b16 %v4082, %v3505
    %v4099 = vunpack.c.l.b16 %v4073
    %v4100 = vunpack.c.l.b16 %v4074
    %v4101 = vunpack.c.l.b16 %v4075
    %v4102 = vunpack.c.l.b16 %v4076
    %v4103 = vunpack.c.l.b16 %v4077
    %v4104 = vunpack.c.l.b16 %v4078
    %v4105 = vunpack.c.l.b16 %v4079
    %v4106 = vunpack.c.l.b16 %v4080
    %v4107 = vpack.c.b16 %v4100, %v4099
    %v4108 = vpack.c.b16 %v4102, %v4101
    %v4109 = vpack.c.b16 %v4104, %v4103
    %v4110 = vpack.c.b16 %v4106, %v4105
    %v4116 = vsel %vm3095, %v4083, 0
    %v4119 = vsel %vm3095, %v4084, 0
    %v4122 = vsel %vm3095, %v4085, 0
    %v4125 = vsel %vm3095, %v4086, 0
    %v4128 = vsel %vm3095, %v4087, 0
    %v4131 = vsel %vm3095, %v4088, 0
    %v4134 = vsel %vm3095, %v4089, 0
    %v4137 = vsel %vm3095, %v4090, 0
    %4139 = vmatprep.subr.bf16.mxu0 0
    %4140 = vmatpush1.bf16.msra.mxu0 %v4107
    %4141 = vmatprep.subr.bf16.mxu0 0
    %4142 = vmatpush1.bf16.msra.mxu0 %v4108
    %4143 = vmatprep.subr.bf16.mxu0 0
    %4144 = vmatpush1.bf16.msra.mxu0 %v4109
    %4145 = vmatprep.subr.bf16.mxu0 0
    %4146 = vmatpush1.bf16.msra.mxu0 %v4110
    %4147 = vmatprep.subr.bf16.mxu0 0
    %4148 = vmatpush1.bf16.msra.mxu0 0
    %4149 = vmatprep.subr.bf16.mxu0 0
    %4150 = vmatpush1.bf16.msra.mxu0 0
    %4151 = vmatprep.subr.bf16.mxu0 0
    %4152 = vmatpush1.bf16.msra.mxu0 0
    %4153 = vmatprep.subr.bf16.mxu0 0
    %4154 = vmatpush1.bf16.msra.mxu0 0
    %4155 = vmatprep.subr.bf16.mxu0 0
    %4156 = vmatpush1.bf16.msra.mxu0 0
    %4157 = vmatprep.subr.bf16.mxu0 0
    %4158 = vmatpush1.bf16.msra.mxu0 0
    %4159 = vmatprep.subr.bf16.mxu0 0
    %4160 = vmatpush1.bf16.msra.mxu0 0
    %4161 = vmatprep.subr.bf16.mxu0 0
    %4162 = vmatpush1.bf16.msra.mxu0 0
    %4163 = vmatprep.subr.bf16.mxu0 0
    %4164 = vmatpush1.bf16.msra.mxu0 0
    %4165 = vmatprep.subr.bf16.mxu0 0
    %4166 = vmatpush1.bf16.msra.mxu0 0
    %4167 = vmatprep.subr.bf16.mxu0 0
    %4168 = vmatpush1.bf16.msra.mxu0 0
    %4169 = vmatprep.subr.bf16.mxu0 0
    %4170 = vmatpush1.bf16.msra.mxu0 0
    %4171 = vmatprep.mubr.bf16.mxu0 0
    %4172 = vmatmul.mubr.bf16.gmra.mrb[0].mxu0 %v4116
    %v4173 = vpop.f32.mrb[0].mxu0
    %v4174 = vadd.f32 0.0, %v4173
    %v4175 = vpop.f32.mrb[0].mxu0
    %v4176 = vpop.f32.mrb[0].mxu0
    %v4177 = vadd.f32 0.0, %v4176
    %v4178 = vpop.f32.mrb[0].mxu0
    %4179 = vmatprep.mubr.bf16.mxu0 0
    %4180 = vmatmul.mubr.bf16.gmra.mrb[0].mxu0 %v4119
    %v4181 = vpop.f32.mrb[0].mxu0
    %v4182 = vadd.f32 0.0, %v4181
    %v4183 = vpop.f32.mrb[0].mxu0
    %v4184 = vpop.f32.mrb[0].mxu0
    %v4185 = vadd.f32 0.0, %v4184
    %v4186 = vpop.f32.mrb[0].mxu0
    %4187 = vmatprep.mubr.bf16.mxu0 0
    %4188 = vmatmul.mubr.bf16.gmra.mrb[0].mxu0 %v4122
    %v4189 = vpop.f32.mrb[0].mxu0
    %v4190 = vadd.f32 0.0, %v4189
    %v4191 = vpop.f32.mrb[0].mxu0
    %v4192 = vpop.f32.mrb[0].mxu0
    %v4193 = vadd.f32 0.0, %v4192
    %v4194 = vpop.f32.mrb[0].mxu0
    %4195 = vmatprep.mubr.bf16.mxu0 0
    %4196 = vmatmul.mubr.bf16.gmra.mrb[0].mxu0 %v4125
    %v4197 = vpop.f32.mrb[0].mxu0
    %v4198 = vadd.f32 0.0, %v4197
    %v4199 = vpop.f32.mrb[0].mxu0
    %v4200 = vpop.f32.mrb[0].mxu0
    %v4201 = vadd.f32 0.0, %v4200
    %v4202 = vpop.f32.mrb[0].mxu0
    %4203 = vmatprep.mubr.bf16.mxu0 0
    %4204 = vmatmul.mubr.bf16.gmra.mrb[0].mxu0 %v4128
    %v4205 = vpop.f32.mrb[0].mxu0
    %v4206 = vadd.f32 0.0, %v4205
    %v4207 = vpop.f32.mrb[0].mxu0
    %v4208 = vpop.f32.mrb[0].mxu0
    %v4209 = vadd.f32 0.0, %v4208
    %v4210 = vpop.f32.mrb[0].mxu0
    %4211 = vmatprep.mubr.bf16.mxu0 0
    %4212 = vmatmul.mubr.bf16.gmra.mrb[0].mxu0 %v4131
    %v4213 = vpop.f32.mrb[0].mxu0
    %v4214 = vadd.f32 0.0, %v4213
    %v4215 = vpop.f32.mrb[0].mxu0
    %v4216 = vpop.f32.mrb[0].mxu0
    %v4217 = vadd.f32 0.0, %v4216
    %v4218 = vpop.f32.mrb[0].mxu0
    %4219 = vmatprep.mubr.bf16.mxu0 0
    %4220 = vmatmul.mubr.bf16.gmra.mrb[0].mxu0 %v4134
    %v4221 = vpop.f32.mrb[0].mxu0
    %v4222 = vadd.f32 0.0, %v4221
    %v4223 = vpop.f32.mrb[0].mxu0
    %v4224 = vpop.f32.mrb[0].mxu0
    %v4225 = vadd.f32 0.0, %v4224
    %v4226 = vpop.f32.mrb[0].mxu0
    %4227 = vmatprep.mubr.bf16.mxu0 0
    %4228 = vmatmul.mubr.bf16.gmra.mrb[0].mxu0 %v4137
    %v4229 = vpop.f32.mrb[0].mxu0
    %v4230 = vadd.f32 0.0, %v4229
    %v4231 = vpop.f32.mrb[0].mxu0
    %v4232 = vpop.f32.mrb[0].mxu0
    %v4233 = vadd.f32 0.0, %v4232
    %v4234 = vpop.f32.mrb[0].mxu0
    %4235 = vdwg.mxu0
    %v4236 = vadd.f32 %v4047, %v4174
    %v4237 = vadd.f32 %v4048, %v4177
    %v4238 = vadd.f32 %v4049, %v4182
    %v4239 = vadd.f32 %v4050, %v4185
    %v4240 = vadd.f32 %v4051, %v4190
    %v4241 = vadd.f32 %v4052, %v4193
    %v4242 = vadd.f32 %v4053, %v4198
    %v4243 = vadd.f32 %v4054, %v4201
    %v4244 = vadd.f32 %v4055, %v4206
    %v4245 = vadd.f32 %v4056, %v4209
    %v4246 = vadd.f32 %v4057, %v4214
    %v4247 = vadd.f32 %v4058, %v4217
    %v4248 = vadd.f32 %v4059, %v4222
    %v4249 = vadd.f32 %v4060, %v4225
    %v4250 = vadd.f32 %v4061, %v4230
    %v4251 = vadd.f32 %v4062, %v4233
    %v4252 = vld [vmem:[#allocation10 + $0xc0] sm:$0xf]
    %v4253 = vld [vmem:[#allocation10 + $0xc4] sm:$0xf]
    %v4254 = vld [vmem:[#allocation10 + $0xc8] sm:$0xf]
    %v4255 = vld [vmem:[#allocation10 + $0xcc] sm:$0xf]
    %v4256 = vld [vmem:[#allocation10 + $0xd0] sm:$0xf]
    %v4257 = vld [vmem:[#allocation10 + $0xd4] sm:$0xf]
    %v4258 = vld [vmem:[#allocation10 + $0xd8] sm:$0xf]
    %v4259 = vld [vmem:[#allocation10 + $0xdc] sm:$0xf]
    %v4262 = vunpack.c.l.b16 %v2785
    %v4263 = vunpack.c.l.b16 %v2805
    %v4264 = vpack.c.b16 %v4262, %v3685
    %v4265 = vpack.c.b16 %v4263, %v3686
    %v4274 = vunpack.c.l.b16 %v4252
    %v4275 = vunpack.c.l.b16 %v4253
    %v4276 = vunpack.c.l.b16 %v4254
    %v4277 = vunpack.c.l.b16 %v4255
    %v4278 = vunpack.c.l.b16 %v4256
    %v4279 = vunpack.c.l.b16 %v4257
    %v4280 = vunpack.c.l.b16 %v4258
    %v4281 = vunpack.c.l.b16 %v4259
    %v4282 = vpack.c.b16 %v4275, %v4274
    %v4283 = vpack.c.b16 %v4277, %v4276
    %v4284 = vpack.c.b16 %v4279, %v4278
    %v4285 = vpack.c.b16 %v4281, %v4280
    %v4291 = vsel %vm3095, %v4264, 0
    %v4294 = vsel %vm3095, %v4265, 0
    %4296 = vmatprep.subr.bf16.mxu0 0
    %4297 = vmatpush1.bf16.msra.mxu0 %v4282
    %4298 = vmatprep.subr.bf16.mxu0 0
    %4299 = vmatpush1.bf16.msra.mxu0 %v4283
    %4300 = vmatprep.subr.bf16.mxu0 0
    %4301 = vmatpush1.bf16.msra.mxu0 %v4284
    %4302 = vmatprep.subr.bf16.mxu0 0
    %4303 = vmatpush1.bf16.msra.mxu0 %v4285
    %4304 = vmatprep.subr.bf16.mxu0 0
    %4305 = vmatpush1.bf16.msra.mxu0 0
    %4306 = vmatprep.subr.bf16.mxu0 0
    %4307 = vmatpush1.bf16.msra.mxu0 0
    %4308 = vmatprep.subr.bf16.mxu0 0
    %4309 = vmatpush1.bf16.msra.mxu0 0
    %4310 = vmatprep.subr.bf16.mxu0 0
    %4311 = vmatpush1.bf16.msra.mxu0 0
    %4312 = vmatprep.subr.bf16.mxu0 0
    %4313 = vmatpush1.bf16.msra.mxu0 0
    %4314 = vmatprep.subr.bf16.mxu0 0
    %4315 = vmatpush1.bf16.msra.mxu0 0
    %4316 = vmatprep.subr.bf16.mxu0 0
    %4317 = vmatpush1.bf16.msra.mxu0 0
    %4318 = vmatprep.subr.bf16.mxu0 0
    %4319 = vmatpush1.bf16.msra.mxu0 0
    %4320 = vmatprep.subr.bf16.mxu0 0
    %4321 = vmatpush1.bf16.msra.mxu0 0
    %4322 = vmatprep.subr.bf16.mxu0 0
    %4323 = vmatpush1.bf16.msra.mxu0 0
    %4324 = vmatprep.subr.bf16.mxu0 0
    %4325 = vmatpush1.bf16.msra.mxu0 0
    %4326 = vmatprep.subr.bf16.mxu0 0
    %4327 = vmatpush1.bf16.msra.mxu0 0
    %4328 = vmatprep.mubr.bf16.mxu0 0
    %4329 = vmatmul.mubr.bf16.gmra.mrb[0].mxu0 %v3285
    %v4330 = vpop.f32.mrb[0].mxu0
    %v4331 = vadd.f32 0.0, %v4330
    %v4332 = vpop.f32.mrb[0].mxu0
    %v4333 = vpop.f32.mrb[0].mxu0
    %v4334 = vadd.f32 0.0, %v4333
    %v4335 = vpop.f32.mrb[0].mxu0
    %4336 = vmatprep.mubr.bf16.mxu0 0
    %4337 = vmatmul.mubr.bf16.gmra.mrb[0].mxu0 %v3288
    %v4338 = vpop.f32.mrb[0].mxu0
    %v4339 = vadd.f32 0.0, %v4338
    %v4340 = vpop.f32.mrb[0].mxu0
    %v4341 = vpop.f32.mrb[0].mxu0
    %v4342 = vadd.f32 0.0, %v4341
    %v4343 = vpop.f32.mrb[0].mxu0
    %4344 = vmatprep.mubr.bf16.mxu0 0
    %4345 = vmatmul.mubr.bf16.gmra.mrb[0].mxu0 %v3291
    %v4346 = vpop.f32.mrb[0].mxu0
    %v4347 = vadd.f32 0.0, %v4346
    %v4348 = vpop.f32.mrb[0].mxu0
    %v4349 = vpop.f32.mrb[0].mxu0
    %v4350 = vadd.f32 0.0, %v4349
    %v4351 = vpop.f32.mrb[0].mxu0
    %4352 = vmatprep.mubr.bf16.mxu0 0
    %4353 = vmatmul.mubr.bf16.gmra.mrb[0].mxu0 %v4291
    %v4354 = vpop.f32.mrb[0].mxu0
    %v4355 = vadd.f32 0.0, %v4354
    %v4356 = vpop.f32.mrb[0].mxu0
    %v4357 = vpop.f32.mrb[0].mxu0
    %v4358 = vadd.f32 0.0, %v4357
    %v4359 = vpop.f32.mrb[0].mxu0
    %4360 = vmatprep.mubr.bf16.mxu0 0
    %4361 = vmatmul.mubr.bf16.gmra.mrb[0].mxu0 %v3297
    %v4362 = vpop.f32.mrb[0].mxu0
    %v4363 = vadd.f32 0.0, %v4362
    %v4364 = vpop.f32.mrb[0].mxu0
    %v4365 = vpop.f32.mrb[0].mxu0
    %v4366 = vadd.f32 0.0, %v4365
    %v4367 = vpop.f32.mrb[0].mxu0
    %4368 = vmatprep.mubr.bf16.mxu0 0
    %4369 = vmatmul.mubr.bf16.gmra.mrb[0].mxu0 %v3300
    %v4370 = vpop.f32.mrb[0].mxu0
    %v4371 = vadd.f32 0.0, %v4370
    %v4372 = vpop.f32.mrb[0].mxu0
    %v4373 = vpop.f32.mrb[0].mxu0
    %v4374 = vadd.f32 0.0, %v4373
    %v4375 = vpop.f32.mrb[0].mxu0
    %4376 = vmatprep.mubr.bf16.mxu0 0
    %4377 = vmatmul.mubr.bf16.gmra.mrb[0].mxu0 %v3303
    %v4378 = vpop.f32.mrb[0].mxu0
    %v4379 = vadd.f32 0.0, %v4378
    %v4380 = vpop.f32.mrb[0].mxu0
    %v4381 = vpop.f32.mrb[0].mxu0
    %v4382 = vadd.f32 0.0, %v4381
    %v4383 = vpop.f32.mrb[0].mxu0
    %4384 = vmatprep.mubr.bf16.mxu0 0
    %4385 = vmatmul.mubr.bf16.gmra.mrb[0].mxu0 %v4294
    %v4386 = vpop.f32.mrb[0].mxu0
    %v4387 = vadd.f32 0.0, %v4386
    %v4388 = vpop.f32.mrb[0].mxu0
    %v4389 = vpop.f32.mrb[0].mxu0
    %v4390 = vadd.f32 0.0, %v4389
    %v4391 = vpop.f32.mrb[0].mxu0
    %4392 = vdwg.mxu0
    %v4393 = vadd.f32 %v4236, %v4331
    %v4394 = vadd.f32 %v4237, %v4334
    %v4395 = vadd.f32 %v4238, %v4339
    %v4396 = vadd.f32 %v4239, %v4342
    %v4397 = vadd.f32 %v4240, %v4347
    %v4398 = vadd.f32 %v4241, %v4350
    %v4399 = vadd.f32 %v4242, %v4355
    %v4400 = vadd.f32 %v4243, %v4358
    %v4401 = vadd.f32 %v4244, %v4363
    %v4402 = vadd.f32 %v4245, %v4366
    %v4403 = vadd.f32 %v4246, %v4371
    %v4404 = vadd.f32 %v4247, %v4374
    %v4405 = vadd.f32 %v4248, %v4379
    %v4406 = vadd.f32 %v4249, %v4382
    %v4407 = vadd.f32 %v4250, %v4387
    %v4408 = vadd.f32 %v4251, %v4390
    %v4410 = vshrl.u32 %v2785, 16
    %v4412 = vrot.slane %v4410, 4
    %v4413 = vshll.u32 %v2785, 16
    %v4415 = vrot.slane %v4413, 5
    %v4416 = vor.u32 %v4412, %v4415
    %v4417 = vrot.slane %v4416, 4
    %v4419 = vshll.u32 %v2786, 16
    %v4421 = vrot.slane %v4419, 5
    %v4422 = vsel %vm569, %v4417, %v4421
    %v4424 = vshrl.u32 %v2805, 16
    %v4426 = vrot.slane %v4424, 4
    %v4427 = vshll.u32 %v2805, 16
    %v4429 = vrot.slane %v4427, 5
    %v4430 = vor.u32 %v4426, %v4429
    %v4431 = vrot.slane %v4430, 4
    %v4433 = vshll.u32 %v2806, 16
    %v4435 = vrot.slane %v4433, 5
    %v4436 = vsel %vm569, %v4431, %v4435
    %v4437 = vld [vmem:[#allocation10 + $0xe0] sm:$0xf]
    %v4438 = vld [vmem:[#allocation10 + $0xe4] sm:$0xf]
    %v4439 = vld [vmem:[#allocation10 + $0xe8] sm:$0xf]
    %v4440 = vld [vmem:[#allocation10 + $0xec] sm:$0xf]
    %v4441 = vld [vmem:[#allocation10 + $0xf0] sm:$0xf]
    %v4442 = vld [vmem:[#allocation10 + $0xf4] sm:$0xf]
    %v4443 = vld [vmem:[#allocation10 + $0xf8] sm:$0xf]
    %v4444 = vld [vmem:[#allocation10 + $0xfc] sm:$0xf]
    %v4445 = vunpack.c.l.b16 %v4422
    %v4446 = vunpack.c.l.b16 %v4436
    %v4447 = vpack.c.b16 %v4445, %v3892
    %v4448 = vpack.c.b16 %v4446, %v3893
    %v4457 = vunpack.c.l.b16 %v4437
    %v4458 = vunpack.c.l.b16 %v4438
    %v4459 = vunpack.c.l.b16 %v4439
    %v4460 = vunpack.c.l.b16 %v4440
    %v4461 = vunpack.c.l.b16 %v4441
    %v4462 = vunpack.c.l.b16 %v4442
    %v4463 = vunpack.c.l.b16 %v4443
    %v4464 = vunpack.c.l.b16 %v4444
    %v4465 = vpack.c.b16 %v4458, %v4457
    %v4466 = vpack.c.b16 %v4460, %v4459
    %v4467 = vpack.c.b16 %v4462, %v4461
    %v4468 = vpack.c.b16 %v4464, %v4463
    %v4474 = vsel %vm3095, %v4447, 0
    %v4477 = vsel %vm3095, %v4448, 0
    %4479 = vmatprep.subr.bf16.mxu0 0
    %4480 = vmatpush1.bf16.msra.mxu0 %v4465
    %4481 = vmatprep.subr.bf16.mxu0 0
    %4482 = vmatpush1.bf16.msra.mxu0 %v4466
    %4483 = vmatprep.subr.bf16.mxu0 0
    %4484 = vmatpush1.bf16.msra.mxu0 %v4467
    %4485 = vmatprep.subr.bf16.mxu0 0
    %4486 = vmatpush1.bf16.msra.mxu0 %v4468
    %4487 = vmatprep.subr.bf16.mxu0 0
    %4488 = vmatpush1.bf16.msra.mxu0 0
    %4489 = vmatprep.subr.bf16.mxu0 0
    %4490 = vmatpush1.bf16.msra.mxu0 0
    %4491 = vmatprep.subr.bf16.mxu0 0
    %4492 = vmatpush1.bf16.msra.mxu0 0
    %4493 = vmatprep.subr.bf16.mxu0 0
    %4494 = vmatpush1.bf16.msra.mxu0 0
    %4495 = vmatprep.subr.bf16.mxu0 0
    %4496 = vmatpush1.bf16.msra.mxu0 0
    %4497 = vmatprep.subr.bf16.mxu0 0
    %4498 = vmatpush1.bf16.msra.mxu0 0
    %4499 = vmatprep.subr.bf16.mxu0 0
    %4500 = vmatpush1.bf16.msra.mxu0 0
    %4501 = vmatprep.subr.bf16.mxu0 0
    %4502 = vmatpush1.bf16.msra.mxu0 0
    %4503 = vmatprep.subr.bf16.mxu0 0
    %4504 = vmatpush1.bf16.msra.mxu0 0
    %4505 = vmatprep.subr.bf16.mxu0 0
    %4506 = vmatpush1.bf16.msra.mxu0 0
    %4507 = vmatprep.subr.bf16.mxu0 0
    %4508 = vmatpush1.bf16.msra.mxu0 0
    %4509 = vmatprep.subr.bf16.mxu0 0
    %4510 = vmatpush1.bf16.msra.mxu0 0
    %4511 = vmatprep.mubr.bf16.mxu0 0
    %4512 = vmatmul.mubr.bf16.gmra.mrb[0].mxu0 %v3100
    %v4513 = vpop.f32.mrb[0].mxu0
    %v4514 = vadd.f32 0.0, %v4513
    %v4515 = vpop.f32.mrb[0].mxu0
    %v4516 = vpop.f32.mrb[0].mxu0
    %v4517 = vadd.f32 0.0, %v4516
    %v4518 = vpop.f32.mrb[0].mxu0
    %4519 = vmatprep.mubr.bf16.mxu0 0
    %4520 = vmatmul.mubr.bf16.gmra.mrb[0].mxu0 %v3103
    %v4521 = vpop.f32.mrb[0].mxu0
    %v4522 = vadd.f32 0.0, %v4521
    %v4523 = vpop.f32.mrb[0].mxu0
    %v4524 = vpop.f32.mrb[0].mxu0
    %v4525 = vadd.f32 0.0, %v4524
    %v4526 = vpop.f32.mrb[0].mxu0
    %4527 = vmatprep.mubr.bf16.mxu0 0
    %4528 = vmatmul.mubr.bf16.gmra.mrb[0].mxu0 %v3106
    %v4529 = vpop.f32.mrb[0].mxu0
    %v4530 = vadd.f32 0.0, %v4529
    %v4531 = vpop.f32.mrb[0].mxu0
    %v4532 = vpop.f32.mrb[0].mxu0
    %v4533 = vadd.f32 0.0, %v4532
    %v4534 = vpop.f32.mrb[0].mxu0
    %4535 = vmatprep.mubr.bf16.mxu0 0
    %4536 = vmatmul.mubr.bf16.gmra.mrb[0].mxu0 %v4474
    %v4537 = vpop.f32.mrb[0].mxu0
    %v4538 = vadd.f32 0.0, %v4537
    %v4539 = vpop.f32.mrb[0].mxu0
    %v4540 = vpop.f32.mrb[0].mxu0
    %v4541 = vadd.f32 0.0, %v4540
    %v4542 = vpop.f32.mrb[0].mxu0
    %4543 = vmatprep.mubr.bf16.mxu0 0
    %4544 = vmatmul.mubr.bf16.gmra.mrb[0].mxu0 %v3112
    %v4545 = vpop.f32.mrb[0].mxu0
    %v4546 = vadd.f32 0.0, %v4545
    %v4547 = vpop.f32.mrb[0].mxu0
    %v4548 = vpop.f32.mrb[0].mxu0
    %v4549 = vadd.f32 0.0, %v4548
    %v4550 = vpop.f32.mrb[0].mxu0
    %4551 = vmatprep.mubr.bf16.mxu0 0
    %4552 = vmatmul.mubr.bf16.gmra.mrb[0].mxu0 %v3115
    %v4553 = vpop.f32.mrb[0].mxu0
    %v4554 = vadd.f32 0.0, %v4553
    %v4555 = vpop.f32.mrb[0].mxu0
    %v4556 = vpop.f32.mrb[0].mxu0
    %v4557 = vadd.f32 0.0, %v4556
    %v4558 = vpop.f32.mrb[0].mxu0
    %4559 = vmatprep.mubr.bf16.mxu0 0
    %4560 = vmatmul.mubr.bf16.gmra.mrb[0].mxu0 %v3118
    %v4561 = vpop.f32.mrb[0].mxu0
    %v4562 = vadd.f32 0.0, %v4561
    %v4563 = vpop.f32.mrb[0].mxu0
    %v4564 = vpop.f32.mrb[0].mxu0
    %v4565 = vadd.f32 0.0, %v4564
    %v4566 = vpop.f32.mrb[0].mxu0
    %4567 = vmatprep.mubr.bf16.mxu0 0
    %4568 = vmatmul.mubr.bf16.gmra.mrb[0].mxu0 %v4477
    %v4569 = vpop.f32.mrb[0].mxu0
    %v4570 = vadd.f32 0.0, %v4569
    %v4571 = vpop.f32.mrb[0].mxu0
    %v4572 = vpop.f32.mrb[0].mxu0
    %v4573 = vadd.f32 0.0, %v4572
    %v4574 = vpop.f32.mrb[0].mxu0
    %4575 = vdwg.mxu0
    %v4576 = vadd.f32 %v4393, %v4514
    %v4577 = vadd.f32 %v4394, %v4517
    %v4578 = vadd.f32 %v4395, %v4522
    %v4579 = vadd.f32 %v4396, %v4525
    %v4580 = vadd.f32 %v4397, %v4530
    %v4581 = vadd.f32 %v4398, %v4533
    %v4582 = vadd.f32 %v4399, %v4538
    %v4583 = vadd.f32 %v4400, %v4541
    %v4584 = vadd.f32 %v4401, %v4546
    %v4585 = vadd.f32 %v4402, %v4549
    %v4586 = vadd.f32 %v4403, %v4554
    %v4587 = vadd.f32 %v4404, %v4557
    %v4588 = vadd.f32 %v4405, %v4562
    %v4589 = vadd.f32 %v4406, %v4565
    %v4590 = vadd.f32 %v4407, %v4570
    %v4591 = vadd.f32 %v4408, %v4573
    %v4594 = vrot.slane %v2785, 5
    %v4595 = vrot.slane %v4594, 4
    %v4596 = vrot.slane %v2786, 5
    %v4597 = vsel %vm1127, %v4595, %v4596
    %v4598 = vrot.slane %v2805, 5
    %v4599 = vrot.slane %v4598, 4
    %v4600 = vrot.slane %v2806, 5
    %v4601 = vsel %vm1127, %v4599, %v4600
    %v4602 = vld [vmem:[#allocation10 + $0x100] sm:$0xf]
    %v4603 = vld [vmem:[#allocation10 + $0x104] sm:$0xf]
    %v4604 = vld [vmem:[#allocation10 + $0x108] sm:$0xf]
    %v4605 = vld [vmem:[#allocation10 + $0x10c] sm:$0xf]
    %v4606 = vld [vmem:[#allocation10 + $0x110] sm:$0xf]
    %v4607 = vld [vmem:[#allocation10 + $0x114] sm:$0xf]
    %v4608 = vld [vmem:[#allocation10 + $0x118] sm:$0xf]
    %v4609 = vld [vmem:[#allocation10 + $0x11c] sm:$0xf]
    %v4610 = vunpack.c.l.b16 %v4597
    %v4611 = vunpack.c.l.b16 %v4601
    %v4612 = vpack.c.b16 %v4610, %v4081
    %v4613 = vpack.c.b16 %v4611, %v4082
    %v4622 = vunpack.c.l.b16 %v4602
    %v4623 = vunpack.c.l.b16 %v4603
    %v4624 = vunpack.c.l.b16 %v4604
    %v4625 = vunpack.c.l.b16 %v4605
    %v4626 = vunpack.c.l.b16 %v4606
    %v4627 = vunpack.c.l.b16 %v4607
    %v4628 = vunpack.c.l.b16 %v4608
    %v4629 = vunpack.c.l.b16 %v4609
    %v4630 = vpack.c.b16 %v4623, %v4622
    %v4631 = vpack.c.b16 %v4625, %v4624
    %v4632 = vpack.c.b16 %v4627, %v4626
    %v4633 = vpack.c.b16 %v4629, %v4628
    %v4639 = vsel %vm3095, %v4612, 0
    %v4642 = vsel %vm3095, %v4613, 0
    %4644 = vmatprep.subr.bf16.mxu0 0
    %4645 = vmatpush1.bf16.msra.mxu0 %v4630
    %4646 = vmatprep.subr.bf16.mxu0 0
    %4647 = vmatpush1.bf16.msra.mxu0 %v4631
    %4648 = vmatprep.subr.bf16.mxu0 0
    %4649 = vmatpush1.bf16.msra.mxu0 %v4632
    %4650 = vmatprep.subr.bf16.mxu0 0
    %4651 = vmatpush1.bf16.msra.mxu0 %v4633
    %4652 = vmatprep.subr.bf16.mxu0 0
    %4653 = vmatpush1.bf16.msra.mxu0 0
    %4654 = vmatprep.subr.bf16.mxu0 0
    %4655 = vmatpush1.bf16.msra.mxu0 0
    %4656 = vmatprep.subr.bf16.mxu0 0
    %4657 = vmatpush1.bf16.msra.mxu0 0
    %4658 = vmatprep.subr.bf16.mxu0 0
    %4659 = vmatpush1.bf16.msra.mxu0 0
    %4660 = vmatprep.subr.bf16.mxu0 0
    %4661 = vmatpush1.bf16.msra.mxu0 0
    %4662 = vmatprep.subr.bf16.mxu0 0
    %4663 = vmatpush1.bf16.msra.mxu0 0
    %4664 = vmatprep.subr.bf16.mxu0 0
    %4665 = vmatpush1.bf16.msra.mxu0 0
    %4666 = vmatprep.subr.bf16.mxu0 0
    %4667 = vmatpush1.bf16.msra.mxu0 0
    %4668 = vmatprep.subr.bf16.mxu0 0
    %4669 = vmatpush1.bf16.msra.mxu0 0
    %4670 = vmatprep.subr.bf16.mxu0 0
    %4671 = vmatpush1.bf16.msra.mxu0 0
    %4672 = vmatprep.subr.bf16.mxu0 0
    %4673 = vmatpush1.bf16.msra.mxu0 0
    %4674 = vmatprep.subr.bf16.mxu0 0
    %4675 = vmatpush1.bf16.msra.mxu0 0
    %4676 = vmatprep.mubr.bf16.mxu0 0
    %4677 = vmatmul.mubr.bf16.gmra.mrb[0].mxu0 %v3542
    %v4678 = vpop.f32.mrb[0].mxu0
    %v4679 = vadd.f32 0.0, %v4678
    %v4680 = vpop.f32.mrb[0].mxu0
    %v4681 = vpop.f32.mrb[0].mxu0
    %v4682 = vadd.f32 0.0, %v4681
    %v4683 = vpop.f32.mrb[0].mxu0
    %4684 = vmatprep.mubr.bf16.mxu0 0
    %4685 = vmatmul.mubr.bf16.gmra.mrb[0].mxu0 %v3545
    %v4686 = vpop.f32.mrb[0].mxu0
    %v4687 = vadd.f32 0.0, %v4686
    %v4688 = vpop.f32.mrb[0].mxu0
    %v4689 = vpop.f32.mrb[0].mxu0
    %v4690 = vadd.f32 0.0, %v4689
    %v4691 = vpop.f32.mrb[0].mxu0
    %4692 = vmatprep.mubr.bf16.mxu0 0
    %4693 = vmatmul.mubr.bf16.gmra.mrb[0].mxu0 %v3548
    %v4694 = vpop.f32.mrb[0].mxu0
    %v4695 = vadd.f32 0.0, %v4694
    %v4696 = vpop.f32.mrb[0].mxu0
    %v4697 = vpop.f32.mrb[0].mxu0
    %v4698 = vadd.f32 0.0, %v4697
    %v4699 = vpop.f32.mrb[0].mxu0
    %4700 = vmatprep.mubr.bf16.mxu0 0
    %4701 = vmatmul.mubr.bf16.gmra.mrb[0].mxu0 %v4639
    %v4702 = vpop.f32.mrb[0].mxu0
    %v4703 = vadd.f32 0.0, %v4702
    %v4704 = vpop.f32.mrb[0].mxu0
    %v4705 = vpop.f32.mrb[0].mxu0
    %v4706 = vadd.f32 0.0, %v4705
    %v4707 = vpop.f32.mrb[0].mxu0
    %4708 = vmatprep.mubr.bf16.mxu0 0
    %4709 = vmatmul.mubr.bf16.gmra.mrb[0].mxu0 %v3554
    %v4710 = vpop.f32.mrb[0].mxu0
    %v4711 = vadd.f32 0.0, %v4710
    %v4712 = vpop.f32.mrb[0].mxu0
    %v4713 = vpop.f32.mrb[0].mxu0
    %v4714 = vadd.f32 0.0, %v4713
    %v4715 = vpop.f32.mrb[0].mxu0
    %4716 = vmatprep.mubr.bf16.mxu0 0
    %4717 = vmatmul.mubr.bf16.gmra.mrb[0].mxu0 %v3557
    %v4718 = vpop.f32.mrb[0].mxu0
    %v4719 = vadd.f32 0.0, %v4718
    %v4720 = vpop.f32.mrb[0].mxu0
    %v4721 = vpop.f32.mrb[0].mxu0
    %v4722 = vadd.f32 0.0, %v4721
    %v4723 = vpop.f32.mrb[0].mxu0
    %4724 = vmatprep.mubr.bf16.mxu0 0
    %4725 = vmatmul.mubr.bf16.gmra.mrb[0].mxu0 %v3560
    %v4726 = vpop.f32.mrb[0].mxu0
    %v4727 = vadd.f32 0.0, %v4726
    %v4728 = vpop.f32.mrb[0].mxu0
    %v4729 = vpop.f32.mrb[0].mxu0
    %v4730 = vadd.f32 0.0, %v4729
    %v4731 = vpop.f32.mrb[0].mxu0
    %4732 = vmatprep.mubr.bf16.mxu0 0
    %4733 = vmatmul.mubr.bf16.gmra.mrb[0].mxu0 %v4642
    %v4734 = vpop.f32.mrb[0].mxu0
    %v4735 = vadd.f32 0.0, %v4734
    %v4736 = vpop.f32.mrb[0].mxu0
    %v4737 = vpop.f32.mrb[0].mxu0
    %v4738 = vadd.f32 0.0, %v4737
    %v4739 = vpop.f32.mrb[0].mxu0
    %4740 = vdwg.mxu0
    %v4741 = vadd.f32 %v4576, %v4679
    %v4742 = vadd.f32 %v4577, %v4682
    %v4743 = vadd.f32 %v4578, %v4687
    %v4744 = vadd.f32 %v4579, %v4690
    %v4745 = vadd.f32 %v4580, %v4695
    %v4746 = vadd.f32 %v4581, %v4698
    %v4747 = vadd.f32 %v4582, %v4703
    %v4748 = vadd.f32 %v4583, %v4706
    %v4749 = vadd.f32 %v4584, %v4711
    %v4750 = vadd.f32 %v4585, %v4714
    %v4751 = vadd.f32 %v4586, %v4719
    %v4752 = vadd.f32 %v4587, %v4722
    %v4753 = vadd.f32 %v4588, %v4727
    %v4754 = vadd.f32 %v4589, %v4730
    %v4755 = vadd.f32 %v4590, %v4735
    %v4756 = vadd.f32 %v4591, %v4738
    %v4757 = vld [vmem:[#allocation12] sm:$0x1]
    %v4759 = vlaneseq
    %v4760 = vshrl.u32 %v4759, 7
    %v4761 = vsub.s32 0, %v4760
    %v4762 = vrot.slane %v4757, %v4761
    %v4764 = vadd.f32 %v4741, %v4762
    %v4765 = vadd.f32 %v4742, %v4762
    %v4766 = vadd.f32 %v4743, %v4762
    %v4767 = vadd.f32 %v4744, %v4762
    %v4768 = vadd.f32 %v4745, %v4762
    %v4769 = vadd.f32 %v4746, %v4762
    %v4770 = vadd.f32 %v4747, %v4762
    %v4771 = vadd.f32 %v4748, %v4762
    %v4772 = vadd.f32 %v4749, %v4762
    %v4773 = vadd.f32 %v4750, %v4762
    %v4774 = vadd.f32 %v4751, %v4762
    %v4775 = vadd.f32 %v4752, %v4762
    %v4776 = vadd.f32 %v4753, %v4762
    %v4777 = vadd.f32 %v4754, %v4762
    %v4778 = vadd.f32 %v4755, %v4762
    %v4779 = vadd.f32 %v4756, %v4762
    %v4780 = vld [vmem:[#allocation13] sm:$0xf]
    %v4781 = vld [vmem:[#allocation15] sm:$0x1]
    %v4783 = vlaneseq
    %v4784 = vshrl.u32 %v4783, 7
    %v4785 = vsub.s32 0, %v4784
    %v4786 = vrot.slane %v4781, %v4785
    %v4804 = vunpack.c.l.b16 %v115
    %v4805 = vunpack.c.l.b16 %v116
    %v4806 = vunpack.c.l.b16 %v117
    %v4807 = vunpack.c.l.b16 %v118
    %v4808 = vunpack.c.l.b16 %v119
    %v4809 = vunpack.c.l.b16 %v120
    %v4810 = vunpack.c.l.b16 %v121
    %v4811 = vunpack.c.l.b16 %v122
    %v4812 = vunpack.c.l.b16 %v123
    %v4813 = vunpack.c.l.b16 %v124
    %v4814 = vunpack.c.l.b16 %v125
    %v4815 = vunpack.c.l.b16 %v126
    %v4816 = vunpack.c.l.b16 %v127
    %v4817 = vunpack.c.l.b16 %v128
    %v4818 = vunpack.c.l.b16 %v129
    %v4819 = vunpack.c.l.b16 %v130
    %v4820 = vpack.c.b16 %v4805, %v4804
    %v4821 = vpack.c.b16 %v4807, %v4806
    %v4822 = vpack.c.b16 %v4809, %v4808
    %v4823 = vpack.c.b16 %v4811, %v4810
    %v4824 = vpack.c.b16 %v4813, %v4812
    %v4825 = vpack.c.b16 %v4815, %v4814
    %v4826 = vpack.c.b16 %v4817, %v4816
    %v4827 = vpack.c.b16 %v4819, %v4818
    %v4829 = vsel %vm819, %v4820, 0
    %v4832 = vsel %vm819, %v4821, 0
    %v4835 = vsel %vm819, %v4822, 0
    %v4838 = vsel %vm819, %v4823, 0
    %v4841 = vsel %vm819, %v4824, 0
    %v4844 = vsel %vm819, %v4825, 0
    %v4847 = vsel %vm819, %v4826, 0
    %v4850 = vsel %vm819, %v4827, 0
    %v4853 = vsel %vm844, %v4780, 0
    %4855 = vmatprep.subr.bf16.mxu0 0
    %4856 = vmatpush1.bf16.msra.mxu0 %v4853
    %4857 = vmatprep.subr.bf16.mxu0 0
    %4858 = vmatpush1.bf16.msra.mxu0 0
    %4859 = vmatprep.subr.bf16.mxu0 0
    %4860 = vmatpush1.bf16.msra.mxu0 0
    %4861 = vmatprep.subr.bf16.mxu0 0
    %4862 = vmatpush1.bf16.msra.mxu0 0
    %4863 = vmatprep.subr.bf16.mxu0 0
    %4864 = vmatpush1.bf16.msra.mxu0 0
    %4865 = vmatprep.subr.bf16.mxu0 0
    %4866 = vmatpush1.bf16.msra.mxu0 0
    %4867 = vmatprep.subr.bf16.mxu0 0
    %4868 = vmatpush1.bf16.msra.mxu0 0
    %4869 = vmatprep.subr.bf16.mxu0 0
    %4870 = vmatpush1.bf16.msra.mxu0 0
    %4871 = vmatprep.subr.bf16.mxu0 0
    %4872 = vmatpush1.bf16.msra.mxu0 0
    %4873 = vmatprep.subr.bf16.mxu0 0
    %4874 = vmatpush1.bf16.msra.mxu0 0
    %4875 = vmatprep.subr.bf16.mxu0 0
    %4876 = vmatpush1.bf16.msra.mxu0 0
    %4877 = vmatprep.subr.bf16.mxu0 0
    %4878 = vmatpush1.bf16.msra.mxu0 0
    %4879 = vmatprep.subr.bf16.mxu0 0
    %4880 = vmatpush1.bf16.msra.mxu0 0
    %4881 = vmatprep.subr.bf16.mxu0 0
    %4882 = vmatpush1.bf16.msra.mxu0 0
    %4883 = vmatprep.subr.bf16.mxu0 0
    %4884 = vmatpush1.bf16.msra.mxu0 0
    %4885 = vmatprep.subr.bf16.mxu0 0
    %4886 = vmatpush1.bf16.msra.mxu0 0
    %4887 = vmatprep.mubr.bf16.mxu0 0
    %4888 = vmatmul.mubr.bf16.gmra.mrb[0].mxu0 %v4829
    %v4889 = vpop.f32.mrb[0].mxu0
    %v4890 = vadd.f32 %v4786, %v4889
    %v4891 = vpop.f32.mrb[0].mxu0
    %v4892 = vpop.f32.mrb[0].mxu0
    %v4893 = vadd.f32 %v4786, %v4892
    %v4894 = vpop.f32.mrb[0].mxu0
    %4895 = vmatprep.mubr.bf16.mxu0 0
    %4896 = vmatmul.mubr.bf16.gmra.mrb[0].mxu0 %v4832
    %v4897 = vpop.f32.mrb[0].mxu0
    %v4898 = vadd.f32 %v4786, %v4897
    %v4899 = vpop.f32.mrb[0].mxu0
    %v4900 = vpop.f32.mrb[0].mxu0
    %v4901 = vadd.f32 %v4786, %v4900
    %v4902 = vpop.f32.mrb[0].mxu0
    %4903 = vmatprep.mubr.bf16.mxu0 0
    %4904 = vmatmul.mubr.bf16.gmra.mrb[0].mxu0 %v4835
    %v4905 = vpop.f32.mrb[0].mxu0
    %v4906 = vadd.f32 %v4786, %v4905
    %v4907 = vpop.f32.mrb[0].mxu0
    %v4908 = vpop.f32.mrb[0].mxu0
    %v4909 = vadd.f32 %v4786, %v4908
    %v4910 = vpop.f32.mrb[0].mxu0
    %4911 = vmatprep.mubr.bf16.mxu0 0
    %4912 = vmatmul.mubr.bf16.gmra.mrb[0].mxu0 %v4838
    %v4913 = vpop.f32.mrb[0].mxu0
    %v4914 = vadd.f32 %v4786, %v4913
    %v4915 = vpop.f32.mrb[0].mxu0
    %v4916 = vpop.f32.mrb[0].mxu0
    %v4917 = vadd.f32 %v4786, %v4916
    %v4918 = vpop.f32.mrb[0].mxu0
    %4919 = vmatprep.mubr.bf16.mxu0 0
    %4920 = vmatmul.mubr.bf16.gmra.mrb[0].mxu0 %v4841
    %v4921 = vpop.f32.mrb[0].mxu0
    %v4922 = vadd.f32 %v4786, %v4921
    %v4923 = vpop.f32.mrb[0].mxu0
    %v4924 = vpop.f32.mrb[0].mxu0
    %v4925 = vadd.f32 %v4786, %v4924
    %v4926 = vpop.f32.mrb[0].mxu0
    %4927 = vmatprep.mubr.bf16.mxu0 0
    %4928 = vmatmul.mubr.bf16.gmra.mrb[0].mxu0 %v4844
    %v4929 = vpop.f32.mrb[0].mxu0
    %v4930 = vadd.f32 %v4786, %v4929
    %v4931 = vpop.f32.mrb[0].mxu0
    %v4932 = vpop.f32.mrb[0].mxu0
    %v4933 = vadd.f32 %v4786, %v4932
    %v4934 = vpop.f32.mrb[0].mxu0
    %4935 = vmatprep.mubr.bf16.mxu0 0
    %4936 = vmatmul.mubr.bf16.gmra.mrb[0].mxu0 %v4847
    %v4937 = vpop.f32.mrb[0].mxu0
    %v4938 = vadd.f32 %v4786, %v4937
    %v4939 = vpop.f32.mrb[0].mxu0
    %v4940 = vpop.f32.mrb[0].mxu0
    %v4941 = vadd.f32 %v4786, %v4940
    %v4942 = vpop.f32.mrb[0].mxu0
    %4943 = vmatprep.mubr.bf16.mxu0 0
    %4944 = vmatmul.mubr.bf16.gmra.mrb[0].mxu0 %v4850
    %v4945 = vpop.f32.mrb[0].mxu0
    %v4946 = vadd.f32 %v4786, %v4945
    %v4947 = vpop.f32.mrb[0].mxu0
    %v4948 = vpop.f32.mrb[0].mxu0
    %v4949 = vadd.f32 %v4786, %v4948
    %v4950 = vpop.f32.mrb[0].mxu0
    %4951 = vdwg.mxu0
    %v4952 = vadd.f32 %v4764, %v4890
    %v4953 = vadd.f32 %v4765, %v4893
    %v4954 = vadd.f32 %v4766, %v4898
    %v4955 = vadd.f32 %v4767, %v4901
    %v4956 = vadd.f32 %v4768, %v4906
    %v4957 = vadd.f32 %v4769, %v4909
    %v4958 = vadd.f32 %v4770, %v4914
    %v4959 = vadd.f32 %v4771, %v4917
    %v4960 = vadd.f32 %v4772, %v4922
    %v4961 = vadd.f32 %v4773, %v4925
    %v4962 = vadd.f32 %v4774, %v4930
    %v4963 = vadd.f32 %v4775, %v4933
    %v4964 = vadd.f32 %v4776, %v4938
    %v4965 = vadd.f32 %v4777, %v4941
    %v4966 = vadd.f32 %v4778, %v4946
    %v4967 = vadd.f32 %v4779, %v4949
    %v4968 = vmax.f32 %v4952, 0.0
    %v4969 = vmax.f32 %v4953, 0.0
    %v4970 = vmax.f32 %v4954, 0.0
    %v4971 = vmax.f32 %v4955, 0.0
    %v4972 = vmax.f32 %v4956, 0.0
    %v4973 = vmax.f32 %v4957, 0.0
    %v4974 = vmax.f32 %v4958, 0.0
    %v4975 = vmax.f32 %v4959, 0.0
    %v4976 = vmax.f32 %v4960, 0.0
    %v4977 = vmax.f32 %v4961, 0.0
    %v4978 = vmax.f32 %v4962, 0.0
    %v4979 = vmax.f32 %v4963, 0.0
    %v4980 = vmax.f32 %v4964, 0.0
    %v4981 = vmax.f32 %v4965, 0.0
    %v4982 = vmax.f32 %v4966, 0.0
    %v4983 = vmax.f32 %v4967, 0.0
    %v4984 = vpack.c.bf16 %v4968, %v4968
    %v4985 = vpack.c.bf16 %v4969, %v4969
    %v4986 = vpack.c.bf16 %v4970, %v4970
    %v4987 = vpack.c.bf16 %v4971, %v4971
    %v4988 = vpack.c.bf16 %v4972, %v4972
    %v4989 = vpack.c.bf16 %v4973, %v4973
    %v4990 = vpack.c.bf16 %v4974, %v4974
    %v4991 = vpack.c.bf16 %v4975, %v4975
    %v4992 = vpack.c.bf16 %v4976, %v4976
    %v4993 = vpack.c.bf16 %v4977, %v4977
    %v4994 = vpack.c.bf16 %v4978, %v4978
    %v4995 = vpack.c.bf16 %v4979, %v4979
    %v4996 = vpack.c.bf16 %v4980, %v4980
    %v4997 = vpack.c.bf16 %v4981, %v4981
    %v4998 = vpack.c.bf16 %v4982, %v4982
    %v4999 = vpack.c.bf16 %v4983, %v4983
    %5000 = vst.msk [vmem:[#allocation16] sm:$0xf] %vm2326, %v4984
    %5001 = vst.msk [vmem:[#allocation16 + $0x4] sm:$0xf] %vm2326, %v4985
    %5002 = vst.msk [vmem:[#allocation16 + $0x8] sm:$0xf] %vm2326, %v4986
    %5003 = vst.msk [vmem:[#allocation16 + $0xc] sm:$0xf] %vm2326, %v4987
    %5004 = vst.msk [vmem:[#allocation16 + $0x10] sm:$0xf] %vm2326, %v4988
    %5005 = vst.msk [vmem:[#allocation16 + $0x14] sm:$0xf] %vm2326, %v4989
    %5006 = vst.msk [vmem:[#allocation16 + $0x18] sm:$0xf] %vm2326, %v4990
    %5007 = vst.msk [vmem:[#allocation16 + $0x1c] sm:$0xf] %vm2326, %v4991
    %5008 = vst.msk [vmem:[#allocation16 + $0x20] sm:$0xf] %vm2326, %v4992
    %5009 = vst.msk [vmem:[#allocation16 + $0x24] sm:$0xf] %vm2326, %v4993
    %5010 = vst.msk [vmem:[#allocation16 + $0x28] sm:$0xf] %vm2326, %v4994
    %5011 = vst.msk [vmem:[#allocation16 + $0x2c] sm:$0xf] %vm2326, %v4995
    %5012 = vst.msk [vmem:[#allocation16 + $0x30] sm:$0xf] %vm2326, %v4996
    %5013 = vst.msk [vmem:[#allocation16 + $0x34] sm:$0xf] %vm2326, %v4997
    %5014 = vst.msk [vmem:[#allocation16 + $0x38] sm:$0xf] %vm2326, %v4998
    %5015 = vst.msk [vmem:[#allocation16 + $0x3c] sm:$0xf] %vm2326, %v4999
    // Predicated region
    $region58: #{tpu_custom_call.1} parent=1 // pred_check
      _
    $region59: #{tpu_custom_call.1} parent=1 // pred_check_branch
      %5017 = sbr.rel (0) target = $region61
    $region60: #{tpu_custom_call.1} parent=1 // pred_region
      %s5019 = ssub.s32 1024, 1024
      %5020 = vsyncadd [#allocation6], %s5019
      %s5021 = sshll.u32 [#allocation16], 4
      %s5022 = int_to_ptr.vmem [resolvable:$true] %s5021
      %5027 = dma.vmem_to_hbm [thread:$0]  %s5022, 1024, %s7, [#allocation6], 64, 64, 4
    $region61: #{tpu_custom_call.1} parent=1 // pred_fallthru
      _
    // Predicated region
    $region62: #{tpu_custom_call.1} parent=1 // pred_check
      _
    $region63: #{tpu_custom_call.1} parent=1 // pred_check_branch
      %5029 = sbr.rel (0) target = $region65
    $region64: #{tpu_custom_call.1} parent=1 // pred_region
      %5030 = dma.done [#allocation6], 1024
    $region65: #{tpu_custom_call.1} parent=1 // pred_fallthru
      _
    %5031 = vsyncpa [#allocation5], 1
    %5032 = vsyncpa [#allocation8], 1
    %5033 = vsyncpa [#allocation11], 1
    %5034 = vsyncpa [#allocation14], 1
    %5035 = vsyncpa [#allocation6], 1

</llo_original>
